<compile_context>
chip_gen: v7x
topology: tpu7x:2x2x1
jax: 0.10.0
libtpu: 0.0.40
codegen_flags: <defaults>
</compile_context>

<pallas_src>
import functools

import jax
import jax.numpy as jnp
from jax import lax
from jax.experimental import pallas as pl
from jax.experimental.pallas import tpu as pltpu


def _round_up(n, m):
    return ((n + m - 1) // m) * m


# ----------------------------------------------------------------------------
# Pallas kernel 1: fused 1-D conv (kw taps accumulated in-kernel) + bias + ReLU.
# x is channels-last, channel dim zero-padded to a 128 multiple so stores are
# lane-dense; bf16 MXU operands, f32 accumulation.
# ----------------------------------------------------------------------------
def _conv1d_relu_kernel(x_ref, w_ref, b_ref, o_ref, *, kw, wo):
    # x_ref: (1, W, Cp) bf16 ; w_ref: (kw, Cp, Coutp) bf16
    # b_ref: (1, Coutp) f32  ; o_ref: (1, Wo, Coutp) bf16
    coutp = o_ref.shape[2]
    acc = jnp.zeros((wo, coutp), jnp.float32)
    for dw in range(kw):                                   # static tap loop (kw == 3)
        acc = acc + jnp.dot(x_ref[0, dw:dw + wo, :], w_ref[dw],
                            preferred_element_type=jnp.float32)
    acc = jnp.maximum(acc + b_ref[...], 0.0)
    o_ref[0] = acc.astype(o_ref.dtype)


def conv1d_relu(x, w_taps, bias, kw):
    """x: (B, W, Cp) bf16; w_taps: (kw, Cp, Coutp) bf16; bias: (1, Coutp) f32."""
    B, W, Cp = x.shape
    Coutp = w_taps.shape[2]
    Wo = W - kw + 1
    return pl.pallas_call(
        functools.partial(_conv1d_relu_kernel, kw=kw, wo=Wo),
        out_shape=jax.ShapeDtypeStruct((B, Wo, Coutp), jnp.bfloat16),
        grid=(B,),
        in_specs=[
            pl.BlockSpec((1, W, Cp), lambda b: (b, 0, 0)),
            pl.BlockSpec((kw, Cp, Coutp), lambda b: (0, 0, 0)),
            pl.BlockSpec((1, Coutp), lambda b: (0, 0)),
        ],
        out_specs=pl.BlockSpec((1, Wo, Coutp), lambda b: (b, 0, 0)),
        compiler_params=pltpu.CompilerParams(dimension_semantics=("parallel",)),
    )(x, w_taps, bias)


# ----------------------------------------------------------------------------
# Pallas kernel 2: full LSTM layer in ONE grid step per batch tile.
#   - in-kernel input projection for all timesteps into a time-major VMEM scratch
#   - lax.fori_loop recurrence (no per-timestep grid overhead)
#   - H padded to 128 -> lane-aligned i/f/g/o gate slices, clean MXU shapes
#   - bf16 matmul operands, f32 state & nonlinearities
#   - last layer returns only the final hidden state
# PyTorch gate order: i, f, g, o.  Padded gate lanes have zero weights/bias, so
# their h/c stay exactly 0 through the recurrence.
# ----------------------------------------------------------------------------
def _lstm_kernel(x_ref, wih_ref, whh_ref, b_ref, out_ref,
                 xg_scr, hseq_scr, h_scr, c_scr, *, seq_out):
    bt, T, _ = x_ref.shape
    Hp = h_scr.shape[1]

    # Input projection for every timestep (time on sublanes -> good MXU shape).
    for b in range(bt):                                    # static, bt <= 8
        xg_b = jnp.dot(x_ref[b], wih_ref[...],
                       preferred_element_type=jnp.float32) + b_ref[...]   # (T, 4Hp)
        xg_scr[:, b, :] = xg_b                             # time-major scratch

    h_scr[...] = jnp.zeros_like(h_scr)
    c_scr[...] = jnp.zeros_like(c_scr)

    def step(t, carry):
        gates = xg_scr[t] + jnp.dot(h_scr[...].astype(whh_ref.dtype), whh_ref[...],
                                    preferred_element_type=jnp.float32)   # (bt, 4Hp)
        i_g = jax.nn.sigmoid(gates[:, 0 * Hp:1 * Hp])      # 128-lane aligned slices
        f_g = jax.nn.sigmoid(gates[:, 1 * Hp:2 * Hp])
        g_g = jnp.tanh(gates[:, 2 * Hp:3 * Hp])
        o_g = jax.nn.sigmoid(gates[:, 3 * Hp:4 * Hp])
        c_new = f_g * c_scr[...] + i_g * g_g
        h_new = o_g * jnp.tanh(c_new)
        c_scr[...] = c_new
        h_scr[...] = h_new
        if seq_out:
            hseq_scr[t] = h_new
        return carry

    lax.fori_loop(0, T, step, 0)

    if seq_out:
        for b in range(bt):                                # batch-major, lane-dense out
            out_ref[b] = hseq_scr[:, b, :].astype(out_ref.dtype)
    else:
        out_ref[...] = h_scr[...].astype(out_ref.dtype)    # final hidden state only


def lstm_layer(x, wih_t, whh_t, bias, H, Hp, return_sequence):
    """x: (B, T, Dp) bf16 (Dp lane-padded, padded channels == 0).
    wih_t: (Dp, 4Hp) bf16; whh_t: (Hp, 4Hp) bf16; bias: (1, 4Hp) f32."""
    B, T, Dp = x.shape
    assert wih_t.shape == (Dp, 4 * Hp)
    bt = min(B, 8)                       # batch tile; grid shards across TCs on v7x
    Bp = _round_up(B, bt)
    if Bp != B:
        x = jnp.pad(x, ((0, Bp - B), (0, 0), (0, 0)))
    grid = (Bp // bt,)

    if return_sequence:
        out_shape = jax.ShapeDtypeStruct((Bp, T, Hp), jnp.bfloat16)
        out_spec = pl.BlockSpec((bt, T, Hp), lambda i: (i, 0, 0))
    else:
        out_shape = jax.ShapeDtypeStruct((Bp, Hp), jnp.float32)
        out_spec = pl.BlockSpec((bt, Hp), lambda i: (i, 0))

    out = pl.pallas_call(
        functools.partial(_lstm_kernel, seq_out=return_sequence),
        out_shape=out_shape,
        grid=grid,
        in_specs=[
            pl.BlockSpec((bt, T, Dp), lambda i: (i, 0, 0)),
            pl.BlockSpec((Dp, 4 * Hp), lambda i: (0, 0)),
            pl.BlockSpec((Hp, 4 * Hp), lambda i: (0, 0)),
            pl.BlockSpec((1, 4 * Hp), lambda i: (0, 0)),
        ],
        out_specs=out_spec,
        scratch_shapes=[
            pltpu.VMEM((T, bt, 4 * Hp), jnp.float32),      # xg, time-major
            pltpu.VMEM((T, bt, Hp), jnp.float32),          # h sequence (seq_out only)
            pltpu.VMEM((bt, Hp), jnp.float32),             # h carry
            pltpu.VMEM((bt, Hp), jnp.float32),             # c carry
        ],
        compiler_params=pltpu.CompilerParams(dimension_semantics=("parallel",)),
    )(x.astype(jnp.bfloat16), wih_t, whh_t, bias)

    if return_sequence:
        return out[:B]                    # (B, T, Hp) bf16 -> next layer input
    return out[:B, :H]                    # (B, H) f32 final hidden state


# ----------------------------------------------------------------------------
# Parameter packing (done once, outside the forward pass)
# ----------------------------------------------------------------------------
def pack_conv_layer(w, b):
    """w: (Cout, Cin, kh, kw) valid Conv2d whose kh equals the current input
    height (height collapses to 1); b: (Cout,).  Returns per-tap matrices with
    both channel dims zero-padded to 128 multiples."""
    Cout, Cin, kh, kw = w.shape
    C = Cin * kh
    Cp = _round_up(C, 128)
    Coutp = _round_up(Cout, 128)
    taps = [w[:, :, :, dw].reshape(Cout, C).T for dw in range(kw)]   # (C, Cout)
    w_taps = jnp.stack(taps, axis=0)                                  # (kw, C, Cout)
    w_taps = jnp.pad(w_taps, ((0, 0), (0, Cp - C), (0, Coutp - Cout)))
    bias = jnp.pad(b, (0, Coutp - Cout)).reshape(1, Coutp).astype(jnp.float32)
    return (w_taps.astype(jnp.bfloat16), bias, kw, Cp, Coutp)


def pack_lstm_layer(w_ih, w_hh, b_ih, b_hh, d_pad):
    """PyTorch LSTM params (gate order i,f,g,o), each gate padded H -> Hp=128k,
    input dim padded to d_pad.  Padded rows/cols are zero, so padded h/c lanes
    stay exactly 0 and results match the unpadded recurrence."""
    fourH, D = w_ih.shape
    H = fourH // 4
    Hp = _round_up(H, 128)
    wih_p = jnp.zeros((4 * Hp, d_pad), jnp.float32)
    whh_p = jnp.zeros((4 * Hp, Hp), jnp.float32)
    b_p = jnp.zeros((4 * Hp,), jnp.float32)
    for g in range(4):
        wih_p = wih_p.at[g * Hp:g * Hp + H, :D].set(w_ih[g * H:(g + 1) * H, :])
        whh_p = whh_p.at[g * Hp:g * Hp + H, :H].set(w_hh[g * H:(g + 1) * H, :])
        b_p = b_p.at[g * Hp:g * Hp + H].set(b_ih[g * H:(g + 1) * H] +
                                            b_hh[g * H:(g + 1) * H])
    return (wih_p.T.astype(jnp.bfloat16),        # (Dp, 4Hp)
            whh_p.T.astype(jnp.bfloat16),        # (Hp, 4Hp)
            b_p.reshape(1, 4 * Hp),              # f32
            H, Hp)


CNN_ARCH = {2: ((256, 80), (0.5, 0.5))}          # csrr CNNNet arch_settings (depth 2)
RNN_ARCH = {1: ((50,), 0.5), 2: ((100, 50), 0.5)}


def init_crnet_params(key, in_channels, cnn_depth, rnn_depth, input_size, in_height):
    filters, _ = CNN_ARCH[cnn_depth]
    hiddens, _ = RNN_ARCH[rnn_depth]
    params = {"cnn": [], "rnn": []}

    cin, cur_h = in_channels, in_height
    for cout in filters:
        kh, kw = cur_h, 3                         # (in_height, 3) then (1, 3)
        key, k1 = jax.random.split(key)
        w = 0.1 * jax.random.normal(k1, (cout, cin, kh, kw), jnp.float32)
        b = jnp.zeros((cout,), jnp.float32)
        params["cnn"].append(pack_conv_layer(w, b))
        cin, cur_h = cout, 1

    d = input_size
    for h in hiddens:
        key, k1, k2 = jax.random.split(key, 3)
        w_ih = 0.1 * jax.random.normal(k1, (4 * h, d), jnp.float32)
        w_hh = 0.1 * jax.random.normal(k2, (4 * h, h), jnp.float32)
        b_ih = jnp.zeros((4 * h,), jnp.float32)   # matches init_weights (zeros)
        b_hh = jnp.zeros((4 * h,), jnp.float32)
        params["rnn"].append(pack_lstm_layer(w_ih, w_hh, b_ih, b_hh,
                                             _round_up(d, 128)))
        d = h
    return params


# ----------------------------------------------------------------------------
# CRNet forward: CNNNet -> squeeze/transpose (implicit in the layout) -> RNNNet
# ----------------------------------------------------------------------------
def crnet_forward(params, iqs):
    """iqs: (B, in_channels, in_height, L) NCHW. Returns (B, last_hidden)."""
    B, cin, hh, L = iqs.shape
    # Fold (Cin, H) into channels so each conv is a 1-D conv over L; the conv
    # output (B, T, C) is already the squeezed+transposed tensor the RNN wants.
    x = jnp.transpose(iqs, (0, 3, 1, 2)).reshape(B, L, cin * hh)
    for (w_taps, bias, kw, cp, _coutp) in params["cnn"]:
        c = x.shape[-1]
        if c < cp:                                 # zero-pad channels to 128 lanes
            x = jnp.pad(x, ((0, 0), (0, 0), (0, cp - c)))
        x = conv1d_relu(x.astype(jnp.bfloat16), w_taps, bias, kw)
        # nn.Dropout: identity at inference.
    # RNNNet: the tail (transpose/unsqueeze/[:, :, 0, -1]) just selects the last
    # timestep of the last layer, so that layer emits only the final hidden.
    n_rnn = len(params["rnn"])
    for i, (wih_t, whh_t, bias, H, Hp) in enumerate(params["rnn"]):
        x = lstm_layer(x, wih_t, whh_t, bias, H, Hp,
                       return_sequence=(i < n_rnn - 1))
    return x


if __name__ == "__main__":
    B, in_channels, in_height, L = 2, 1, 2, 32
    cnn_depth, rnn_depth = 2, 1
    input_size = CNN_ARCH[cnn_depth][0][-1]        # 80, feeds the LSTM

    key = jax.random.PRNGKey(0)
    key, kx = jax.random.split(key)
    iqs = jax.random.normal(kx, (B, in_channels, in_height, L), jnp.float32)

    params = init_crnet_params(key, in_channels, cnn_depth, rnn_depth,
                               input_size, in_height)

    fwd = jax.jit(functools.partial(crnet_forward, params))
    out = jax.block_until_ready(fwd(iqs))
    assert out.shape == (B, RNN_ARCH[rnn_depth][0][-1])    # (2, 50)
    assert bool(jnp.all(jnp.isfinite(out)))
    print("KERNEL_OK")
</pallas_src>

<mosaic_0001>
module attributes {stable_mosaic.version = 11 : i64} {
  func.func @_conv1d_relu_kernel(%arg0: i32, %arg1: memref<1x32x128xbf16, #tpu.memory_space<vmem>>, %arg2: memref<3x128x256xbf16, #tpu.memory_space<vmem>>, %arg3: memref<1x256xf32, #tpu.memory_space<vmem>>, %arg4: memref<1x30x256xbf16, #tpu.memory_space<vmem>>) attributes {dimension_semantics = [#tpu.dimension_semantics<parallel>], iteration_bounds = array<i64: 2>, scalar_prefetch = 0 : i64, scratch_operands = 0 : i64, tpu.core_type = #tpu.core_type<tc>, window_params = [{transform_indices = @transform_0, window_bounds = array<i64: 1, 32, 128>}, {pipeline_mode = #tpu.pipeline_mode<synchronous>, transform_indices = @transform_1, window_bounds = array<i64: 3, 128, 256>}, {pipeline_mode = #tpu.pipeline_mode<synchronous>, transform_indices = @transform_2, window_bounds = array<i64: 1, 256>}, {transform_indices = @transform_3, window_bounds = array<i64: 1, 30, 256>}]} {
    %cst = arith.constant 0.000000e+00 : f32
    %0 = vector.broadcast %cst : f32 to vector<30x256xf32>
    %c0 = arith.constant 0 : index
    %c0_0 = arith.constant 0 : index
    %c0_1 = arith.constant 0 : index
    %1 = vector.load %arg1[%c0, %c0_0, %c0_1] : memref<1x32x128xbf16, #tpu.memory_space<vmem>>, vector<1x30x128xbf16>
    %2 = vector.shape_cast %1 : vector<1x30x128xbf16> to vector<30x128xbf16>
    %c0_2 = arith.constant 0 : index
    %c0_3 = arith.constant 0 : index
    %c0_4 = arith.constant 0 : index
    %3 = vector.load %arg2[%c0_2, %c0_3, %c0_4] : memref<3x128x256xbf16, #tpu.memory_space<vmem>>, vector<1x128x256xbf16>
    %4 = vector.shape_cast %3 : vector<1x128x256xbf16> to vector<128x256xbf16>
    %cst_5 = arith.constant dense<0.000000e+00> : vector<30x256xf32>
    %5 = tpu.matmul %2, %4, %cst_5 {dimension_numbers = #tpu.dot_dimension_numbers<[1], [0], [0], [1], [0, 0, 1, 1], [], []>} : vector<30x128xbf16>, vector<128x256xbf16>, vector<30x256xf32> -> vector<30x256xf32>
    %6 = arith.addf %0, %5 : vector<30x256xf32>
    %c0_6 = arith.constant 0 : index
    %c1 = arith.constant 1 : index
    %c0_7 = arith.constant 0 : index
    %7 = vector.load %arg1[%c0_6, %c1, %c0_7] : memref<1x32x128xbf16, #tpu.memory_space<vmem>>, vector<1x30x128xbf16>
    %8 = vector.shape_cast %7 : vector<1x30x128xbf16> to vector<30x128xbf16>
    %c1_8 = arith.constant 1 : index
    %c0_9 = arith.constant 0 : index
    %c0_10 = arith.constant 0 : index
    %9 = vector.load %arg2[%c1_8, %c0_9, %c0_10] : memref<3x128x256xbf16, #tpu.memory_space<vmem>>, vector<1x128x256xbf16>
    %10 = vector.shape_cast %9 : vector<1x128x256xbf16> to vector<128x256xbf16>
    %cst_11 = arith.constant dense<0.000000e+00> : vector<30x256xf32>
    %11 = tpu.matmul %8, %10, %cst_11 {dimension_numbers = #tpu.dot_dimension_numbers<[1], [0], [0], [1], [0, 0, 1, 1], [], []>} : vector<30x128xbf16>, vector<128x256xbf16>, vector<30x256xf32> -> vector<30x256xf32>
    %12 = arith.addf %6, %11 : vector<30x256xf32>
    %c0_12 = arith.constant 0 : index
    %c2 = arith.constant 2 : index
    %c0_13 = arith.constant 0 : index
    %13 = vector.load %arg1[%c0_12, %c2, %c0_13] : memref<1x32x128xbf16, #tpu.memory_space<vmem>>, vector<1x30x128xbf16>
    %14 = vector.shape_cast %13 : vector<1x30x128xbf16> to vector<30x128xbf16>
    %c2_14 = arith.constant 2 : index
    %c0_15 = arith.constant 0 : index
    %c0_16 = arith.constant 0 : index
    %15 = vector.load %arg2[%c2_14, %c0_15, %c0_16] : memref<3x128x256xbf16, #tpu.memory_space<vmem>>, vector<1x128x256xbf16>
    %16 = vector.shape_cast %15 : vector<1x128x256xbf16> to vector<128x256xbf16>
    %cst_17 = arith.constant dense<0.000000e+00> : vector<30x256xf32>
    %17 = tpu.matmul %14, %16, %cst_17 {dimension_numbers = #tpu.dot_dimension_numbers<[1], [0], [0], [1], [0, 0, 1, 1], [], []>} : vector<30x128xbf16>, vector<128x256xbf16>, vector<30x256xf32> -> vector<30x256xf32>
    %18 = arith.addf %12, %17 : vector<30x256xf32>
    %c0_18 = arith.constant 0 : index
    %c0_19 = arith.constant 0 : index
    %19 = vector.load %arg3[%c0_18, %c0_19] : memref<1x256xf32, #tpu.memory_space<vmem>>, vector<1x256xf32>
    %20 = vector.broadcast %19 : vector<1x256xf32> to vector<30x256xf32>
    %21 = arith.addf %18, %20 : vector<30x256xf32>
    %cst_20 = arith.constant 0.000000e+00 : f32
    %22 = vector.broadcast %cst_20 : f32 to vector<30x256xf32>
    %23 = arith.maximumf %21, %22 : vector<30x256xf32>
    %24 = arith.truncf %23 : vector<30x256xf32> to vector<30x256xbf16>
    %c0_21 = arith.constant 0 : index
    %c0_22 = arith.constant 0 : index
    %c0_23 = arith.constant 0 : index
    %25 = vector.load %arg4[%c0_21, %c0_22, %c0_23] : memref<1x30x256xbf16, #tpu.memory_space<vmem>>, vector<1x30x256xbf16>
    %26 = vector.shape_cast %25 : vector<1x30x256xbf16> to vector<30x256xbf16>
    %27 = vector.shape_cast %24 : vector<30x256xbf16> to vector<1x30x256xbf16>
    tpu.vector_store %arg4[%c0_21, %c0_22, %c0_23], %27 {strides = array<i32>} : memref<1x30x256xbf16, #tpu.memory_space<vmem>>, vector<1x30x256xbf16>,
    return
  }
  func.func @transform_0(%arg0: i32) -> (i32, i32, i32) {
    %c0_i32 = arith.constant 0 : i32
    %c0_i32_0 = arith.constant 0 : i32
    %c0_i32_1 = arith.constant 0 : i32
    return %arg0, %c0_i32, %c0_i32_0 : i32, i32, i32
  }
  func.func @transform_1(%arg0: i32) -> (i32, i32, i32) {
    %c0_i32 = arith.constant 0 : i32
    %c0_i32_0 = arith.constant 0 : i32
    %c0_i32_1 = arith.constant 0 : i32
    %c0_i32_2 = arith.constant 0 : i32
    return %c0_i32, %c0_i32_0, %c0_i32_1 : i32, i32, i32
  }
  func.func @transform_2(%arg0: i32) -> (i32, i32) {
    %c0_i32 = arith.constant 0 : i32
    %c0_i32_0 = arith.constant 0 : i32
    %c0_i32_1 = arith.constant 0 : i32
    return %c0_i32, %c0_i32_0 : i32, i32
  }
  func.func @transform_3(%arg0: i32) -> (i32, i32, i32) {
    %c0_i32 = arith.constant 0 : i32
    %c0_i32_0 = arith.constant 0 : i32
    %c0_i32_1 = arith.constant 0 : i32
    return %arg0, %c0_i32, %c0_i32_0 : i32, i32, i32
  }
}

module attributes {stable_mosaic.version = 11 : i64} {
  func.func @_conv1d_relu_kernel(%arg0: i32, %arg1: memref<1x30x256xbf16, #tpu.memory_space<vmem>>, %arg2: memref<3x256x128xbf16, #tpu.memory_space<vmem>>, %arg3: memref<1x128xf32, #tpu.memory_space<vmem>>, %arg4: memref<1x28x128xbf16, #tpu.memory_space<vmem>>) attributes {dimension_semantics = [#tpu.dimension_semantics<parallel>], iteration_bounds = array<i64: 2>, scalar_prefetch = 0 : i64, scratch_operands = 0 : i64, tpu.core_type = #tpu.core_type<tc>, window_params = [{transform_indices = @transform_0, window_bounds = array<i64: 1, 30, 256>}, {pipeline_mode = #tpu.pipeline_mode<synchronous>, transform_indices = @transform_1, window_bounds = array<i64: 3, 256, 128>}, {pipeline_mode = #tpu.pipeline_mode<synchronous>, transform_indices = @transform_2, window_bounds = array<i64: 1, 128>}, {transform_indices = @transform_3, window_bounds = array<i64: 1, 28, 128>}]} {
    %cst = arith.constant 0.000000e+00 : f32
    %0 = vector.broadcast %cst : f32 to vector<28x128xf32>
    %c0 = arith.constant 0 : index
    %c0_0 = arith.constant 0 : index
    %c0_1 = arith.constant 0 : index
    %1 = vector.load %arg1[%c0, %c0_0, %c0_1] : memref<1x30x256xbf16, #tpu.memory_space<vmem>>, vector<1x28x256xbf16>
    %2 = vector.shape_cast %1 : vector<1x28x256xbf16> to vector<28x256xbf16>
    %c0_2 = arith.constant 0 : index
    %c0_3 = arith.constant 0 : index
    %c0_4 = arith.constant 0 : index
    %3 = vector.load %arg2[%c0_2, %c0_3, %c0_4] : memref<3x256x128xbf16, #tpu.memory_space<vmem>>, vector<1x256x128xbf16>
    %4 = vector.shape_cast %3 : vector<1x256x128xbf16> to vector<256x128xbf16>
    %cst_5 = arith.constant dense<0.000000e+00> : vector<28x128xf32>
    %5 = tpu.matmul %2, %4, %cst_5 {dimension_numbers = #tpu.dot_dimension_numbers<[1], [0], [0], [1], [0, 0, 1, 1], [], []>} : vector<28x256xbf16>, vector<256x128xbf16>, vector<28x128xf32> -> vector<28x128xf32>
    %6 = arith.addf %0, %5 : vector<28x128xf32>
    %c0_6 = arith.constant 0 : index
    %c1 = arith.constant 1 : index
    %c0_7 = arith.constant 0 : index
    %7 = vector.load %arg1[%c0_6, %c1, %c0_7] : memref<1x30x256xbf16, #tpu.memory_space<vmem>>, vector<1x28x256xbf16>
    %8 = vector.shape_cast %7 : vector<1x28x256xbf16> to vector<28x256xbf16>
    %c1_8 = arith.constant 1 : index
    %c0_9 = arith.constant 0 : index
    %c0_10 = arith.constant 0 : index
    %9 = vector.load %arg2[%c1_8, %c0_9, %c0_10] : memref<3x256x128xbf16, #tpu.memory_space<vmem>>, vector<1x256x128xbf16>
    %10 = vector.shape_cast %9 : vector<1x256x128xbf16> to vector<256x128xbf16>
    %cst_11 = arith.constant dense<0.000000e+00> : vector<28x128xf32>
    %11 = tpu.matmul %8, %10, %cst_11 {dimension_numbers = #tpu.dot_dimension_numbers<[1], [0], [0], [1], [0, 0, 1, 1], [], []>} : vector<28x256xbf16>, vector<256x128xbf16>, vector<28x128xf32> -> vector<28x128xf32>
    %12 = arith.addf %6, %11 : vector<28x128xf32>
    %c0_12 = arith.constant 0 : index
    %c2 = arith.constant 2 : index
    %c0_13 = arith.constant 0 : index
    %13 = vector.load %arg1[%c0_12, %c2, %c0_13] : memref<1x30x256xbf16, #tpu.memory_space<vmem>>, vector<1x28x256xbf16>
    %14 = vector.shape_cast %13 : vector<1x28x256xbf16> to vector<28x256xbf16>
    %c2_14 = arith.constant 2 : index
    %c0_15 = arith.constant 0 : index
    %c0_16 = arith.constant 0 : index
    %15 = vector.load %arg2[%c2_14, %c0_15, %c0_16] : memref<3x256x128xbf16, #tpu.memory_space<vmem>>, vector<1x256x128xbf16>
    %16 = vector.shape_cast %15 : vector<1x256x128xbf16> to vector<256x128xbf16>
    %cst_17 = arith.constant dense<0.000000e+00> : vector<28x128xf32>
    %17 = tpu.matmul %14, %16, %cst_17 {dimension_numbers = #tpu.dot_dimension_numbers<[1], [0], [0], [1], [0, 0, 1, 1], [], []>} : vector<28x256xbf16>, vector<256x128xbf16>, vector<28x128xf32> -> vector<28x128xf32>
    %18 = arith.addf %12, %17 : vector<28x128xf32>
    %c0_18 = arith.constant 0 : index
    %c0_19 = arith.constant 0 : index
    %19 = vector.load %arg3[%c0_18, %c0_19] : memref<1x128xf32, #tpu.memory_space<vmem>>, vector<1x128xf32>
    %20 = vector.broadcast %19 : vector<1x128xf32> to vector<28x128xf32>
    %21 = arith.addf %18, %20 : vector<28x128xf32>
    %cst_20 = arith.constant 0.000000e+00 : f32
    %22 = vector.broadcast %cst_20 : f32 to vector<28x128xf32>
    %23 = arith.maximumf %21, %22 : vector<28x128xf32>
    %24 = arith.truncf %23 : vector<28x128xf32> to vector<28x128xbf16>
    %c0_21 = arith.constant 0 : index
    %c0_22 = arith.constant 0 : index
    %c0_23 = arith.constant 0 : index
    %25 = vector.load %arg4[%c0_21, %c0_22, %c0_23] : memref<1x28x128xbf16, #tpu.memory_space<vmem>>, vector<1x28x128xbf16>
    %26 = vector.shape_cast %25 : vector<1x28x128xbf16> to vector<28x128xbf16>
    %27 = vector.shape_cast %24 : vector<28x128xbf16> to vector<1x28x128xbf16>
    tpu.vector_store %arg4[%c0_21, %c0_22, %c0_23], %27 {strides = array<i32>} : memref<1x28x128xbf16, #tpu.memory_space<vmem>>, vector<1x28x128xbf16>,
    return
  }
  func.func @transform_0(%arg0: i32) -> (i32, i32, i32) {
    %c0_i32 = arith.constant 0 : i32
    %c0_i32_0 = arith.constant 0 : i32
    %c0_i32_1 = arith.constant 0 : i32
    return %arg0, %c0_i32, %c0_i32_0 : i32, i32, i32
  }
  func.func @transform_1(%arg0: i32) -> (i32, i32, i32) {
    %c0_i32 = arith.constant 0 : i32
    %c0_i32_0 = arith.constant 0 : i32
    %c0_i32_1 = arith.constant 0 : i32
    %c0_i32_2 = arith.constant 0 : i32
    return %c0_i32, %c0_i32_0, %c0_i32_1 : i32, i32, i32
  }
  func.func @transform_2(%arg0: i32) -> (i32, i32) {
    %c0_i32 = arith.constant 0 : i32
    %c0_i32_0 = arith.constant 0 : i32
    %c0_i32_1 = arith.constant 0 : i32
    return %c0_i32, %c0_i32_0 : i32, i32
  }
  func.func @transform_3(%arg0: i32) -> (i32, i32, i32) {
    %c0_i32 = arith.constant 0 : i32
    %c0_i32_0 = arith.constant 0 : i32
    %c0_i32_1 = arith.constant 0 : i32
    return %arg0, %c0_i32, %c0_i32_0 : i32, i32, i32
  }
}

module attributes {stable_mosaic.version = 11 : i64} {
  func.func @_lstm_kernel(%arg0: i32, %arg1: memref<2x28x128xbf16, #tpu.memory_space<vmem>>, %arg2: memref<128x512xbf16, #tpu.memory_space<vmem>>, %arg3: memref<128x512xbf16, #tpu.memory_space<vmem>>, %arg4: memref<1x512xf32, #tpu.memory_space<vmem>>, %arg5: memref<2x128xf32, #tpu.memory_space<vmem>>, %arg6: memref<28x2x512xf32, #tpu.memory_space<vmem>>, %arg7: memref<28x2x128xf32, #tpu.memory_space<vmem>>, %arg8: memref<2x128xf32, #tpu.memory_space<vmem>>, %arg9: memref<2x128xf32, #tpu.memory_space<vmem>>) attributes {dimension_semantics = [#tpu.dimension_semantics<parallel>], iteration_bounds = array<i64: 1>, scalar_prefetch = 0 : i64, scratch_operands = 4 : i64, tpu.core_type = #tpu.core_type<tc>, window_params = [{transform_indices = @transform_0, window_bounds = array<i64: 2, 28, 128>}, {pipeline_mode = #tpu.pipeline_mode<synchronous>, transform_indices = @transform_1, window_bounds = array<i64: 128, 512>}, {pipeline_mode = #tpu.pipeline_mode<synchronous>, transform_indices = @transform_2, window_bounds = array<i64: 128, 512>}, {pipeline_mode = #tpu.pipeline_mode<synchronous>, transform_indices = @transform_3, window_bounds = array<i64: 1, 512>}, {transform_indices = @transform_4, window_bounds = array<i64: 2, 128>}]} {
    %c0 = arith.constant 0 : index
    %c0_0 = arith.constant 0 : index
    %c0_1 = arith.constant 0 : index
    %0 = vector.load %arg1[%c0, %c0_0, %c0_1] : memref<2x28x128xbf16, #tpu.memory_space<vmem>>, vector<1x28x128xbf16>
    %1 = vector.shape_cast %0 : vector<1x28x128xbf16> to vector<28x128xbf16>
    %c0_2 = arith.constant 0 : index
    %c0_3 = arith.constant 0 : index
    %2 = vector.load %arg2[%c0_2, %c0_3] : memref<128x512xbf16, #tpu.memory_space<vmem>>, vector<128x512xbf16>
    %cst = arith.constant dense<0.000000e+00> : vector<28x512xf32>
    %3 = tpu.matmul %1, %2, %cst {dimension_numbers = #tpu.dot_dimension_numbers<[1], [0], [0], [1], [0, 0, 1, 1], [], []>} : vector<28x128xbf16>, vector<128x512xbf16>, vector<28x512xf32> -> vector<28x512xf32>
    %c0_4 = arith.constant 0 : index
    %c0_5 = arith.constant 0 : index
    %4 = vector.load %arg4[%c0_4, %c0_5] : memref<1x512xf32, #tpu.memory_space<vmem>>, vector<1x512xf32>
    %5 = vector.broadcast %4 : vector<1x512xf32> to vector<28x512xf32>
    %6 = arith.addf %3, %5 : vector<28x512xf32>
    %c0_6 = arith.constant 0 : index
    %c0_7 = arith.constant 0 : index
    %c0_8 = arith.constant 0 : index
    %7 = vector.load %arg6[%c0_6, %c0_7, %c0_8] : memref<28x2x512xf32, #tpu.memory_space<vmem>>, vector<28x1x512xf32>
    %8 = vector.shape_cast %7 : vector<28x1x512xf32> to vector<28x512xf32>
    %9 = vector.shape_cast %6 : vector<28x512xf32> to vector<28x1x512xf32>
    tpu.vector_store %arg6[%c0_6, %c0_7, %c0_8], %9 {strides = array<i32>} : memref<28x2x512xf32, #tpu.memory_space<vmem>>, vector<28x1x512xf32>,
    %c1 = arith.constant 1 : index
    %c0_9 = arith.constant 0 : index
    %c0_10 = arith.constant 0 : index
    %10 = vector.load %arg1[%c1, %c0_9, %c0_10] : memref<2x28x128xbf16, #tpu.memory_space<vmem>>, vector<1x28x128xbf16>
    %11 = vector.shape_cast %10 : vector<1x28x128xbf16> to vector<28x128xbf16>
    %c0_11 = arith.constant 0 : index
    %c0_12 = arith.constant 0 : index
    %12 = vector.load %arg2[%c0_11, %c0_12] : memref<128x512xbf16, #tpu.memory_space<vmem>>, vector<128x512xbf16>
    %cst_13 = arith.constant dense<0.000000e+00> : vector<28x512xf32>
    %13 = tpu.matmul %11, %12, %cst_13 {dimension_numbers = #tpu.dot_dimension_numbers<[1], [0], [0], [1], [0, 0, 1, 1], [], []>} : vector<28x128xbf16>, vector<128x512xbf16>, vector<28x512xf32> -> vector<28x512xf32>
    %c0_14 = arith.constant 0 : index
    %c0_15 = arith.constant 0 : index
    %14 = vector.load %arg4[%c0_14, %c0_15] : memref<1x512xf32, #tpu.memory_space<vmem>>, vector<1x512xf32>
    %15 = vector.broadcast %14 : vector<1x512xf32> to vector<28x512xf32>
    %16 = arith.addf %13, %15 : vector<28x512xf32>
    %c0_16 = arith.constant 0 : index
    %c1_17 = arith.constant 1 : index
    %c0_18 = arith.constant 0 : index
    %17 = vector.load %arg6[%c0_16, %c1_17, %c0_18] : memref<28x2x512xf32, #tpu.memory_space<vmem>>, vector<28x1x512xf32>
    %18 = vector.shape_cast %17 : vector<28x1x512xf32> to vector<28x512xf32>
    %19 = vector.shape_cast %16 : vector<28x512xf32> to vector<28x1x512xf32>
    tpu.vector_store %arg6[%c0_16, %c1_17, %c0_18], %19 {strides = array<i32>} : memref<28x2x512xf32, #tpu.memory_space<vmem>>, vector<28x1x512xf32>,
    %cst_19 = arith.constant 0.000000e+00 : f32
    %20 = vector.broadcast %cst_19 : f32 to vector<2x128xf32>
    %c0_20 = arith.constant 0 : index
    %c0_21 = arith.constant 0 : index
    %21 = vector.load %arg8[%c0_20, %c0_21] : memref<2x128xf32, #tpu.memory_space<vmem>>, vector<2x128xf32>
    tpu.vector_store %arg8[%c0_20, %c0_21], %20 {strides = array<i32>} : memref<2x128xf32, #tpu.memory_space<vmem>>, vector<2x128xf32>,
    %cst_22 = arith.constant 0.000000e+00 : f32
    %22 = vector.broadcast %cst_22 : f32 to vector<2x128xf32>
    %c0_23 = arith.constant 0 : index
    %c0_24 = arith.constant 0 : index
    %23 = vector.load %arg9[%c0_23, %c0_24] : memref<2x128xf32, #tpu.memory_space<vmem>>, vector<2x128xf32>
    tpu.vector_store %arg9[%c0_23, %c0_24], %22 {strides = array<i32>} : memref<2x128xf32, #tpu.memory_space<vmem>>, vector<2x128xf32>,
    %c0_i32 = arith.constant 0 : i32
    %c28_i32 = arith.constant 28 : i32
    %24 = arith.addi %c0_i32, %c28_i32 : i32
    %c1_i32 = arith.constant 1 : i32
    scf.for %arg10 = %c0_i32 to %24 step %c1_i32  : i32 {
      %27 = arith.index_cast %arg10 : i32 to index
      %c0_30 = arith.constant 0 : index
      %c0_31 = arith.constant 0 : index
      %28 = vector.load %arg6[%27, %c0_30, %c0_31] : memref<28x2x512xf32, #tpu.memory_space<vmem>>, vector<1x2x512xf32>
      %29 = vector.shape_cast %28 : vector<1x2x512xf32> to vector<2x512xf32>
      %c0_32 = arith.constant 0 : index
      %c0_33 = arith.constant 0 : index
      %30 = vector.load %arg8[%c0_32, %c0_33] : memref<2x128xf32, #tpu.memory_space<vmem>>, vector<2x128xf32>
      %31 = arith.truncf %30 : vector<2x128xf32> to vector<2x128xbf16>
      %c0_34 = arith.constant 0 : index
      %c0_35 = arith.constant 0 : index
      %32 = vector.load %arg3[%c0_34, %c0_35] : memref<128x512xbf16, #tpu.memory_space<vmem>>, vector<128x512xbf16>
      %cst_36 = arith.constant dense<0.000000e+00> : vector<2x512xf32>
      %33 = tpu.matmul %31, %32, %cst_36 {dimension_numbers = #tpu.dot_dimension_numbers<[1], [0], [0], [1], [0, 0, 1, 1], [], []>} : vector<2x128xbf16>, vector<128x512xbf16>, vector<2x512xf32> -> vector<2x512xf32>
      %34 = arith.addf %29, %33 : vector<2x512xf32>
      %35 = vector.extract_strided_slice %34 {offsets = [0, 0], sizes = [2, 128], strides = [1, 1]} : vector<2x512xf32> to vector<2x128xf32>
      %36 = arith.negf %35 : vector<2x128xf32>
      %37 = math.exp %36 : vector<2x128xf32>
      %cst_37 = arith.constant 1.000000e+00 : f32
      %38 = vector.broadcast %cst_37 : f32 to vector<2x128xf32>
      %39 = arith.addf %38, %37 : vector<2x128xf32>
      %40 = arith.divf %38, %39 : vector<2x128xf32>
      %41 = vector.extract_strided_slice %34 {offsets = [0, 128], sizes = [2, 128], strides = [1, 1]} : vector<2x512xf32> to vector<2x128xf32>
      %42 = arith.negf %41 : vector<2x128xf32>
      %43 = math.exp %42 : vector<2x128xf32>
      %cst_38 = arith.constant 1.000000e+00 : f32
      %44 = vector.broadcast %cst_38 : f32 to vector<2x128xf32>
      %45 = arith.addf %44, %43 : vector<2x128xf32>
      %46 = arith.divf %44, %45 : vector<2x128xf32>
      %47 = vector.extract_strided_slice %34 {offsets = [0, 256], sizes = [2, 128], strides = [1, 1]} : vector<2x512xf32> to vector<2x128xf32>
      %48 = math.tanh %47 : vector<2x128xf32>
      %49 = vector.extract_strided_slice %34 {offsets = [0, 384], sizes = [2, 128], strides = [1, 1]} : vector<2x512xf32> to vector<2x128xf32>
      %50 = arith.negf %49 : vector<2x128xf32>
      %51 = math.exp %50 : vector<2x128xf32>
      %cst_39 = arith.constant 1.000000e+00 : f32
      %52 = vector.broadcast %cst_39 : f32 to vector<2x128xf32>
      %53 = arith.addf %52, %51 : vector<2x128xf32>
      %54 = arith.divf %52, %53 : vector<2x128xf32>
      %c0_40 = arith.constant 0 : index
      %c0_41 = arith.constant 0 : index
      %55 = vector.load %arg9[%c0_40, %c0_41] : memref<2x128xf32, #tpu.memory_space<vmem>>, vector<2x128xf32>
      %56 = arith.mulf %46, %55 : vector<2x128xf32>
      %57 = arith.mulf %40, %48 : vector<2x128xf32>
      %58 = arith.addf %56, %57 : vector<2x128xf32>
      %59 = math.tanh %58 : vector<2x128xf32>
      %60 = arith.mulf %54, %59 : vector<2x128xf32>
      %c0_42 = arith.constant 0 : index
      %c0_43 = arith.constant 0 : index
      %61 = vector.load %arg9[%c0_42, %c0_43] : memref<2x128xf32, #tpu.memory_space<vmem>>, vector<2x128xf32>
      tpu.vector_store %arg9[%c0_42, %c0_43], %58 {strides = array<i32>} : memref<2x128xf32, #tpu.memory_space<vmem>>, vector<2x128xf32>,
      %c0_44 = arith.constant 0 : index
      %c0_45 = arith.constant 0 : index
      %62 = vector.load %arg8[%c0_44, %c0_45] : memref<2x128xf32, #tpu.memory_space<vmem>>, vector<2x128xf32>
      tpu.vector_store %arg8[%c0_44, %c0_45], %60 {strides = array<i32>} : memref<2x128xf32, #tpu.memory_space<vmem>>, vector<2x128xf32>,
    }
    %c28_i32_25 = arith.constant 28 : i32
    %c0_26 = arith.constant 0 : index
    %c0_27 = arith.constant 0 : index
    %25 = vector.load %arg8[%c0_26, %c0_27] : memref<2x128xf32, #tpu.memory_space<vmem>>, vector<2x128xf32>
    %c0_28 = arith.constant 0 : index
    %c0_29 = arith.constant 0 : index
    %26 = vector.load %arg5[%c0_28, %c0_29] : memref<2x128xf32, #tpu.memory_space<vmem>>, vector<2x128xf32>
    tpu.vector_store %arg5[%c0_28, %c0_29], %25 {strides = array<i32>} : memref<2x128xf32, #tpu.memory_space<vmem>>, vector<2x128xf32>,
    return
  }
  func.func @transform_0(%arg0: i32) -> (i32, i32, i32) {
    %c0_i32 = arith.constant 0 : i32
    %c0_i32_0 = arith.constant 0 : i32
    %c0_i32_1 = arith.constant 0 : i32
    return %arg0, %c0_i32, %c0_i32_0 : i32, i32, i32
  }
  func.func @transform_1(%arg0: i32) -> (i32, i32) {
    %c0_i32 = arith.constant 0 : i32
    %c0_i32_0 = arith.constant 0 : i32
    %c0_i32_1 = arith.constant 0 : i32
    return %c0_i32, %c0_i32_0 : i32, i32
  }
  func.func @transform_2(%arg0: i32) -> (i32, i32) {
    %c0_i32 = arith.constant 0 : i32
    %c0_i32_0 = arith.constant 0 : i32
    %c0_i32_1 = arith.constant 0 : i32
    return %c0_i32, %c0_i32_0 : i32, i32
  }
  func.func @transform_3(%arg0: i32) -> (i32, i32) {
    %c0_i32 = arith.constant 0 : i32
    %c0_i32_0 = arith.constant 0 : i32
    %c0_i32_1 = arith.constant 0 : i32
    return %c0_i32, %c0_i32_0 : i32, i32
  }
  func.func @transform_4(%arg0: i32) -> (i32, i32) {
    %c0_i32 = arith.constant 0 : i32
    %c0_i32_0 = arith.constant 0 : i32
    return %arg0, %c0_i32 : i32, i32
  }
}

</mosaic_0001>

<llo_original>
// kernel: crnet_forward.3
$region0: #{crnet_forward.3}
  #allocation0 [shape = 'u32[]', space=smem, size = 0x4, offset = 0x4, fixed_abs, tag = 'smem constant byte address 0x4 - core index']
  #allocation1 [shape = 'u32[144,128]{1,0:T(1,128)}', space=vmem, size = 0x12000, scoped, tag = 'internal scratch']
  %s0 = inlined_call_operand.vmem [shape: bf16[2,32,128], index: 0, kind: input, shape index: {}]
  %s1 = inlined_call_operand.vmem [shape: bf16[3,128,256], index: 1, kind: input, shape index: {}]
  %s2 = inlined_call_operand.vmem [shape: f32[1,256], index: 2, kind: input, shape index: {}]
  %s3 = inlined_call_operand.vmem [shape: bf16[2,30,256], index: 3, kind: output, shape index: {}]
  %s4 = sld [smem:[#allocation0]]
  $region45: #{crnet_forward.3} parent=0
    _
  %s6 = ssub.s32 1, %s4
  %s7 = scalar_select 0, %s6, %s4
  loop: start=0, step=1, limit=4
  $region2: #{crnet_forward.3} parent=0 // loop_pre_header
    _
  $region3: #{crnet_forward.3} parent=0 // loop_header
    %s9 = sphi 0, %s13
    %p10 = scmp.ge.s32.totalorder %s9, 4
    %s19 = sphi 0, %s21
    %s22 = sphi 0, %s19
    %s23 = sphi 0, %s22
    %s39 = sphi 0, %s23
    %s43 = sphi 0, %s43
    %s45 = sphi 0, %s43
    %s46 = sphi 0, %s45
    %s60 = sphi 0, %s46
    %s64 = sphi 0, %s64
    %s66 = sphi 0, %s64
    %s67 = sphi 0, %s66
    %s81 = sphi 0, %s67
    %s87 = sphi 0, %s89
    %s90 = sphi 0, %s87
    %s91 = sphi 0, %s90
    %s107 = sphi 0, %s91
  $region4: #{crnet_forward.3} parent=0 // loop_header_branch
    %12 = sbr.rel (%p10) target = $region8
  $region5: #{crnet_forward.3} parent=0 // loop_body
    %s14 = ssub.s32 %s9, 1
    %s15 = ssub.s32 %s9, 2
    %s16 = sadd.s32 %s9, 1
    %s17 = ssub.s32 %s9, %s16
    %p18 = scmp.eq.s32.totalorder %s17, 0
    %s20 = sadd.s32 %s19, 1
    %s21 = scalar_select %p18, %s19, %s20
    %p24 = pneg %p18
    %p25 = scmp.eq.s32.totalorder %s9, 1
    %p26 = por %p24, %p25
    %p27 = scmp.ne.s32.totalorder %s19, %s22
    %p28 = scmp.eq.s32.totalorder %s9, 0
    %p29 = por %p27, %p28
    %p30 = scmp.ne.s32.totalorder %s19, %s22
    %p31 = scmp.eq.s32.totalorder %s14, 1
    %p32 = por %p30, %p31
    %p33 = scmp.ne.s32.totalorder %s22, %s23
    %p34 = scmp.eq.s32.totalorder %s14, 0
    %p35 = por %p33, %p34
    %p36 = scmp.ne.s32.totalorder %s22, %s23
    %p37 = scmp.eq.s32.totalorder %s15, 1
    %p38 = por %p36, %p37
    %p40 = scmp.ne.s32.totalorder %s23, %s39
    %p41 = scmp.eq.s32.totalorder %s15, 0
    %p42 = por %p40, %p41
    %s44 = sadd.s32 %s43, 1
    %p47 = scmp.eq.s32.totalorder %s9, 1
    %p48 = scmp.ne.s32.totalorder %s43, %s45
    %p49 = scmp.eq.s32.totalorder %s9, 0
    %p50 = por %p48, %p49
    %p51 = scmp.ne.s32.totalorder %s43, %s45
    %p52 = scmp.eq.s32.totalorder %s14, 1
    %p53 = por %p51, %p52
    %p54 = scmp.ne.s32.totalorder %s45, %s46
    %p55 = scmp.eq.s32.totalorder %s14, 0
    %p56 = por %p54, %p55
    %p57 = scmp.ne.s32.totalorder %s45, %s46
    %p58 = scmp.eq.s32.totalorder %s15, 1
    %p59 = por %p57, %p58
    %p61 = scmp.ne.s32.totalorder %s46, %s60
    %p62 = scmp.eq.s32.totalorder %s15, 0
    %p63 = por %p61, %p62
    %s65 = sadd.s32 %s64, 1
    %p68 = scmp.eq.s32.totalorder %s9, 1
    %p69 = scmp.ne.s32.totalorder %s64, %s66
    %p70 = scmp.eq.s32.totalorder %s9, 0
    %p71 = por %p69, %p70
    %p72 = scmp.ne.s32.totalorder %s64, %s66
    %p73 = scmp.eq.s32.totalorder %s14, 1
    %p74 = por %p72, %p73
    %p75 = scmp.ne.s32.totalorder %s66, %s67
    %p76 = scmp.eq.s32.totalorder %s14, 0
    %p77 = por %p75, %p76
    %p78 = scmp.ne.s32.totalorder %s66, %s67
    %p79 = scmp.eq.s32.totalorder %s15, 1
    %p80 = por %p78, %p79
    %p82 = scmp.ne.s32.totalorder %s67, %s81
    %p83 = scmp.eq.s32.totalorder %s15, 0
    %p84 = por %p82, %p83
    %s85 = ssub.s32 %s9, %s16
    %p86 = scmp.eq.s32.totalorder %s85, 0
    %s88 = sadd.s32 %s87, 1
    %s89 = scalar_select %p86, %s87, %s88
    %p92 = pneg %p86
    %p93 = scmp.eq.s32.totalorder %s9, 1
    %p94 = por %p92, %p93
    %p95 = scmp.ne.s32.totalorder %s87, %s90
    %p96 = scmp.eq.s32.totalorder %s9, 0
    %p97 = por %p95, %p96
    %p98 = scmp.ne.s32.totalorder %s87, %s90
    %p99 = scmp.eq.s32.totalorder %s14, 1
    %p100 = por %p98, %p99
    %p101 = scmp.ne.s32.totalorder %s90, %s91
    %p102 = scmp.eq.s32.totalorder %s14, 0
    %p103 = por %p101, %p102
    %p104 = scmp.ne.s32.totalorder %s90, %s91
    %p105 = scmp.eq.s32.totalorder %s15, 1
    %p106 = por %p104, %p105
    %p108 = scmp.ne.s32.totalorder %s91, %s107
    %p109 = scmp.eq.s32.totalorder %s15, 0
    %p110 = por %p108, %p109
    %p111 = scmp.le.s32.totalorder 1, %s9
    %p112 = scmp.lt.s32.totalorder %s9, 3
    %p113 = pnand %p111, %p112
    %p114 = pneg %p113
    // Predicated region
    $region9: #{crnet_forward.3} parent=5 // pred_check
      _
    $region10: #{crnet_forward.3} parent=5 // pred_check_branch
      %116 = sbr.rel (%p113) target = $region12
    $region11: #{crnet_forward.3} parent=5 // pred_region
      %s117 = ssub.s32 %s9, 1
      // Predicated region
      $region13: #{crnet_forward.3} parent=11 // pred_check
        %p118 = pneg %p56
      $region14: #{crnet_forward.3} parent=11 // pred_check_branch
        %120 = sbr.rel (%p118) target = $region16
      $region15: #{crnet_forward.3} parent=11 // pred_region
        _
      $region16: #{crnet_forward.3} parent=11 // pred_fallthru
        _
      // Predicated region
      $region17: #{crnet_forward.3} parent=11 // pred_check
        %p121 = pneg %p77
      $region18: #{crnet_forward.3} parent=11 // pred_check_branch
        %123 = sbr.rel (%p121) target = $region20
      $region19: #{crnet_forward.3} parent=11 // pred_region
        _
      $region20: #{crnet_forward.3} parent=11 // pred_fallthru
        _
    $region12: #{crnet_forward.3} parent=5 // pred_fallthru
      _
    %p124 = scmp.lt.s32.totalorder %s9, 2
    // Predicated region
    $region21: #{crnet_forward.3} parent=5 // pred_check
      %p125 = pneg %p124
    $region22: #{crnet_forward.3} parent=5 // pred_check_branch
      %127 = sbr.rel (%p125) target = $region24
    $region23: #{crnet_forward.3} parent=5 // pred_region
      // Predicated region
      $region25: #{crnet_forward.3} parent=23 // pred_check
        %p128 = pneg %p29
      $region26: #{crnet_forward.3} parent=23 // pred_check_branch
        %130 = sbr.rel (%p128) target = $region28
      $region27: #{crnet_forward.3} parent=23 // pred_region
        %p131 = scmp.lt.s32.totalorder %s9, 1
        %s132 = scalar_select %p131, %s9, 1
        %s133 = smul.addr %s132, 4
        %s134 = smul.addr %s133, 4
        %s135 = scalar_lea.vmem %s0, %s134
      $region28: #{crnet_forward.3} parent=23 // pred_fallthru
        _
    $region24: #{crnet_forward.3} parent=5 // pred_fallthru
      _
    %p136 = scmp.le.s32.totalorder 1, %s9
    %p137 = scmp.lt.s32.totalorder %s9, 3
    %p138 = pnand %p136, %p137
    %p139 = pneg %p138
    // Predicated region
    $region29: #{crnet_forward.3} parent=5 // pred_check
      _
    $region30: #{crnet_forward.3} parent=5 // pred_check_branch
      %141 = sbr.rel (%p138) target = $region32
    $region31: #{crnet_forward.3} parent=5 // pred_region
      %s142 = ssub.s32 %s9, 1
      %p143 = scmp.lt.s32.totalorder %s14, 1
      %s144 = scalar_select %p143, %s14, 1
      %s145 = smul.addr %s144, 4
      %s146 = smul.addr %s145, 4
      %s147 = scalar_lea.vmem %s0, %s146
      %p148 = pneg %p35
      %p149 = pneg %p32
      %p150 = pneg %p56
      %p151 = pneg %p53
      %p152 = pneg %p77
      %p153 = pneg %p74
      %p154 = pneg %p103
      %p155 = pneg %p100
      %p156 = scmp.lt.s32.totalorder %s14, 1
      %s157 = scalar_select %p156, %s14, 1
      %s158 = smul.addr %s157, 8
      %s159 = smul.addr %s158, 4
      %s160 = scalar_lea.vmem %s3, %s159
      %p161 = scmp.lt.s32.totalorder %s14, 1
      %s162 = scalar_select %p161, %s14, 1
      %s163 = smul.addr %s162, 4
      %s164 = smul.addr %s163, 4
      %s165 = scalar_lea.vmem %s0, %s164
      %p166 = scmp.lt.s32.totalorder %s14, 1
      %s167 = scalar_select %p166, %s14, 1
      %s168 = smul.addr %s167, 8
      %s169 = smul.addr %s168, 4
      %s170 = scalar_lea.vmem %s3, %s169
      %v172 = vld [vmem:[%s165] sm:$0xf]
      %v173 = vld [vmem:[%s165 + $0x4] sm:$0xf]
      %v174 = vld [vmem:[%s165 + $0x8] sm:$0xf]
      %v175 = vld [vmem:[%s165 + $0xc] sm:$0x7]
      %v176 = vld [vmem:[%s1] sm:$0xff]
      %v177 = vld [vmem:[%s1 + $0x8] sm:$0xff]
      %v178 = vld [vmem:[%s1 + $0x10] sm:$0xff]
      %v179 = vld [vmem:[%s1 + $0x18] sm:$0xff]
      %v180 = vld [vmem:[%s1 + $0x20] sm:$0xff]
      %v181 = vld [vmem:[%s1 + $0x28] sm:$0xff]
      %v182 = vld [vmem:[%s1 + $0x30] sm:$0xff]
      %v183 = vld [vmem:[%s1 + $0x38] sm:$0xff]
      %v184 = vld [vmem:[%s1 + $0x40] sm:$0xff]
      %v185 = vld [vmem:[%s1 + $0x48] sm:$0xff]
      %v186 = vld [vmem:[%s1 + $0x50] sm:$0xff]
      %v187 = vld [vmem:[%s1 + $0x58] sm:$0xff]
      %v188 = vld [vmem:[%s1 + $0x60] sm:$0xff]
      %v189 = vld [vmem:[%s1 + $0x68] sm:$0xff]
      %v190 = vld [vmem:[%s1 + $0x70] sm:$0xff]
      %v191 = vld [vmem:[%s1 + $0x78] sm:$0xff]
      %v192 = vld [vmem:[%s165 + $0xc] sm:$0xf]
      %s193 = scalar_lea.vmem %s1, 128
      %v194 = vld [vmem:[%s193] sm:$0xff]
      %v195 = vld [vmem:[%s193 + $0x8] sm:$0xff]
      %v196 = vld [vmem:[%s193 + $0x10] sm:$0xff]
      %v197 = vld [vmem:[%s193 + $0x18] sm:$0xff]
      %v198 = vld [vmem:[%s193 + $0x20] sm:$0xff]
      %v199 = vld [vmem:[%s193 + $0x28] sm:$0xff]
      %v200 = vld [vmem:[%s193 + $0x30] sm:$0xff]
      %v201 = vld [vmem:[%s193 + $0x38] sm:$0xff]
      %v202 = vld [vmem:[%s193 + $0x40] sm:$0xff]
      %v203 = vld [vmem:[%s193 + $0x48] sm:$0xff]
      %v204 = vld [vmem:[%s193 + $0x50] sm:$0xff]
      %v205 = vld [vmem:[%s193 + $0x58] sm:$0xff]
      %v206 = vld [vmem:[%s193 + $0x60] sm:$0xff]
      %v207 = vld [vmem:[%s193 + $0x68] sm:$0xff]
      %v208 = vld [vmem:[%s193 + $0x70] sm:$0xff]
      %v209 = vld [vmem:[%s193 + $0x78] sm:$0xff]
      %v214 = vunpack.c.l.b16 %v172
      %v215 = vunpack.c.l.b16 %v173
      %v216 = vunpack.c.l.b16 %v174
      %v217 = vunpack.c.l.b16 %v192
      %v218 = vpack.c.b16 %v215, %v214
      %v219 = vpack.c.b16 %v217, %v216
      %vm220 = vsmask.f32 7424
      %v222 = vshrl.u32 %v218, 16
      %v224 = vshll.u32 %v218, 16
      %v226 = vrot.slane %v224, 1
      %v227 = vor.u32 %v222, %v226
      %v229 = vshll.u32 %v219, 16
      %v231 = vrot.slane %v229, 1
      %v232 = vsel %vm220, %v227, %v231
      %v233 = vshrl.u32 %v219, 16
      %v235 = vor.u32 %v233, %v231
      %v254 = vunpack.c.l.b16 %v194
      %v255 = vunpack.c.h.b16 %v194
      %v256 = vunpack.c.l.b16 %v195
      %v257 = vunpack.c.h.b16 %v195
      %v258 = vunpack.c.l.b16 %v196
      %v259 = vunpack.c.h.b16 %v196
      %v260 = vunpack.c.l.b16 %v197
      %v261 = vunpack.c.h.b16 %v197
      %v262 = vunpack.c.l.b16 %v198
      %v263 = vunpack.c.h.b16 %v198
      %v264 = vunpack.c.l.b16 %v199
      %v265 = vunpack.c.h.b16 %v199
      %v266 = vunpack.c.l.b16 %v200
      %v267 = vunpack.c.h.b16 %v200
      %v268 = vunpack.c.l.b16 %v201
      %v269 = vunpack.c.h.b16 %v201
      %v270 = vunpack.c.l.b16 %v202
      %v271 = vunpack.c.h.b16 %v202
      %v272 = vunpack.c.l.b16 %v203
      %v273 = vunpack.c.h.b16 %v203
      %v274 = vunpack.c.l.b16 %v204
      %v275 = vunpack.c.h.b16 %v204
      %v276 = vunpack.c.l.b16 %v205
      %v277 = vunpack.c.h.b16 %v205
      %v278 = vunpack.c.l.b16 %v206
      %v279 = vunpack.c.h.b16 %v206
      %v280 = vunpack.c.l.b16 %v207
      %v281 = vunpack.c.h.b16 %v207
      %v282 = vunpack.c.l.b16 %v208
      %v283 = vunpack.c.h.b16 %v208
      %v284 = vunpack.c.l.b16 %v209
      %v285 = vunpack.c.h.b16 %v209
      %v286 = vpack.c.b16 %v256, %v254
      %v287 = vpack.c.b16 %v257, %v255
      %v288 = vpack.c.b16 %v260, %v258
      %v289 = vpack.c.b16 %v261, %v259
      %v290 = vpack.c.b16 %v264, %v262
      %v291 = vpack.c.b16 %v265, %v263
      %v292 = vpack.c.b16 %v268, %v266
      %v293 = vpack.c.b16 %v269, %v267
      %v294 = vpack.c.b16 %v272, %v270
      %v295 = vpack.c.b16 %v273, %v271
      %v296 = vpack.c.b16 %v276, %v274
      %v297 = vpack.c.b16 %v277, %v275
      %v298 = vpack.c.b16 %v280, %v278
      %v299 = vpack.c.b16 %v281, %v279
      %v300 = vpack.c.b16 %v284, %v282
      %v301 = vpack.c.b16 %v285, %v283
      %318 = vmatprep.subr.bf16.mxu0 %v287
      %319 = vmatpush1.bf16.msra.mxu0 %v286
      %320 = vmatprep.subr.bf16.mxu0 %v289
      %321 = vmatpush1.bf16.msra.mxu0 %v288
      %322 = vmatprep.subr.bf16.mxu0 %v291
      %323 = vmatpush1.bf16.msra.mxu0 %v290
      %324 = vmatprep.subr.bf16.mxu0 %v293
      %325 = vmatpush1.bf16.msra.mxu0 %v292
      %326 = vmatprep.subr.bf16.mxu0 %v295
      %327 = vmatpush1.bf16.msra.mxu0 %v294
      %328 = vmatprep.subr.bf16.mxu0 %v297
      %329 = vmatpush1.bf16.msra.mxu0 %v296
      %330 = vmatprep.subr.bf16.mxu0 %v299
      %331 = vmatpush1.bf16.msra.mxu0 %v298
      %332 = vmatprep.subr.bf16.mxu0 %v301
      %333 = vmatpush1.bf16.msra.mxu0 %v300
      %334 = vmatprep.subr.bf16.mxu0 0
      %335 = vmatpush1.bf16.msra.mxu0 0
      %336 = vmatprep.subr.bf16.mxu0 0
      %337 = vmatpush1.bf16.msra.mxu0 0
      %338 = vmatprep.subr.bf16.mxu0 0
      %339 = vmatpush1.bf16.msra.mxu0 0
      %340 = vmatprep.subr.bf16.mxu0 0
      %341 = vmatpush1.bf16.msra.mxu0 0
      %342 = vmatprep.subr.bf16.mxu0 0
      %343 = vmatpush1.bf16.msra.mxu0 0
      %344 = vmatprep.subr.bf16.mxu0 0
      %345 = vmatpush1.bf16.msra.mxu0 0
      %346 = vmatprep.subr.bf16.mxu0 0
      %347 = vmatpush1.bf16.msra.mxu0 0
      %348 = vmatprep.subr.bf16.mxu0 0
      %349 = vmatpush1.bf16.msra.mxu0 0
      %350 = vmatprep.mubr.bf16.mxu0 0
      %351 = vmatmul.mubr.bf16.gmra.mrb[0].mxu0 %v232
      %v352 = vpop.f32.mrb[0].mxu0
      %v353 = vadd.f32 0.0, %v352
      %v354 = vpop.f32.mrb[0].mxu0
      %v355 = vadd.f32 0.0, %v354
      %v356 = vpop.f32.mrb[0].mxu0
      %v357 = vadd.f32 0.0, %v356
      %v358 = vpop.f32.mrb[0].mxu0
      %v359 = vadd.f32 0.0, %v358
      %360 = vmatprep.mubr.bf16.mxu0 0
      %361 = vmatmul.mubr.bf16.gmra.mrb[0].mxu0 %v235
      %v362 = vpop.f32.mrb[0].mxu0
      %v363 = vadd.f32 0.0, %v362
      %v364 = vpop.f32.mrb[0].mxu0
      %v365 = vadd.f32 0.0, %v364
      %v366 = vpop.f32.mrb[0].mxu0
      %v367 = vadd.f32 0.0, %v366
      %v368 = vpop.f32.mrb[0].mxu0
      %v369 = vadd.f32 0.0, %v368
      %370 = vdwg.mxu0
      %v372 = vunpack.c.l.b16 %v175
      %v373 = vpack.c.b16 %v372, %v216
      %v392 = vunpack.c.l.b16 %v176
      %v393 = vunpack.c.h.b16 %v176
      %v394 = vunpack.c.l.b16 %v177
      %v395 = vunpack.c.h.b16 %v177
      %v396 = vunpack.c.l.b16 %v178
      %v397 = vunpack.c.h.b16 %v178
      %v398 = vunpack.c.l.b16 %v179
      %v399 = vunpack.c.h.b16 %v179
      %v400 = vunpack.c.l.b16 %v180
      %v401 = vunpack.c.h.b16 %v180
      %v402 = vunpack.c.l.b16 %v181
      %v403 = vunpack.c.h.b16 %v181
      %v404 = vunpack.c.l.b16 %v182
      %v405 = vunpack.c.h.b16 %v182
      %v406 = vunpack.c.l.b16 %v183
      %v407 = vunpack.c.h.b16 %v183
      %v408 = vunpack.c.l.b16 %v184
      %v409 = vunpack.c.h.b16 %v184
      %v410 = vunpack.c.l.b16 %v185
      %v411 = vunpack.c.h.b16 %v185
      %v412 = vunpack.c.l.b16 %v186
      %v413 = vunpack.c.h.b16 %v186
      %v414 = vunpack.c.l.b16 %v187
      %v415 = vunpack.c.h.b16 %v187
      %v416 = vunpack.c.l.b16 %v188
      %v417 = vunpack.c.h.b16 %v188
      %v418 = vunpack.c.l.b16 %v189
      %v419 = vunpack.c.h.b16 %v189
      %v420 = vunpack.c.l.b16 %v190
      %v421 = vunpack.c.h.b16 %v190
      %v422 = vunpack.c.l.b16 %v191
      %v423 = vunpack.c.h.b16 %v191
      %v424 = vpack.c.b16 %v394, %v392
      %v425 = vpack.c.b16 %v395, %v393
      %v426 = vpack.c.b16 %v398, %v396
      %v427 = vpack.c.b16 %v399, %v397
      %v428 = vpack.c.b16 %v402, %v400
      %v429 = vpack.c.b16 %v403, %v401
      %v430 = vpack.c.b16 %v406, %v404
      %v431 = vpack.c.b16 %v407, %v405
      %v432 = vpack.c.b16 %v410, %v408
      %v433 = vpack.c.b16 %v411, %v409
      %v434 = vpack.c.b16 %v414, %v412
      %v435 = vpack.c.b16 %v415, %v413
      %v436 = vpack.c.b16 %v418, %v416
      %v437 = vpack.c.b16 %v419, %v417
      %v438 = vpack.c.b16 %v422, %v420
      %v439 = vpack.c.b16 %v423, %v421
      %456 = vmatprep.subr.bf16.mxu0 %v425
      %457 = vmatpush1.bf16.msra.mxu0 %v424
      %458 = vmatprep.subr.bf16.mxu0 %v427
      %459 = vmatpush1.bf16.msra.mxu0 %v426
      %460 = vmatprep.subr.bf16.mxu0 %v429
      %461 = vmatpush1.bf16.msra.mxu0 %v428
      %462 = vmatprep.subr.bf16.mxu0 %v431
      %463 = vmatpush1.bf16.msra.mxu0 %v430
      %464 = vmatprep.subr.bf16.mxu0 %v433
      %465 = vmatpush1.bf16.msra.mxu0 %v432
      %466 = vmatprep.subr.bf16.mxu0 %v435
      %467 = vmatpush1.bf16.msra.mxu0 %v434
      %468 = vmatprep.subr.bf16.mxu0 %v437
      %469 = vmatpush1.bf16.msra.mxu0 %v436
      %470 = vmatprep.subr.bf16.mxu0 %v439
      %471 = vmatpush1.bf16.msra.mxu0 %v438
      %472 = vmatprep.subr.bf16.mxu0 0
      %473 = vmatpush1.bf16.msra.mxu0 0
      %474 = vmatprep.subr.bf16.mxu0 0
      %475 = vmatpush1.bf16.msra.mxu0 0
      %476 = vmatprep.subr.bf16.mxu0 0
      %477 = vmatpush1.bf16.msra.mxu0 0
      %478 = vmatprep.subr.bf16.mxu0 0
      %479 = vmatpush1.bf16.msra.mxu0 0
      %480 = vmatprep.subr.bf16.mxu0 0
      %481 = vmatpush1.bf16.msra.mxu0 0
      %482 = vmatprep.subr.bf16.mxu0 0
      %483 = vmatpush1.bf16.msra.mxu0 0
      %484 = vmatprep.subr.bf16.mxu0 0
      %485 = vmatpush1.bf16.msra.mxu0 0
      %486 = vmatprep.subr.bf16.mxu0 0
      %487 = vmatpush1.bf16.msra.mxu0 0
      %488 = vmatprep.mubr.bf16.mxu0 0
      %489 = vmatmul.mubr.bf16.gmra.mrb[0].mxu0 %v218
      %v490 = vpop.f32.mrb[0].mxu0
      %v491 = vadd.f32 %v353, %v490
      %v492 = vpop.f32.mrb[0].mxu0
      %v493 = vadd.f32 %v355, %v492
      %v494 = vpop.f32.mrb[0].mxu0
      %v495 = vadd.f32 %v357, %v494
      %v496 = vpop.f32.mrb[0].mxu0
      %v497 = vadd.f32 %v359, %v496
      %498 = vmatprep.mubr.bf16.mxu0 0
      %499 = vmatmul.mubr.bf16.gmra.mrb[0].mxu0 %v373
      %v500 = vpop.f32.mrb[0].mxu0
      %v501 = vadd.f32 %v363, %v500
      %v502 = vpop.f32.mrb[0].mxu0
      %v503 = vadd.f32 %v365, %v502
      %v504 = vpop.f32.mrb[0].mxu0
      %v505 = vadd.f32 %v367, %v504
      %v506 = vpop.f32.mrb[0].mxu0
      %v507 = vadd.f32 %v369, %v506
      %508 = vdwg.mxu0
      %v509 = vld [vmem:[%s165] sm:$0xe]
      %s510 = scalar_lea.vmem %s1, 256
      %v511 = vld [vmem:[%s510] sm:$0xff]
      %v512 = vld [vmem:[%s510 + $0x8] sm:$0xff]
      %v513 = vld [vmem:[%s510 + $0x10] sm:$0xff]
      %v514 = vld [vmem:[%s510 + $0x18] sm:$0xff]
      %v515 = vld [vmem:[%s510 + $0x20] sm:$0xff]
      %v516 = vld [vmem:[%s510 + $0x28] sm:$0xff]
      %v517 = vld [vmem:[%s510 + $0x30] sm:$0xff]
      %v518 = vld [vmem:[%s510 + $0x38] sm:$0xff]
      %v519 = vld [vmem:[%s510 + $0x40] sm:$0xff]
      %v520 = vld [vmem:[%s510 + $0x48] sm:$0xff]
      %v521 = vld [vmem:[%s510 + $0x50] sm:$0xff]
      %v522 = vld [vmem:[%s510 + $0x58] sm:$0xff]
      %v523 = vld [vmem:[%s510 + $0x60] sm:$0xff]
      %v524 = vld [vmem:[%s510 + $0x68] sm:$0xff]
      %v525 = vld [vmem:[%s510 + $0x70] sm:$0xff]
      %v526 = vld [vmem:[%s510 + $0x78] sm:$0xff]
      %v528 = vunpack.c.l.b16 %v509
      %v529 = vpack.c.b16 %v215, %v528
      %vm530 = vcmask 1046528
      %v531 = vrot.slane %v529, 1
      %v532 = vrot.slane %v219, 1
      %v533 = vsel %vm530, %v531, %v532
      %v552 = vunpack.c.l.b16 %v511
      %v553 = vunpack.c.h.b16 %v511
      %v554 = vunpack.c.l.b16 %v512
      %v555 = vunpack.c.h.b16 %v512
      %v556 = vunpack.c.l.b16 %v513
      %v557 = vunpack.c.h.b16 %v513
      %v558 = vunpack.c.l.b16 %v514
      %v559 = vunpack.c.h.b16 %v514
      %v560 = vunpack.c.l.b16 %v515
      %v561 = vunpack.c.h.b16 %v515
      %v562 = vunpack.c.l.b16 %v516
      %v563 = vunpack.c.h.b16 %v516
      %v564 = vunpack.c.l.b16 %v517
      %v565 = vunpack.c.h.b16 %v517
      %v566 = vunpack.c.l.b16 %v518
      %v567 = vunpack.c.h.b16 %v518
      %v568 = vunpack.c.l.b16 %v519
      %v569 = vunpack.c.h.b16 %v519
      %v570 = vunpack.c.l.b16 %v520
      %v571 = vunpack.c.h.b16 %v520
      %v572 = vunpack.c.l.b16 %v521
      %v573 = vunpack.c.h.b16 %v521
      %v574 = vunpack.c.l.b16 %v522
      %v575 = vunpack.c.h.b16 %v522
      %v576 = vunpack.c.l.b16 %v523
      %v577 = vunpack.c.h.b16 %v523
      %v578 = vunpack.c.l.b16 %v524
      %v579 = vunpack.c.h.b16 %v524
      %v580 = vunpack.c.l.b16 %v525
      %v581 = vunpack.c.h.b16 %v525
      %v582 = vunpack.c.l.b16 %v526
      %v583 = vunpack.c.h.b16 %v526
      %v584 = vpack.c.b16 %v554, %v552
      %v585 = vpack.c.b16 %v555, %v553
      %v586 = vpack.c.b16 %v558, %v556
      %v587 = vpack.c.b16 %v559, %v557
      %v588 = vpack.c.b16 %v562, %v560
      %v589 = vpack.c.b16 %v563, %v561
      %v590 = vpack.c.b16 %v566, %v564
      %v591 = vpack.c.b16 %v567, %v565
      %v592 = vpack.c.b16 %v570, %v568
      %v593 = vpack.c.b16 %v571, %v569
      %v594 = vpack.c.b16 %v574, %v572
      %v595 = vpack.c.b16 %v575, %v573
      %v596 = vpack.c.b16 %v578, %v576
      %v597 = vpack.c.b16 %v579, %v577
      %v598 = vpack.c.b16 %v582, %v580
      %v599 = vpack.c.b16 %v583, %v581
      %616 = vmatprep.subr.bf16.mxu0 %v585
      %617 = vmatpush1.bf16.msra.mxu0 %v584
      %618 = vmatprep.subr.bf16.mxu0 %v587
      %619 = vmatpush1.bf16.msra.mxu0 %v586
      %620 = vmatprep.subr.bf16.mxu0 %v589
      %621 = vmatpush1.bf16.msra.mxu0 %v588
      %622 = vmatprep.subr.bf16.mxu0 %v591
      %623 = vmatpush1.bf16.msra.mxu0 %v590
      %624 = vmatprep.subr.bf16.mxu0 %v593
      %625 = vmatpush1.bf16.msra.mxu0 %v592
      %626 = vmatprep.subr.bf16.mxu0 %v595
      %627 = vmatpush1.bf16.msra.mxu0 %v594
      %628 = vmatprep.subr.bf16.mxu0 %v597
      %629 = vmatpush1.bf16.msra.mxu0 %v596
      %630 = vmatprep.subr.bf16.mxu0 %v599
      %631 = vmatpush1.bf16.msra.mxu0 %v598
      %632 = vmatprep.subr.bf16.mxu0 0
      %633 = vmatpush1.bf16.msra.mxu0 0
      %634 = vmatprep.subr.bf16.mxu0 0
      %635 = vmatpush1.bf16.msra.mxu0 0
      %636 = vmatprep.subr.bf16.mxu0 0
      %637 = vmatpush1.bf16.msra.mxu0 0
      %638 = vmatprep.subr.bf16.mxu0 0
      %639 = vmatpush1.bf16.msra.mxu0 0
      %640 = vmatprep.subr.bf16.mxu0 0
      %641 = vmatpush1.bf16.msra.mxu0 0
      %642 = vmatprep.subr.bf16.mxu0 0
      %643 = vmatpush1.bf16.msra.mxu0 0
      %644 = vmatprep.subr.bf16.mxu0 0
      %645 = vmatpush1.bf16.msra.mxu0 0
      %646 = vmatprep.subr.bf16.mxu0 0
      %647 = vmatpush1.bf16.msra.mxu0 0
      %648 = vmatprep.mubr.bf16.mxu0 0
      %649 = vmatmul.mubr.bf16.gmra.mrb[0].mxu0 %v533
      %v650 = vpop.f32.mrb[0].mxu0
      %v651 = vadd.f32 0.0, %v650
      %v652 = vpop.f32.mrb[0].mxu0
      %v653 = vadd.f32 0.0, %v652
      %v654 = vpop.f32.mrb[0].mxu0
      %v655 = vadd.f32 0.0, %v654
      %v656 = vpop.f32.mrb[0].mxu0
      %v657 = vadd.f32 0.0, %v656
      %658 = vmatprep.mubr.bf16.mxu0 0
      %659 = vmatmul.mubr.bf16.gmra.mrb[0].mxu0 %v532
      %v660 = vpop.f32.mrb[0].mxu0
      %v661 = vadd.f32 0.0, %v660
      %v662 = vpop.f32.mrb[0].mxu0
      %v663 = vadd.f32 0.0, %v662
      %v664 = vpop.f32.mrb[0].mxu0
      %v665 = vadd.f32 0.0, %v664
      %v666 = vpop.f32.mrb[0].mxu0
      %v667 = vadd.f32 0.0, %v666
      %668 = vdwg.mxu0
      %v669 = vadd.f32 %v491, %v651
      %v670 = vadd.f32 %v493, %v653
      %v671 = vadd.f32 %v495, %v655
      %v672 = vadd.f32 %v497, %v657
      %v673 = vadd.f32 %v501, %v661
      %v674 = vadd.f32 %v503, %v663
      %v675 = vadd.f32 %v505, %v665
      %v676 = vadd.f32 %v507, %v667
      %v677 = vld [vmem:[%s2] sm:$0x3]
      %v679 = vlaneseq
      %v680 = vshrl.u32 %v679, 7
      %v681 = vsub.s32 0, %v680
      %v682 = vrot.slane %v677, %v681
      %v683 = vlaneseq
      %v684 = vshrl.u32 %v683, 7
      %v685 = vsub.s32 1, %v684
      %v686 = vrot.slane %v677, %v685
      %v689 = vadd.f32 %v669, %v682
      %v690 = vadd.f32 %v670, %v686
      %v691 = vadd.f32 %v671, %v682
      %v692 = vadd.f32 %v672, %v686
      %v693 = vadd.f32 %v673, %v682
      %v694 = vadd.f32 %v674, %v686
      %v695 = vadd.f32 %v675, %v682
      %v696 = vadd.f32 %v676, %v686
      %v697 = vmax.f32 %v689, 0.0
      %v698 = vmax.f32 %v690, 0.0
      %v699 = vmax.f32 %v691, 0.0
      %v700 = vmax.f32 %v692, 0.0
      %v701 = vmax.f32 %v693, 0.0
      %v702 = vmax.f32 %v694, 0.0
      %v703 = vmax.f32 %v695, 0.0
      %v704 = vmax.f32 %v696, 0.0
      %v705 = vpack.c.bf16 %v699, %v697
      %v706 = vpack.c.bf16 %v700, %v698
      %v707 = vpack.c.bf16 %v703, %v701
      %v708 = vpack.c.bf16 %v704, %v702
      %v713 = vunpack.c.l.b16 %v705
      %v714 = vunpack.c.l.b16 %v706
      %v715 = vunpack.c.h.b16 %v705
      %v716 = vunpack.c.h.b16 %v706
      %v717 = vunpack.c.l.b16 %v707
      %v718 = vunpack.c.l.b16 %v708
      %v719 = vunpack.c.h.b16 %v707
      %v720 = vunpack.c.h.b16 %v708
      %v721 = vpack.c.b16 %v714, %v713
      %v722 = vpack.c.b16 %v716, %v715
      %v723 = vpack.c.b16 %v718, %v717
      %v724 = vpack.c.b16 %v720, %v719
      %729 = vst [vmem:[%s170] sm:$0xff] %v721
      %730 = vst [vmem:[%s170 + $0x8] sm:$0xff] %v722
      %731 = vst [vmem:[%s170 + $0x10] sm:$0xff] %v723
      %732 = vst [vmem:[%s170 + $0x18] sm:$0x77] %v724
      %p733 = scmp.lt.s32.totalorder %s14, 1
      %s734 = scalar_select %p733, %s14, 1
      %s735 = smul.addr %s734, 8
      %s736 = smul.addr %s735, 4
      %s737 = scalar_lea.vmem %s3, %s736
      // Predicated region
      $region33: #{crnet_forward.3} parent=31 // pred_check
        %p738 = pneg %p100
      $region34: #{crnet_forward.3} parent=31 // pred_check_branch
        %740 = sbr.rel (%p738) target = $region36
      $region35: #{crnet_forward.3} parent=31 // pred_region
        _
      $region36: #{crnet_forward.3} parent=31 // pred_fallthru
        _
    $region32: #{crnet_forward.3} parent=5 // pred_fallthru
      _
    %p741 = scmp.le.s32.totalorder 2, %s9
    // Predicated region
    $region37: #{crnet_forward.3} parent=5 // pred_check
      %p742 = pneg %p741
    $region38: #{crnet_forward.3} parent=5 // pred_check_branch
      %744 = sbr.rel (%p742) target = $region40
    $region39: #{crnet_forward.3} parent=5 // pred_region
      %s745 = ssub.s32 %s9, 2
      // Predicated region
      $region41: #{crnet_forward.3} parent=39 // pred_check
        %p746 = pneg %p106
      $region42: #{crnet_forward.3} parent=39 // pred_check_branch
        %748 = sbr.rel (%p746) target = $region44
      $region43: #{crnet_forward.3} parent=39 // pred_region
        %p749 = scmp.lt.s32.totalorder %s15, 1
        %s750 = scalar_select %p749, %s15, 1
        %s751 = smul.addr %s750, 8
        %s752 = smul.addr %s751, 4
        %s753 = scalar_lea.vmem %s3, %s752
      $region44: #{crnet_forward.3} parent=39 // pred_fallthru
        _
    $region40: #{crnet_forward.3} parent=5 // pred_fallthru
      _
  $region6: #{crnet_forward.3} parent=0 // loop_footer
    %s13 = sadd.s32 1, %s9
  $region7: #{crnet_forward.3} parent=0 // loop_footer_branch
    %8 = sbr.rel target = $region3
  $region8: #{crnet_forward.3} parent=0 // loop_exit
    _

// kernel: crnet_forward.4
$region0: #{crnet_forward.4}
  #allocation0 [shape = 'u32[]', space=smem, size = 0x4, offset = 0x4, fixed_abs, tag = 'smem constant byte address 0x4 - core index']
  #allocation1 [shape = 'u32[144,128]{1,0:T(1,128)}', space=vmem, size = 0x12000, scoped, tag = 'internal scratch']
  %s0 = inlined_call_operand.vmem [shape: bf16[2,30,256], index: 0, kind: input, shape index: {}]
  %s1 = inlined_call_operand.vmem [shape: bf16[3,256,128], index: 1, kind: input, shape index: {}]
  %s2 = inlined_call_operand.vmem [shape: f32[1,128], index: 2, kind: input, shape index: {}]
  %s3 = inlined_call_operand.vmem [shape: bf16[2,28,128], index: 3, kind: output, shape index: {}]
  %s4 = sld [smem:[#allocation0]]
  $region45: #{crnet_forward.4} parent=0
    _
  %s6 = ssub.s32 1, %s4
  %s7 = scalar_select 0, %s6, %s4
  loop: start=0, step=1, limit=4
  $region2: #{crnet_forward.4} parent=0 // loop_pre_header
    _
  $region3: #{crnet_forward.4} parent=0 // loop_header
    %s9 = sphi 0, %s13
    %p10 = scmp.ge.s32.totalorder %s9, 4
    %s19 = sphi 0, %s21
    %s22 = sphi 0, %s19
    %s23 = sphi 0, %s22
    %s39 = sphi 0, %s23
    %s43 = sphi 0, %s43
    %s45 = sphi 0, %s43
    %s46 = sphi 0, %s45
    %s60 = sphi 0, %s46
    %s64 = sphi 0, %s64
    %s66 = sphi 0, %s64
    %s67 = sphi 0, %s66
    %s81 = sphi 0, %s67
    %s87 = sphi 0, %s89
    %s90 = sphi 0, %s87
    %s91 = sphi 0, %s90
    %s107 = sphi 0, %s91
  $region4: #{crnet_forward.4} parent=0 // loop_header_branch
    %12 = sbr.rel (%p10) target = $region8
  $region5: #{crnet_forward.4} parent=0 // loop_body
    %s14 = ssub.s32 %s9, 1
    %s15 = ssub.s32 %s9, 2
    %s16 = sadd.s32 %s9, 1
    %s17 = ssub.s32 %s9, %s16
    %p18 = scmp.eq.s32.totalorder %s17, 0
    %s20 = sadd.s32 %s19, 1
    %s21 = scalar_select %p18, %s19, %s20
    %p24 = pneg %p18
    %p25 = scmp.eq.s32.totalorder %s9, 1
    %p26 = por %p24, %p25
    %p27 = scmp.ne.s32.totalorder %s19, %s22
    %p28 = scmp.eq.s32.totalorder %s9, 0
    %p29 = por %p27, %p28
    %p30 = scmp.ne.s32.totalorder %s19, %s22
    %p31 = scmp.eq.s32.totalorder %s14, 1
    %p32 = por %p30, %p31
    %p33 = scmp.ne.s32.totalorder %s22, %s23
    %p34 = scmp.eq.s32.totalorder %s14, 0
    %p35 = por %p33, %p34
    %p36 = scmp.ne.s32.totalorder %s22, %s23
    %p37 = scmp.eq.s32.totalorder %s15, 1
    %p38 = por %p36, %p37
    %p40 = scmp.ne.s32.totalorder %s23, %s39
    %p41 = scmp.eq.s32.totalorder %s15, 0
    %p42 = por %p40, %p41
    %s44 = sadd.s32 %s43, 1
    %p47 = scmp.eq.s32.totalorder %s9, 1
    %p48 = scmp.ne.s32.totalorder %s43, %s45
    %p49 = scmp.eq.s32.totalorder %s9, 0
    %p50 = por %p48, %p49
    %p51 = scmp.ne.s32.totalorder %s43, %s45
    %p52 = scmp.eq.s32.totalorder %s14, 1
    %p53 = por %p51, %p52
    %p54 = scmp.ne.s32.totalorder %s45, %s46
    %p55 = scmp.eq.s32.totalorder %s14, 0
    %p56 = por %p54, %p55
    %p57 = scmp.ne.s32.totalorder %s45, %s46
    %p58 = scmp.eq.s32.totalorder %s15, 1
    %p59 = por %p57, %p58
    %p61 = scmp.ne.s32.totalorder %s46, %s60
    %p62 = scmp.eq.s32.totalorder %s15, 0
    %p63 = por %p61, %p62
    %s65 = sadd.s32 %s64, 1
    %p68 = scmp.eq.s32.totalorder %s9, 1
    %p69 = scmp.ne.s32.totalorder %s64, %s66
    %p70 = scmp.eq.s32.totalorder %s9, 0
    %p71 = por %p69, %p70
    %p72 = scmp.ne.s32.totalorder %s64, %s66
    %p73 = scmp.eq.s32.totalorder %s14, 1
    %p74 = por %p72, %p73
    %p75 = scmp.ne.s32.totalorder %s66, %s67
    %p76 = scmp.eq.s32.totalorder %s14, 0
    %p77 = por %p75, %p76
    %p78 = scmp.ne.s32.totalorder %s66, %s67
    %p79 = scmp.eq.s32.totalorder %s15, 1
    %p80 = por %p78, %p79
    %p82 = scmp.ne.s32.totalorder %s67, %s81
    %p83 = scmp.eq.s32.totalorder %s15, 0
    %p84 = por %p82, %p83
    %s85 = ssub.s32 %s9, %s16
    %p86 = scmp.eq.s32.totalorder %s85, 0
    %s88 = sadd.s32 %s87, 1
    %s89 = scalar_select %p86, %s87, %s88
    %p92 = pneg %p86
    %p93 = scmp.eq.s32.totalorder %s9, 1
    %p94 = por %p92, %p93
    %p95 = scmp.ne.s32.totalorder %s87, %s90
    %p96 = scmp.eq.s32.totalorder %s9, 0
    %p97 = por %p95, %p96
    %p98 = scmp.ne.s32.totalorder %s87, %s90
    %p99 = scmp.eq.s32.totalorder %s14, 1
    %p100 = por %p98, %p99
    %p101 = scmp.ne.s32.totalorder %s90, %s91
    %p102 = scmp.eq.s32.totalorder %s14, 0
    %p103 = por %p101, %p102
    %p104 = scmp.ne.s32.totalorder %s90, %s91
    %p105 = scmp.eq.s32.totalorder %s15, 1
    %p106 = por %p104, %p105
    %p108 = scmp.ne.s32.totalorder %s91, %s107
    %p109 = scmp.eq.s32.totalorder %s15, 0
    %p110 = por %p108, %p109
    %p111 = scmp.le.s32.totalorder 1, %s9
    %p112 = scmp.lt.s32.totalorder %s9, 3
    %p113 = pnand %p111, %p112
    %p114 = pneg %p113
    // Predicated region
    $region9: #{crnet_forward.4} parent=5 // pred_check
      _
    $region10: #{crnet_forward.4} parent=5 // pred_check_branch
      %116 = sbr.rel (%p113) target = $region12
    $region11: #{crnet_forward.4} parent=5 // pred_region
      %s117 = ssub.s32 %s9, 1
      // Predicated region
      $region13: #{crnet_forward.4} parent=11 // pred_check
        %p118 = pneg %p56
      $region14: #{crnet_forward.4} parent=11 // pred_check_branch
        %120 = sbr.rel (%p118) target = $region16
      $region15: #{crnet_forward.4} parent=11 // pred_region
        _
      $region16: #{crnet_forward.4} parent=11 // pred_fallthru
        _
      // Predicated region
      $region17: #{crnet_forward.4} parent=11 // pred_check
        %p121 = pneg %p77
      $region18: #{crnet_forward.4} parent=11 // pred_check_branch
        %123 = sbr.rel (%p121) target = $region20
      $region19: #{crnet_forward.4} parent=11 // pred_region
        _
      $region20: #{crnet_forward.4} parent=11 // pred_fallthru
        _
    $region12: #{crnet_forward.4} parent=5 // pred_fallthru
      _
    %p124 = scmp.lt.s32.totalorder %s9, 2
    // Predicated region
    $region21: #{crnet_forward.4} parent=5 // pred_check
      %p125 = pneg %p124
    $region22: #{crnet_forward.4} parent=5 // pred_check_branch
      %127 = sbr.rel (%p125) target = $region24
    $region23: #{crnet_forward.4} parent=5 // pred_region
      // Predicated region
      $region25: #{crnet_forward.4} parent=23 // pred_check
        %p128 = pneg %p29
      $region26: #{crnet_forward.4} parent=23 // pred_check_branch
        %130 = sbr.rel (%p128) target = $region28
      $region27: #{crnet_forward.4} parent=23 // pred_region
        %p131 = scmp.lt.s32.totalorder %s9, 1
        %s132 = scalar_select %p131, %s9, 1
        %s133 = smul.addr %s132, 8
        %s134 = smul.addr %s133, 4
        %s135 = scalar_lea.vmem %s0, %s134
      $region28: #{crnet_forward.4} parent=23 // pred_fallthru
        _
    $region24: #{crnet_forward.4} parent=5 // pred_fallthru
      _
    %p136 = scmp.le.s32.totalorder 1, %s9
    %p137 = scmp.lt.s32.totalorder %s9, 3
    %p138 = pnand %p136, %p137
    %p139 = pneg %p138
    // Predicated region
    $region29: #{crnet_forward.4} parent=5 // pred_check
      _
    $region30: #{crnet_forward.4} parent=5 // pred_check_branch
      %141 = sbr.rel (%p138) target = $region32
    $region31: #{crnet_forward.4} parent=5 // pred_region
      %s142 = ssub.s32 %s9, 1
      %p143 = scmp.lt.s32.totalorder %s14, 1
      %s144 = scalar_select %p143, %s14, 1
      %s145 = smul.addr %s144, 8
      %s146 = smul.addr %s145, 4
      %s147 = scalar_lea.vmem %s0, %s146
      %p148 = pneg %p35
      %p149 = pneg %p32
      %p150 = pneg %p56
      %p151 = pneg %p53
      %p152 = pneg %p77
      %p153 = pneg %p74
      %p154 = pneg %p103
      %p155 = pneg %p100
      %p156 = scmp.lt.s32.totalorder %s14, 1
      %s157 = scalar_select %p156, %s14, 1
      %s158 = smul.addr %s157, 4
      %s159 = smul.addr %s158, 4
      %s160 = scalar_lea.vmem %s3, %s159
      %p161 = scmp.lt.s32.totalorder %s14, 1
      %s162 = scalar_select %p161, %s14, 1
      %s163 = smul.addr %s162, 8
      %s164 = smul.addr %s163, 4
      %s165 = scalar_lea.vmem %s0, %s164
      %p166 = scmp.lt.s32.totalorder %s14, 1
      %s167 = scalar_select %p166, %s14, 1
      %s168 = smul.addr %s167, 4
      %s169 = smul.addr %s168, 4
      %s170 = scalar_lea.vmem %s3, %s169
      %v172 = vld [vmem:[%s165] sm:$0xff]
      %v173 = vld [vmem:[%s165 + $0x8] sm:$0xff]
      %v174 = vld [vmem:[%s165 + $0x10] sm:$0xff]
      %v175 = vld [vmem:[%s165 + $0x18] sm:$0x33]
      %v176 = vld [vmem:[%s1] sm:$0xf]
      %v177 = vld [vmem:[%s1 + $0x4] sm:$0xf]
      %v178 = vld [vmem:[%s1 + $0x8] sm:$0xf]
      %v179 = vld [vmem:[%s1 + $0xc] sm:$0xf]
      %v180 = vld [vmem:[%s1 + $0x10] sm:$0xf]
      %v181 = vld [vmem:[%s1 + $0x14] sm:$0xf]
      %v182 = vld [vmem:[%s1 + $0x18] sm:$0xf]
      %v183 = vld [vmem:[%s1 + $0x1c] sm:$0xf]
      %v184 = vld [vmem:[%s1 + $0x20] sm:$0xf]
      %v185 = vld [vmem:[%s1 + $0x24] sm:$0xf]
      %v186 = vld [vmem:[%s1 + $0x28] sm:$0xf]
      %v187 = vld [vmem:[%s1 + $0x2c] sm:$0xf]
      %v188 = vld [vmem:[%s1 + $0x30] sm:$0xf]
      %v189 = vld [vmem:[%s1 + $0x34] sm:$0xf]
      %v190 = vld [vmem:[%s1 + $0x38] sm:$0xf]
      %v191 = vld [vmem:[%s1 + $0x3c] sm:$0xf]
      %v192 = vld [vmem:[%s1 + $0x40] sm:$0xf]
      %v193 = vld [vmem:[%s1 + $0x44] sm:$0xf]
      %v194 = vld [vmem:[%s1 + $0x48] sm:$0xf]
      %v195 = vld [vmem:[%s1 + $0x4c] sm:$0xf]
      %v196 = vld [vmem:[%s1 + $0x50] sm:$0xf]
      %v197 = vld [vmem:[%s1 + $0x54] sm:$0xf]
      %v198 = vld [vmem:[%s1 + $0x58] sm:$0xf]
      %v199 = vld [vmem:[%s1 + $0x5c] sm:$0xf]
      %v200 = vld [vmem:[%s1 + $0x60] sm:$0xf]
      %v201 = vld [vmem:[%s1 + $0x64] sm:$0xf]
      %v202 = vld [vmem:[%s1 + $0x68] sm:$0xf]
      %v203 = vld [vmem:[%s1 + $0x6c] sm:$0xf]
      %v204 = vld [vmem:[%s1 + $0x70] sm:$0xf]
      %v205 = vld [vmem:[%s1 + $0x74] sm:$0xf]
      %v206 = vld [vmem:[%s1 + $0x78] sm:$0xf]
      %v207 = vld [vmem:[%s1 + $0x7c] sm:$0xf]
      %v208 = vld [vmem:[%s165 + $0x18] sm:$0x77]
      %s209 = scalar_lea.vmem %s1, 128
      %v210 = vld [vmem:[%s209] sm:$0xf]
      %v211 = vld [vmem:[%s209 + $0x4] sm:$0xf]
      %v212 = vld [vmem:[%s209 + $0x8] sm:$0xf]
      %v213 = vld [vmem:[%s209 + $0xc] sm:$0xf]
      %v214 = vld [vmem:[%s209 + $0x10] sm:$0xf]
      %v215 = vld [vmem:[%s209 + $0x14] sm:$0xf]
      %v216 = vld [vmem:[%s209 + $0x18] sm:$0xf]
      %v217 = vld [vmem:[%s209 + $0x1c] sm:$0xf]
      %v218 = vld [vmem:[%s209 + $0x20] sm:$0xf]
      %v219 = vld [vmem:[%s209 + $0x24] sm:$0xf]
      %v220 = vld [vmem:[%s209 + $0x28] sm:$0xf]
      %v221 = vld [vmem:[%s209 + $0x2c] sm:$0xf]
      %v222 = vld [vmem:[%s209 + $0x30] sm:$0xf]
      %v223 = vld [vmem:[%s209 + $0x34] sm:$0xf]
      %v224 = vld [vmem:[%s209 + $0x38] sm:$0xf]
      %v225 = vld [vmem:[%s209 + $0x3c] sm:$0xf]
      %v226 = vld [vmem:[%s209 + $0x40] sm:$0xf]
      %v227 = vld [vmem:[%s209 + $0x44] sm:$0xf]
      %v228 = vld [vmem:[%s209 + $0x48] sm:$0xf]
      %v229 = vld [vmem:[%s209 + $0x4c] sm:$0xf]
      %v230 = vld [vmem:[%s209 + $0x50] sm:$0xf]
      %v231 = vld [vmem:[%s209 + $0x54] sm:$0xf]
      %v232 = vld [vmem:[%s209 + $0x58] sm:$0xf]
      %v233 = vld [vmem:[%s209 + $0x5c] sm:$0xf]
      %v234 = vld [vmem:[%s209 + $0x60] sm:$0xf]
      %v235 = vld [vmem:[%s209 + $0x64] sm:$0xf]
      %v236 = vld [vmem:[%s209 + $0x68] sm:$0xf]
      %v237 = vld [vmem:[%s209 + $0x6c] sm:$0xf]
      %v238 = vld [vmem:[%s209 + $0x70] sm:$0xf]
      %v239 = vld [vmem:[%s209 + $0x74] sm:$0xf]
      %v240 = vld [vmem:[%s209 + $0x78] sm:$0xf]
      %v241 = vld [vmem:[%s209 + $0x7c] sm:$0xf]
      %v246 = vunpack.c.l.b16 %v172
      %v247 = vunpack.c.h.b16 %v172
      %v248 = vunpack.c.l.b16 %v173
      %v249 = vunpack.c.h.b16 %v173
      %v250 = vunpack.c.l.b16 %v174
      %v251 = vunpack.c.h.b16 %v174
      %v252 = vunpack.c.l.b16 %v208
      %v253 = vunpack.c.h.b16 %v208
      %v254 = vpack.c.b16 %v248, %v246
      %v255 = vpack.c.b16 %v249, %v247
      %v256 = vpack.c.b16 %v252, %v250
      %v257 = vpack.c.b16 %v253, %v251
      %vm258 = vsmask.f32 7424
      %v260 = vshrl.u32 %v254, 16
      %v262 = vshll.u32 %v254, 16
      %v264 = vrot.slane %v262, 1
      %v265 = vor.u32 %v260, %v264
      %v267 = vshll.u32 %v256, 16
      %v269 = vrot.slane %v267, 1
      %v270 = vsel %vm258, %v265, %v269
      %v272 = vshrl.u32 %v255, 16
      %v274 = vshll.u32 %v255, 16
      %v276 = vrot.slane %v274, 1
      %v277 = vor.u32 %v272, %v276
      %v279 = vshll.u32 %v257, 16
      %v281 = vrot.slane %v279, 1
      %v282 = vsel %vm258, %v277, %v281
      %v283 = vshrl.u32 %v256, 16
      %v285 = vor.u32 %v283, %v269
      %v286 = vshrl.u32 %v257, 16
      %v288 = vor.u32 %v286, %v281
      %v325 = vunpack.c.l.b16 %v210
      %v326 = vunpack.c.l.b16 %v211
      %v327 = vunpack.c.l.b16 %v212
      %v328 = vunpack.c.l.b16 %v213
      %v329 = vunpack.c.l.b16 %v214
      %v330 = vunpack.c.l.b16 %v215
      %v331 = vunpack.c.l.b16 %v216
      %v332 = vunpack.c.l.b16 %v217
      %v333 = vunpack.c.l.b16 %v218
      %v334 = vunpack.c.l.b16 %v219
      %v335 = vunpack.c.l.b16 %v220
      %v336 = vunpack.c.l.b16 %v221
      %v337 = vunpack.c.l.b16 %v222
      %v338 = vunpack.c.l.b16 %v223
      %v339 = vunpack.c.l.b16 %v224
      %v340 = vunpack.c.l.b16 %v225
      %v341 = vunpack.c.l.b16 %v226
      %v342 = vunpack.c.l.b16 %v227
      %v343 = vunpack.c.l.b16 %v228
      %v344 = vunpack.c.l.b16 %v229
      %v345 = vunpack.c.l.b16 %v230
      %v346 = vunpack.c.l.b16 %v231
      %v347 = vunpack.c.l.b16 %v232
      %v348 = vunpack.c.l.b16 %v233
      %v349 = vunpack.c.l.b16 %v234
      %v350 = vunpack.c.l.b16 %v235
      %v351 = vunpack.c.l.b16 %v236
      %v352 = vunpack.c.l.b16 %v237
      %v353 = vunpack.c.l.b16 %v238
      %v354 = vunpack.c.l.b16 %v239
      %v355 = vunpack.c.l.b16 %v240
      %v356 = vunpack.c.l.b16 %v241
      %v357 = vpack.c.b16 %v326, %v325
      %v358 = vpack.c.b16 %v328, %v327
      %v359 = vpack.c.b16 %v330, %v329
      %v360 = vpack.c.b16 %v332, %v331
      %v361 = vpack.c.b16 %v334, %v333
      %v362 = vpack.c.b16 %v336, %v335
      %v363 = vpack.c.b16 %v338, %v337
      %v364 = vpack.c.b16 %v340, %v339
      %v365 = vpack.c.b16 %v342, %v341
      %v366 = vpack.c.b16 %v344, %v343
      %v367 = vpack.c.b16 %v346, %v345
      %v368 = vpack.c.b16 %v348, %v347
      %v369 = vpack.c.b16 %v350, %v349
      %v370 = vpack.c.b16 %v352, %v351
      %v371 = vpack.c.b16 %v354, %v353
      %v372 = vpack.c.b16 %v356, %v355
      %389 = vmatprep.subr.bf16.mxu0 0
      %390 = vmatpush1.bf16.msra.mxu0 %v357
      %391 = vmatprep.subr.bf16.mxu0 0
      %392 = vmatpush1.bf16.msra.mxu0 %v358
      %393 = vmatprep.subr.bf16.mxu0 0
      %394 = vmatpush1.bf16.msra.mxu0 %v359
      %395 = vmatprep.subr.bf16.mxu0 0
      %396 = vmatpush1.bf16.msra.mxu0 %v360
      %397 = vmatprep.subr.bf16.mxu0 0
      %398 = vmatpush1.bf16.msra.mxu0 %v361
      %399 = vmatprep.subr.bf16.mxu0 0
      %400 = vmatpush1.bf16.msra.mxu0 %v362
      %401 = vmatprep.subr.bf16.mxu0 0
      %402 = vmatpush1.bf16.msra.mxu0 %v363
      %403 = vmatprep.subr.bf16.mxu0 0
      %404 = vmatpush1.bf16.msra.mxu0 %v364
      %405 = vmatprep.subr.bf16.mxu0 0
      %406 = vmatpush1.bf16.msra.mxu0 %v365
      %407 = vmatprep.subr.bf16.mxu0 0
      %408 = vmatpush1.bf16.msra.mxu0 %v366
      %409 = vmatprep.subr.bf16.mxu0 0
      %410 = vmatpush1.bf16.msra.mxu0 %v367
      %411 = vmatprep.subr.bf16.mxu0 0
      %412 = vmatpush1.bf16.msra.mxu0 %v368
      %413 = vmatprep.subr.bf16.mxu0 0
      %414 = vmatpush1.bf16.msra.mxu0 %v369
      %415 = vmatprep.subr.bf16.mxu0 0
      %416 = vmatpush1.bf16.msra.mxu0 %v370
      %417 = vmatprep.subr.bf16.mxu0 0
      %418 = vmatpush1.bf16.msra.mxu0 %v371
      %419 = vmatprep.subr.bf16.mxu0 0
      %420 = vmatpush1.bf16.msra.mxu0 %v372
      %421 = vmatprep.mubr.bf16.mxu0 %v282
      %422 = vmatmul.mubr.bf16.gmra.mrb[0].mxu0 %v270
      %v423 = vpop.f32.mrb[0].mxu0
      %v424 = vadd.f32 0.0, %v423
      %v425 = vpop.f32.mrb[0].mxu0
      %v426 = vpop.f32.mrb[0].mxu0
      %v427 = vadd.f32 0.0, %v426
      %v428 = vpop.f32.mrb[0].mxu0
      %429 = vmatprep.mubr.bf16.mxu0 %v288
      %430 = vmatmul.mubr.bf16.gmra.mrb[0].mxu0 %v285
      %v431 = vpop.f32.mrb[0].mxu0
      %v432 = vadd.f32 0.0, %v431
      %v433 = vpop.f32.mrb[0].mxu0
      %v434 = vpop.f32.mrb[0].mxu0
      %v435 = vadd.f32 0.0, %v434
      %v436 = vpop.f32.mrb[0].mxu0
      %437 = vdwg.mxu0
      %v439 = vunpack.c.l.b16 %v175
      %v440 = vunpack.c.h.b16 %v175
      %v441 = vpack.c.b16 %v439, %v250
      %v442 = vpack.c.b16 %v440, %v251
      %v479 = vunpack.c.l.b16 %v176
      %v480 = vunpack.c.l.b16 %v177
      %v481 = vunpack.c.l.b16 %v178
      %v482 = vunpack.c.l.b16 %v179
      %v483 = vunpack.c.l.b16 %v180
      %v484 = vunpack.c.l.b16 %v181
      %v485 = vunpack.c.l.b16 %v182
      %v486 = vunpack.c.l.b16 %v183
      %v487 = vunpack.c.l.b16 %v184
      %v488 = vunpack.c.l.b16 %v185
      %v489 = vunpack.c.l.b16 %v186
      %v490 = vunpack.c.l.b16 %v187
      %v491 = vunpack.c.l.b16 %v188
      %v492 = vunpack.c.l.b16 %v189
      %v493 = vunpack.c.l.b16 %v190
      %v494 = vunpack.c.l.b16 %v191
      %v495 = vunpack.c.l.b16 %v192
      %v496 = vunpack.c.l.b16 %v193
      %v497 = vunpack.c.l.b16 %v194
      %v498 = vunpack.c.l.b16 %v195
      %v499 = vunpack.c.l.b16 %v196
      %v500 = vunpack.c.l.b16 %v197
      %v501 = vunpack.c.l.b16 %v198
      %v502 = vunpack.c.l.b16 %v199
      %v503 = vunpack.c.l.b16 %v200
      %v504 = vunpack.c.l.b16 %v201
      %v505 = vunpack.c.l.b16 %v202
      %v506 = vunpack.c.l.b16 %v203
      %v507 = vunpack.c.l.b16 %v204
      %v508 = vunpack.c.l.b16 %v205
      %v509 = vunpack.c.l.b16 %v206
      %v510 = vunpack.c.l.b16 %v207
      %v511 = vpack.c.b16 %v480, %v479
      %v512 = vpack.c.b16 %v482, %v481
      %v513 = vpack.c.b16 %v484, %v483
      %v514 = vpack.c.b16 %v486, %v485
      %v515 = vpack.c.b16 %v488, %v487
      %v516 = vpack.c.b16 %v490, %v489
      %v517 = vpack.c.b16 %v492, %v491
      %v518 = vpack.c.b16 %v494, %v493
      %v519 = vpack.c.b16 %v496, %v495
      %v520 = vpack.c.b16 %v498, %v497
      %v521 = vpack.c.b16 %v500, %v499
      %v522 = vpack.c.b16 %v502, %v501
      %v523 = vpack.c.b16 %v504, %v503
      %v524 = vpack.c.b16 %v506, %v505
      %v525 = vpack.c.b16 %v508, %v507
      %v526 = vpack.c.b16 %v510, %v509
      %543 = vmatprep.subr.bf16.mxu0 0
      %544 = vmatpush1.bf16.msra.mxu0 %v511
      %545 = vmatprep.subr.bf16.mxu0 0
      %546 = vmatpush1.bf16.msra.mxu0 %v512
      %547 = vmatprep.subr.bf16.mxu0 0
      %548 = vmatpush1.bf16.msra.mxu0 %v513
      %549 = vmatprep.subr.bf16.mxu0 0
      %550 = vmatpush1.bf16.msra.mxu0 %v514
      %551 = vmatprep.subr.bf16.mxu0 0
      %552 = vmatpush1.bf16.msra.mxu0 %v515
      %553 = vmatprep.subr.bf16.mxu0 0
      %554 = vmatpush1.bf16.msra.mxu0 %v516
      %555 = vmatprep.subr.bf16.mxu0 0
      %556 = vmatpush1.bf16.msra.mxu0 %v517
      %557 = vmatprep.subr.bf16.mxu0 0
      %558 = vmatpush1.bf16.msra.mxu0 %v518
      %559 = vmatprep.subr.bf16.mxu0 0
      %560 = vmatpush1.bf16.msra.mxu0 %v519
      %561 = vmatprep.subr.bf16.mxu0 0
      %562 = vmatpush1.bf16.msra.mxu0 %v520
      %563 = vmatprep.subr.bf16.mxu0 0
      %564 = vmatpush1.bf16.msra.mxu0 %v521
      %565 = vmatprep.subr.bf16.mxu0 0
      %566 = vmatpush1.bf16.msra.mxu0 %v522
      %567 = vmatprep.subr.bf16.mxu0 0
      %568 = vmatpush1.bf16.msra.mxu0 %v523
      %569 = vmatprep.subr.bf16.mxu0 0
      %570 = vmatpush1.bf16.msra.mxu0 %v524
      %571 = vmatprep.subr.bf16.mxu0 0
      %572 = vmatpush1.bf16.msra.mxu0 %v525
      %573 = vmatprep.subr.bf16.mxu0 0
      %574 = vmatpush1.bf16.msra.mxu0 %v526
      %575 = vmatprep.mubr.bf16.mxu0 %v255
      %576 = vmatmul.mubr.bf16.gmra.mrb[0].mxu0 %v254
      %v577 = vpop.f32.mrb[0].mxu0
      %v578 = vadd.f32 %v424, %v577
      %v579 = vpop.f32.mrb[0].mxu0
      %v580 = vpop.f32.mrb[0].mxu0
      %v581 = vadd.f32 %v427, %v580
      %v582 = vpop.f32.mrb[0].mxu0
      %583 = vmatprep.mubr.bf16.mxu0 %v442
      %584 = vmatmul.mubr.bf16.gmra.mrb[0].mxu0 %v441
      %v585 = vpop.f32.mrb[0].mxu0
      %v586 = vadd.f32 %v432, %v585
      %v587 = vpop.f32.mrb[0].mxu0
      %v588 = vpop.f32.mrb[0].mxu0
      %v589 = vadd.f32 %v435, %v588
      %v590 = vpop.f32.mrb[0].mxu0
      %591 = vdwg.mxu0
      %v592 = vld [vmem:[%s165] sm:$0xee]
      %s593 = scalar_lea.vmem %s1, 256
      %v594 = vld [vmem:[%s593] sm:$0xf]
      %v595 = vld [vmem:[%s593 + $0x4] sm:$0xf]
      %v596 = vld [vmem:[%s593 + $0x8] sm:$0xf]
      %v597 = vld [vmem:[%s593 + $0xc] sm:$0xf]
      %v598 = vld [vmem:[%s593 + $0x10] sm:$0xf]
      %v599 = vld [vmem:[%s593 + $0x14] sm:$0xf]
      %v600 = vld [vmem:[%s593 + $0x18] sm:$0xf]
      %v601 = vld [vmem:[%s593 + $0x1c] sm:$0xf]
      %v602 = vld [vmem:[%s593 + $0x20] sm:$0xf]
      %v603 = vld [vmem:[%s593 + $0x24] sm:$0xf]
      %v604 = vld [vmem:[%s593 + $0x28] sm:$0xf]
      %v605 = vld [vmem:[%s593 + $0x2c] sm:$0xf]
      %v606 = vld [vmem:[%s593 + $0x30] sm:$0xf]
      %v607 = vld [vmem:[%s593 + $0x34] sm:$0xf]
      %v608 = vld [vmem:[%s593 + $0x38] sm:$0xf]
      %v609 = vld [vmem:[%s593 + $0x3c] sm:$0xf]
      %v610 = vld [vmem:[%s593 + $0x40] sm:$0xf]
      %v611 = vld [vmem:[%s593 + $0x44] sm:$0xf]
      %v612 = vld [vmem:[%s593 + $0x48] sm:$0xf]
      %v613 = vld [vmem:[%s593 + $0x4c] sm:$0xf]
      %v614 = vld [vmem:[%s593 + $0x50] sm:$0xf]
      %v615 = vld [vmem:[%s593 + $0x54] sm:$0xf]
      %v616 = vld [vmem:[%s593 + $0x58] sm:$0xf]
      %v617 = vld [vmem:[%s593 + $0x5c] sm:$0xf]
      %v618 = vld [vmem:[%s593 + $0x60] sm:$0xf]
      %v619 = vld [vmem:[%s593 + $0x64] sm:$0xf]
      %v620 = vld [vmem:[%s593 + $0x68] sm:$0xf]
      %v621 = vld [vmem:[%s593 + $0x6c] sm:$0xf]
      %v622 = vld [vmem:[%s593 + $0x70] sm:$0xf]
      %v623 = vld [vmem:[%s593 + $0x74] sm:$0xf]
      %v624 = vld [vmem:[%s593 + $0x78] sm:$0xf]
      %v625 = vld [vmem:[%s593 + $0x7c] sm:$0xf]
      %v627 = vunpack.c.l.b16 %v592
      %v628 = vunpack.c.h.b16 %v592
      %v629 = vpack.c.b16 %v248, %v627
      %v630 = vpack.c.b16 %v249, %v628
      %vm631 = vcmask 1046528
      %v632 = vrot.slane %v629, 1
      %v633 = vrot.slane %v256, 1
      %v634 = vsel %vm631, %v632, %v633
      %v635 = vrot.slane %v630, 1
      %v636 = vrot.slane %v257, 1
      %v637 = vsel %vm631, %v635, %v636
      %v674 = vunpack.c.l.b16 %v594
      %v675 = vunpack.c.l.b16 %v595
      %v676 = vunpack.c.l.b16 %v596
      %v677 = vunpack.c.l.b16 %v597
      %v678 = vunpack.c.l.b16 %v598
      %v679 = vunpack.c.l.b16 %v599
      %v680 = vunpack.c.l.b16 %v600
      %v681 = vunpack.c.l.b16 %v601
      %v682 = vunpack.c.l.b16 %v602
      %v683 = vunpack.c.l.b16 %v603
      %v684 = vunpack.c.l.b16 %v604
      %v685 = vunpack.c.l.b16 %v605
      %v686 = vunpack.c.l.b16 %v606
      %v687 = vunpack.c.l.b16 %v607
      %v688 = vunpack.c.l.b16 %v608
      %v689 = vunpack.c.l.b16 %v609
      %v690 = vunpack.c.l.b16 %v610
      %v691 = vunpack.c.l.b16 %v611
      %v692 = vunpack.c.l.b16 %v612
      %v693 = vunpack.c.l.b16 %v613
      %v694 = vunpack.c.l.b16 %v614
      %v695 = vunpack.c.l.b16 %v615
      %v696 = vunpack.c.l.b16 %v616
      %v697 = vunpack.c.l.b16 %v617
      %v698 = vunpack.c.l.b16 %v618
      %v699 = vunpack.c.l.b16 %v619
      %v700 = vunpack.c.l.b16 %v620
      %v701 = vunpack.c.l.b16 %v621
      %v702 = vunpack.c.l.b16 %v622
      %v703 = vunpack.c.l.b16 %v623
      %v704 = vunpack.c.l.b16 %v624
      %v705 = vunpack.c.l.b16 %v625
      %v706 = vpack.c.b16 %v675, %v674
      %v707 = vpack.c.b16 %v677, %v676
      %v708 = vpack.c.b16 %v679, %v678
      %v709 = vpack.c.b16 %v681, %v680
      %v710 = vpack.c.b16 %v683, %v682
      %v711 = vpack.c.b16 %v685, %v684
      %v712 = vpack.c.b16 %v687, %v686
      %v713 = vpack.c.b16 %v689, %v688
      %v714 = vpack.c.b16 %v691, %v690
      %v715 = vpack.c.b16 %v693, %v692
      %v716 = vpack.c.b16 %v695, %v694
      %v717 = vpack.c.b16 %v697, %v696
      %v718 = vpack.c.b16 %v699, %v698
      %v719 = vpack.c.b16 %v701, %v700
      %v720 = vpack.c.b16 %v703, %v702
      %v721 = vpack.c.b16 %v705, %v704
      %738 = vmatprep.subr.bf16.mxu0 0
      %739 = vmatpush1.bf16.msra.mxu0 %v706
      %740 = vmatprep.subr.bf16.mxu0 0
      %741 = vmatpush1.bf16.msra.mxu0 %v707
      %742 = vmatprep.subr.bf16.mxu0 0
      %743 = vmatpush1.bf16.msra.mxu0 %v708
      %744 = vmatprep.subr.bf16.mxu0 0
      %745 = vmatpush1.bf16.msra.mxu0 %v709
      %746 = vmatprep.subr.bf16.mxu0 0
      %747 = vmatpush1.bf16.msra.mxu0 %v710
      %748 = vmatprep.subr.bf16.mxu0 0
      %749 = vmatpush1.bf16.msra.mxu0 %v711
      %750 = vmatprep.subr.bf16.mxu0 0
      %751 = vmatpush1.bf16.msra.mxu0 %v712
      %752 = vmatprep.subr.bf16.mxu0 0
      %753 = vmatpush1.bf16.msra.mxu0 %v713
      %754 = vmatprep.subr.bf16.mxu0 0
      %755 = vmatpush1.bf16.msra.mxu0 %v714
      %756 = vmatprep.subr.bf16.mxu0 0
      %757 = vmatpush1.bf16.msra.mxu0 %v715
      %758 = vmatprep.subr.bf16.mxu0 0
      %759 = vmatpush1.bf16.msra.mxu0 %v716
      %760 = vmatprep.subr.bf16.mxu0 0
      %761 = vmatpush1.bf16.msra.mxu0 %v717
      %762 = vmatprep.subr.bf16.mxu0 0
      %763 = vmatpush1.bf16.msra.mxu0 %v718
      %764 = vmatprep.subr.bf16.mxu0 0
      %765 = vmatpush1.bf16.msra.mxu0 %v719
      %766 = vmatprep.subr.bf16.mxu0 0
      %767 = vmatpush1.bf16.msra.mxu0 %v720
      %768 = vmatprep.subr.bf16.mxu0 0
      %769 = vmatpush1.bf16.msra.mxu0 %v721
      %770 = vmatprep.mubr.bf16.mxu0 %v637
      %771 = vmatmul.mubr.bf16.gmra.mrb[0].mxu0 %v634
      %v772 = vpop.f32.mrb[0].mxu0
      %v773 = vadd.f32 0.0, %v772
      %v774 = vpop.f32.mrb[0].mxu0
      %v775 = vpop.f32.mrb[0].mxu0
      %v776 = vadd.f32 0.0, %v775
      %v777 = vpop.f32.mrb[0].mxu0
      %778 = vmatprep.mubr.bf16.mxu0 %v636
      %779 = vmatmul.mubr.bf16.gmra.mrb[0].mxu0 %v633
      %v780 = vpop.f32.mrb[0].mxu0
      %v781 = vadd.f32 0.0, %v780
      %v782 = vpop.f32.mrb[0].mxu0
      %v783 = vpop.f32.mrb[0].mxu0
      %v784 = vadd.f32 0.0, %v783
      %v785 = vpop.f32.mrb[0].mxu0
      %786 = vdwg.mxu0
      %v787 = vadd.f32 %v578, %v773
      %v788 = vadd.f32 %v581, %v776
      %v789 = vadd.f32 %v586, %v781
      %v790 = vadd.f32 %v589, %v784
      %v791 = vld [vmem:[%s2] sm:$0x1]
      %v793 = vlaneseq
      %v794 = vshrl.u32 %v793, 7
      %v795 = vsub.s32 0, %v794
      %v796 = vrot.slane %v791, %v795
      %v798 = vadd.f32 %v787, %v796
      %v799 = vadd.f32 %v788, %v796
      %v800 = vadd.f32 %v789, %v796
      %v801 = vadd.f32 %v790, %v796
      %v802 = vmax.f32 %v798, 0.0
      %v803 = vmax.f32 %v799, 0.0
      %v804 = vmax.f32 %v800, 0.0
      %v805 = vmax.f32 %v801, 0.0
      %v806 = vpack.c.bf16 %v803, %v802
      %v807 = vpack.c.bf16 %v805, %v804
      %v810 = vunpack.c.l.b16 %v806
      %v811 = vunpack.c.h.b16 %v806
      %v812 = vunpack.c.l.b16 %v807
      %v813 = vunpack.c.h.b16 %v807
      %v814 = vpack.c.b16 %v810, %v810
      %v815 = vpack.c.b16 %v811, %v811
      %v816 = vpack.c.b16 %v812, %v812
      %v817 = vpack.c.b16 %v813, %v813
      %822 = vst [vmem:[%s170] sm:$0xf] %v814
      %823 = vst [vmem:[%s170 + $0x4] sm:$0xf] %v815
      %824 = vst [vmem:[%s170 + $0x8] sm:$0xf] %v816
      %825 = vst [vmem:[%s170 + $0xc] sm:$0x3] %v817
      %p826 = scmp.lt.s32.totalorder %s14, 1
      %s827 = scalar_select %p826, %s14, 1
      %s828 = smul.addr %s827, 4
      %s829 = smul.addr %s828, 4
      %s830 = scalar_lea.vmem %s3, %s829
      // Predicated region
      $region33: #{crnet_forward.4} parent=31 // pred_check
        %p831 = pneg %p100
      $region34: #{crnet_forward.4} parent=31 // pred_check_branch
        %833 = sbr.rel (%p831) target = $region36
      $region35: #{crnet_forward.4} parent=31 // pred_region
        _
      $region36: #{crnet_forward.4} parent=31 // pred_fallthru
        _
    $region32: #{crnet_forward.4} parent=5 // pred_fallthru
      _
    %p834 = scmp.le.s32.totalorder 2, %s9
    // Predicated region
    $region37: #{crnet_forward.4} parent=5 // pred_check
      %p835 = pneg %p834
    $region38: #{crnet_forward.4} parent=5 // pred_check_branch
      %837 = sbr.rel (%p835) target = $region40
    $region39: #{crnet_forward.4} parent=5 // pred_region
      %s838 = ssub.s32 %s9, 2
      // Predicated region
      $region41: #{crnet_forward.4} parent=39 // pred_check
        %p839 = pneg %p106
      $region42: #{crnet_forward.4} parent=39 // pred_check_branch
        %841 = sbr.rel (%p839) target = $region44
      $region43: #{crnet_forward.4} parent=39 // pred_region
        %p842 = scmp.lt.s32.totalorder %s15, 1
        %s843 = scalar_select %p842, %s15, 1
        %s844 = smul.addr %s843, 4
        %s845 = smul.addr %s844, 4
        %s846 = scalar_lea.vmem %s3, %s845
      $region44: #{crnet_forward.4} parent=39 // pred_fallthru
        _
    $region40: #{crnet_forward.4} parent=5 // pred_fallthru
      _
  $region6: #{crnet_forward.4} parent=0 // loop_footer
    %s13 = sadd.s32 1, %s9
  $region7: #{crnet_forward.4} parent=0 // loop_footer_branch
    %8 = sbr.rel target = $region3
  $region8: #{crnet_forward.4} parent=0 // loop_exit
    _

// kernel: crnet_forward.5
$region0: #{crnet_forward.5}
  #allocation0 [shape = 'u32[]', space=smem, size = 0x4, offset = 0x4, fixed_abs, tag = 'smem constant byte address 0x4 - core index']
  #allocation1 [shape = 'u32[144,128]{1,0:T(1,128)}', space=vmem, size = 0x12000, scoped, tag = 'internal scratch']
  #allocation2 [shape = 'f32[28,2,512]{2,1,0:T(2,128)}', space=vmem, size = 0x1c000, scoped, tag = 'scratch operand']
  #allocation3 [shape = 'f32[28,2,128]{2,1,0:T(2,128)}', space=vmem, size = 0x7000, scoped, tag = 'scratch operand']
  #allocation4 [shape = 'f32[2,128]{1,0:T(2,128)}', space=vmem, size = 0x400, scoped, tag = 'scratch operand']
  #allocation5 [shape = 'f32[2,128]{1,0:T(2,128)}', space=vmem, size = 0x400, scoped, tag = 'scratch operand']
  %s0 = inlined_call_operand.vmem [shape: bf16[2,28,128], index: 0, kind: input, shape index: {}]
  %s1 = inlined_call_operand.vmem [shape: bf16[128,512], index: 1, kind: input, shape index: {}]
  %s2 = inlined_call_operand.vmem [shape: bf16[128,512], index: 2, kind: input, shape index: {}]
  %s3 = inlined_call_operand.vmem [shape: f32[1,512], index: 3, kind: input, shape index: {}]
  %s4 = inlined_call_operand.hbm [shape: f32[2,128], index: 4, kind: output, shape index: {}]
  %s5 = sld [smem:[#allocation0]]
  $region33: #{crnet_forward.5} parent=0
    _
  %s7 = ssub.s32 1, %s5
  %s8 = scalar_select 0, %s7, %s5
  $region1: #{crnet_forward.5} parent=0
    #allocation6 [shape = 'u8[1024]{0}', space=vmem, size = 0x400, scoped, tag = 'output window, operand 0, single buffered']
    #allocation7 [shape = 's32[1]{0}', space=sflag, size = 0x4, scoped, tag = 'scoped memory for crnet_forward.5']
    %9 = vsyncpa [#allocation7], 0
    // Predicated region
    $region2: #{crnet_forward.5} parent=1 // pred_check
      _
    $region3: #{crnet_forward.5} parent=1 // pred_check_branch
      %11 = sbr.rel (0) target = $region5
    $region4: #{crnet_forward.5} parent=1 // pred_region
      _
    $region5: #{crnet_forward.5} parent=1 // pred_fallthru
      _
    // Predicated region
    $region6: #{crnet_forward.5} parent=1 // pred_check
      _
    $region7: #{crnet_forward.5} parent=1 // pred_check_branch
      %13 = sbr.rel (0) target = $region9
    $region8: #{crnet_forward.5} parent=1 // pred_region
      _
    $region9: #{crnet_forward.5} parent=1 // pred_fallthru
      _
    // Predicated region
    $region10: #{crnet_forward.5} parent=1 // pred_check
      _
    $region11: #{crnet_forward.5} parent=1 // pred_check_branch
      %15 = sbr.rel (0) target = $region13
    $region12: #{crnet_forward.5} parent=1 // pred_region
      _
    $region13: #{crnet_forward.5} parent=1 // pred_fallthru
      _
    // Predicated region
    $region14: #{crnet_forward.5} parent=1 // pred_check
      _
    $region15: #{crnet_forward.5} parent=1 // pred_check_branch
      %17 = sbr.rel (0) target = $region17
    $region16: #{crnet_forward.5} parent=1 // pred_region
      _
    $region17: #{crnet_forward.5} parent=1 // pred_fallthru
      _
    %v19 = vld [vmem:[%s0] sm:$0xf]
    %v20 = vld [vmem:[%s0 + $0x4] sm:$0xf]
    %v21 = vld [vmem:[%s0 + $0x8] sm:$0xf]
    %v22 = vld [vmem:[%s0 + $0xc] sm:$0x3]
    %v23 = vld [vmem:[%s1] sm:$0xff]
    %v24 = vld [vmem:[%s1 + $0x8] sm:$0xff]
    %v25 = vld [vmem:[%s1 + $0x10] sm:$0xff]
    %v26 = vld [vmem:[%s1 + $0x18] sm:$0xff]
    %v27 = vld [vmem:[%s1 + $0x20] sm:$0xff]
    %v28 = vld [vmem:[%s1 + $0x28] sm:$0xff]
    %v29 = vld [vmem:[%s1 + $0x30] sm:$0xff]
    %v30 = vld [vmem:[%s1 + $0x38] sm:$0xff]
    %v31 = vld [vmem:[%s1 + $0x40] sm:$0xff]
    %v32 = vld [vmem:[%s1 + $0x48] sm:$0xff]
    %v33 = vld [vmem:[%s1 + $0x50] sm:$0xff]
    %v34 = vld [vmem:[%s1 + $0x58] sm:$0xff]
    %v35 = vld [vmem:[%s1 + $0x60] sm:$0xff]
    %v36 = vld [vmem:[%s1 + $0x68] sm:$0xff]
    %v37 = vld [vmem:[%s1 + $0x70] sm:$0xff]
    %v38 = vld [vmem:[%s1 + $0x78] sm:$0xff]
    %v39 = vld [vmem:[%s1 + $0x80] sm:$0xff]
    %v40 = vld [vmem:[%s1 + $0x88] sm:$0xff]
    %v41 = vld [vmem:[%s1 + $0x90] sm:$0xff]
    %v42 = vld [vmem:[%s1 + $0x98] sm:$0xff]
    %v43 = vld [vmem:[%s1 + $0xa0] sm:$0xff]
    %v44 = vld [vmem:[%s1 + $0xa8] sm:$0xff]
    %v45 = vld [vmem:[%s1 + $0xb0] sm:$0xff]
    %v46 = vld [vmem:[%s1 + $0xb8] sm:$0xff]
    %v47 = vld [vmem:[%s1 + $0xc0] sm:$0xff]
    %v48 = vld [vmem:[%s1 + $0xc8] sm:$0xff]
    %v49 = vld [vmem:[%s1 + $0xd0] sm:$0xff]
    %v50 = vld [vmem:[%s1 + $0xd8] sm:$0xff]
    %v51 = vld [vmem:[%s1 + $0xe0] sm:$0xff]
    %v52 = vld [vmem:[%s1 + $0xe8] sm:$0xff]
    %v53 = vld [vmem:[%s1 + $0xf0] sm:$0xff]
    %v54 = vld [vmem:[%s1 + $0xf8] sm:$0xff]
    %v55 = vld [vmem:[%s3] sm:$0xf]
    %v57 = vlaneseq
    %v58 = vshrl.u32 %v57, 7
    %v59 = vsub.s32 0, %v58
    %v60 = vrot.slane %v55, %v59
    %v61 = vlaneseq
    %v62 = vshrl.u32 %v61, 7
    %v63 = vsub.s32 1, %v62
    %v64 = vrot.slane %v55, %v63
    %v65 = vlaneseq
    %v66 = vshrl.u32 %v65, 7
    %v67 = vsub.s32 2, %v66
    %v68 = vrot.slane %v55, %v67
    %v69 = vlaneseq
    %v70 = vshrl.u32 %v69, 7
    %v71 = vsub.s32 3, %v70
    %v72 = vrot.slane %v55, %v71
    %v81 = vunpack.c.l.b16 %v19
    %v82 = vunpack.c.l.b16 %v20
    %v83 = vunpack.c.l.b16 %v21
    %v84 = vunpack.c.l.b16 %v22
    %v85 = vpack.c.b16 %v82, %v81
    %v86 = vpack.c.b16 %v84, %v83
    %v121 = vunpack.c.l.b16 %v23
    %v122 = vunpack.c.h.b16 %v23
    %v123 = vunpack.c.l.b16 %v24
    %v124 = vunpack.c.h.b16 %v24
    %v125 = vunpack.c.l.b16 %v25
    %v126 = vunpack.c.h.b16 %v25
    %v127 = vunpack.c.l.b16 %v26
    %v128 = vunpack.c.h.b16 %v26
    %v129 = vunpack.c.l.b16 %v27
    %v130 = vunpack.c.h.b16 %v27
    %v131 = vunpack.c.l.b16 %v28
    %v132 = vunpack.c.h.b16 %v28
    %v133 = vunpack.c.l.b16 %v29
    %v134 = vunpack.c.h.b16 %v29
    %v135 = vunpack.c.l.b16 %v30
    %v136 = vunpack.c.h.b16 %v30
    %v137 = vunpack.c.l.b16 %v31
    %v138 = vunpack.c.h.b16 %v31
    %v139 = vunpack.c.l.b16 %v32
    %v140 = vunpack.c.h.b16 %v32
    %v141 = vunpack.c.l.b16 %v33
    %v142 = vunpack.c.h.b16 %v33
    %v143 = vunpack.c.l.b16 %v34
    %v144 = vunpack.c.h.b16 %v34
    %v145 = vunpack.c.l.b16 %v35
    %v146 = vunpack.c.h.b16 %v35
    %v147 = vunpack.c.l.b16 %v36
    %v148 = vunpack.c.h.b16 %v36
    %v149 = vunpack.c.l.b16 %v37
    %v150 = vunpack.c.h.b16 %v37
    %v151 = vunpack.c.l.b16 %v38
    %v152 = vunpack.c.h.b16 %v38
    %v153 = vunpack.c.l.b16 %v39
    %v154 = vunpack.c.h.b16 %v39
    %v155 = vunpack.c.l.b16 %v40
    %v156 = vunpack.c.h.b16 %v40
    %v157 = vunpack.c.l.b16 %v41
    %v158 = vunpack.c.h.b16 %v41
    %v159 = vunpack.c.l.b16 %v42
    %v160 = vunpack.c.h.b16 %v42
    %v161 = vunpack.c.l.b16 %v43
    %v162 = vunpack.c.h.b16 %v43
    %v163 = vunpack.c.l.b16 %v44
    %v164 = vunpack.c.h.b16 %v44
    %v165 = vunpack.c.l.b16 %v45
    %v166 = vunpack.c.h.b16 %v45
    %v167 = vunpack.c.l.b16 %v46
    %v168 = vunpack.c.h.b16 %v46
    %v169 = vunpack.c.l.b16 %v47
    %v170 = vunpack.c.h.b16 %v47
    %v171 = vunpack.c.l.b16 %v48
    %v172 = vunpack.c.h.b16 %v48
    %v173 = vunpack.c.l.b16 %v49
    %v174 = vunpack.c.h.b16 %v49
    %v175 = vunpack.c.l.b16 %v50
    %v176 = vunpack.c.h.b16 %v50
    %v177 = vunpack.c.l.b16 %v51
    %v178 = vunpack.c.h.b16 %v51
    %v179 = vunpack.c.l.b16 %v52
    %v180 = vunpack.c.h.b16 %v52
    %v181 = vunpack.c.l.b16 %v53
    %v182 = vunpack.c.h.b16 %v53
    %v183 = vunpack.c.l.b16 %v54
    %v184 = vunpack.c.h.b16 %v54
    %v185 = vpack.c.b16 %v125, %v121
    %v186 = vpack.c.b16 %v126, %v122
    %v187 = vpack.c.b16 %v127, %v123
    %v188 = vpack.c.b16 %v128, %v124
    %v189 = vpack.c.b16 %v133, %v129
    %v190 = vpack.c.b16 %v134, %v130
    %v191 = vpack.c.b16 %v135, %v131
    %v192 = vpack.c.b16 %v136, %v132
    %v193 = vpack.c.b16 %v141, %v137
    %v194 = vpack.c.b16 %v142, %v138
    %v195 = vpack.c.b16 %v143, %v139
    %v196 = vpack.c.b16 %v144, %v140
    %v197 = vpack.c.b16 %v149, %v145
    %v198 = vpack.c.b16 %v150, %v146
    %v199 = vpack.c.b16 %v151, %v147
    %v200 = vpack.c.b16 %v152, %v148
    %v201 = vpack.c.b16 %v157, %v153
    %v202 = vpack.c.b16 %v158, %v154
    %v203 = vpack.c.b16 %v159, %v155
    %v204 = vpack.c.b16 %v160, %v156
    %v205 = vpack.c.b16 %v165, %v161
    %v206 = vpack.c.b16 %v166, %v162
    %v207 = vpack.c.b16 %v167, %v163
    %v208 = vpack.c.b16 %v168, %v164
    %v209 = vpack.c.b16 %v173, %v169
    %v210 = vpack.c.b16 %v174, %v170
    %v211 = vpack.c.b16 %v175, %v171
    %v212 = vpack.c.b16 %v176, %v172
    %v213 = vpack.c.b16 %v181, %v177
    %v214 = vpack.c.b16 %v182, %v178
    %v215 = vpack.c.b16 %v183, %v179
    %v216 = vpack.c.b16 %v184, %v180
    %249 = vmatprep.subr.bf16.mxu0 %v186
    %250 = vmatpush1.bf16.msra.mxu0 %v185
    %251 = vmatprep.subr.bf16.mxu0 %v190
    %252 = vmatpush1.bf16.msra.mxu0 %v189
    %253 = vmatprep.subr.bf16.mxu0 %v194
    %254 = vmatpush1.bf16.msra.mxu0 %v193
    %255 = vmatprep.subr.bf16.mxu0 %v198
    %256 = vmatpush1.bf16.msra.mxu0 %v197
    %257 = vmatprep.subr.bf16.mxu0 %v202
    %258 = vmatpush1.bf16.msra.mxu0 %v201
    %259 = vmatprep.subr.bf16.mxu0 %v206
    %260 = vmatpush1.bf16.msra.mxu0 %v205
    %261 = vmatprep.subr.bf16.mxu0 %v210
    %262 = vmatpush1.bf16.msra.mxu0 %v209
    %263 = vmatprep.subr.bf16.mxu0 %v214
    %264 = vmatpush1.bf16.msra.mxu0 %v213
    %265 = vmatprep.subr.bf16.mxu0 0
    %266 = vmatpush1.bf16.msra.mxu0 0
    %267 = vmatprep.subr.bf16.mxu0 0
    %268 = vmatpush1.bf16.msra.mxu0 0
    %269 = vmatprep.subr.bf16.mxu0 0
    %270 = vmatpush1.bf16.msra.mxu0 0
    %271 = vmatprep.subr.bf16.mxu0 0
    %272 = vmatpush1.bf16.msra.mxu0 0
    %273 = vmatprep.subr.bf16.mxu0 0
    %274 = vmatpush1.bf16.msra.mxu0 0
    %275 = vmatprep.subr.bf16.mxu0 0
    %276 = vmatpush1.bf16.msra.mxu0 0
    %277 = vmatprep.subr.bf16.mxu0 0
    %278 = vmatpush1.bf16.msra.mxu0 0
    %279 = vmatprep.subr.bf16.mxu0 0
    %280 = vmatpush1.bf16.msra.mxu0 0
    %281 = vmatprep.mubr.bf16.mxu0 0
    %282 = vmatmul.mubr.bf16.gmra.mrb[0].mxu0 %v85
    %v283 = vpop.f32.mrb[0].mxu0
    %v284 = vadd.f32 %v60, %v283
    %v285 = vpop.f32.mrb[0].mxu0
    %v286 = vadd.f32 %v64, %v285
    %v287 = vpop.f32.mrb[0].mxu0
    %v288 = vadd.f32 %v60, %v287
    %v289 = vpop.f32.mrb[0].mxu0
    %v290 = vadd.f32 %v64, %v289
    %291 = vmatprep.mubr.bf16.mxu0 0
    %292 = vmatmul.mubr.bf16.gmra.mrb[0].mxu0 %v86
    %v293 = vpop.f32.mrb[0].mxu0
    %v294 = vadd.f32 %v60, %v293
    %v295 = vpop.f32.mrb[0].mxu0
    %v296 = vadd.f32 %v64, %v295
    %v297 = vpop.f32.mrb[0].mxu0
    %v298 = vadd.f32 %v60, %v297
    %v299 = vpop.f32.mrb[0].mxu0
    %v300 = vadd.f32 %v64, %v299
    %301 = vdwg.mxu0
    %302 = vmatprep.subr.bf16.mxu0 %v188
    %303 = vmatpush1.bf16.msra.mxu0 %v187
    %304 = vmatprep.subr.bf16.mxu0 %v192
    %305 = vmatpush1.bf16.msra.mxu0 %v191
    %306 = vmatprep.subr.bf16.mxu0 %v196
    %307 = vmatpush1.bf16.msra.mxu0 %v195
    %308 = vmatprep.subr.bf16.mxu0 %v200
    %309 = vmatpush1.bf16.msra.mxu0 %v199
    %310 = vmatprep.subr.bf16.mxu0 %v204
    %311 = vmatpush1.bf16.msra.mxu0 %v203
    %312 = vmatprep.subr.bf16.mxu0 %v208
    %313 = vmatpush1.bf16.msra.mxu0 %v207
    %314 = vmatprep.subr.bf16.mxu0 %v212
    %315 = vmatpush1.bf16.msra.mxu0 %v211
    %316 = vmatprep.subr.bf16.mxu0 %v216
    %317 = vmatpush1.bf16.msra.mxu0 %v215
    %318 = vmatprep.subr.bf16.mxu0 0
    %319 = vmatpush1.bf16.msra.mxu0 0
    %320 = vmatprep.subr.bf16.mxu0 0
    %321 = vmatpush1.bf16.msra.mxu0 0
    %322 = vmatprep.subr.bf16.mxu0 0
    %323 = vmatpush1.bf16.msra.mxu0 0
    %324 = vmatprep.subr.bf16.mxu0 0
    %325 = vmatpush1.bf16.msra.mxu0 0
    %326 = vmatprep.subr.bf16.mxu0 0
    %327 = vmatpush1.bf16.msra.mxu0 0
    %328 = vmatprep.subr.bf16.mxu0 0
    %329 = vmatpush1.bf16.msra.mxu0 0
    %330 = vmatprep.subr.bf16.mxu0 0
    %331 = vmatpush1.bf16.msra.mxu0 0
    %332 = vmatprep.subr.bf16.mxu0 0
    %333 = vmatpush1.bf16.msra.mxu0 0
    %334 = vmatprep.mubr.bf16.mxu0 0
    %335 = vmatmul.mubr.bf16.gmra.mrb[0].mxu0 %v85
    %v336 = vpop.f32.mrb[0].mxu0
    %v337 = vadd.f32 %v68, %v336
    %v338 = vpop.f32.mrb[0].mxu0
    %v339 = vadd.f32 %v72, %v338
    %v340 = vpop.f32.mrb[0].mxu0
    %v341 = vadd.f32 %v68, %v340
    %v342 = vpop.f32.mrb[0].mxu0
    %v343 = vadd.f32 %v72, %v342
    %344 = vmatprep.mubr.bf16.mxu0 0
    %345 = vmatmul.mubr.bf16.gmra.mrb[0].mxu0 %v86
    %v346 = vpop.f32.mrb[0].mxu0
    %v347 = vadd.f32 %v68, %v346
    %v348 = vpop.f32.mrb[0].mxu0
    %v349 = vadd.f32 %v72, %v348
    %v350 = vpop.f32.mrb[0].mxu0
    %v351 = vadd.f32 %v68, %v350
    %v352 = vpop.f32.mrb[0].mxu0
    %v353 = vadd.f32 %v72, %v352
    %354 = vdwg.mxu0
    %v371 = vcombine.low %v284, %v286
    %v372 = vcombine.high %v284, %v286
    %v373 = vcombine.low %v337, %v339
    %v374 = vcombine.high %v337, %v339
    %v376 = vunpack.c.l.s4 1966171168
    %v377 = vunpack.c.0.s8 %v376
    %v378 = vlaneseq
    %v379 = vshrl.u32 %v378, 7
    %v380 = vsub.s32 %v377, %v379
    %v381 = vrot.slane %v371, %v380
    %v383 = vunpack.c.l.s4 1966171168
    %v384 = vunpack.c.0.s8 %v383
    %v385 = vlaneseq
    %v386 = vshrl.u32 %v385, 7
    %v387 = vsub.s32 %v384, %v386
    %v388 = vrot.slane %v372, %v387
    %v390 = vunpack.c.l.s4 1966171168
    %v391 = vunpack.c.0.s8 %v390
    %v392 = vlaneseq
    %v393 = vshrl.u32 %v392, 7
    %v394 = vsub.s32 %v391, %v393
    %v395 = vrot.slane %v373, %v394
    %v397 = vunpack.c.l.s4 1966171168
    %v398 = vunpack.c.0.s8 %v397
    %v399 = vlaneseq
    %v400 = vshrl.u32 %v399, 7
    %v401 = vsub.s32 %v398, %v400
    %v402 = vrot.slane %v374, %v401
    %v403 = vcombine.low %v381, %v395
    %v404 = vcombine.high %v381, %v395
    %v405 = vcombine.low %v388, %v402
    %v406 = vcombine.high %v388, %v402
    %v408 = vunpack.c.l.s4 1966171168
    %v409 = vunpack.c.0.s8 %v408
    %v410 = vlaneseq
    %v411 = vshrl.u32 %v410, 7
    %v412 = vsub.s32 %v409, %v411
    %v413 = vrot.slane %v403, %v412
    %v415 = vunpack.c.l.s4 1966171168
    %v416 = vunpack.c.0.s8 %v415
    %v417 = vlaneseq
    %v418 = vshrl.u32 %v417, 7
    %v419 = vsub.s32 %v416, %v418
    %v420 = vrot.slane %v405, %v419
    %v422 = vunpack.c.l.s4 1966171168
    %v423 = vunpack.c.0.s8 %v422
    %v424 = vlaneseq
    %v425 = vshrl.u32 %v424, 7
    %v426 = vsub.s32 %v423, %v425
    %v427 = vrot.slane %v404, %v426
    %v429 = vunpack.c.l.s4 1966171168
    %v430 = vunpack.c.0.s8 %v429
    %v431 = vlaneseq
    %v432 = vshrl.u32 %v431, 7
    %v433 = vsub.s32 %v430, %v432
    %v434 = vrot.slane %v406, %v433
    %v435 = vcombine.high %v413, %v413
    %v436 = vcombine.high %v420, %v420
    %v437 = vcombine.high %v427, %v427
    %v438 = vcombine.high %v434, %v434
    %v439 = vcombine.low %v288, %v290
    %v440 = vcombine.high %v288, %v290
    %v441 = vcombine.low %v341, %v343
    %v442 = vcombine.high %v341, %v343
    %v444 = vunpack.c.l.s4 1966171168
    %v445 = vunpack.c.0.s8 %v444
    %v446 = vlaneseq
    %v447 = vshrl.u32 %v446, 7
    %v448 = vsub.s32 %v445, %v447
    %v449 = vrot.slane %v439, %v448
    %v451 = vunpack.c.l.s4 1966171168
    %v452 = vunpack.c.0.s8 %v451
    %v453 = vlaneseq
    %v454 = vshrl.u32 %v453, 7
    %v455 = vsub.s32 %v452, %v454
    %v456 = vrot.slane %v440, %v455
    %v458 = vunpack.c.l.s4 1966171168
    %v459 = vunpack.c.0.s8 %v458
    %v460 = vlaneseq
    %v461 = vshrl.u32 %v460, 7
    %v462 = vsub.s32 %v459, %v461
    %v463 = vrot.slane %v441, %v462
    %v465 = vunpack.c.l.s4 1966171168
    %v466 = vunpack.c.0.s8 %v465
    %v467 = vlaneseq
    %v468 = vshrl.u32 %v467, 7
    %v469 = vsub.s32 %v466, %v468
    %v470 = vrot.slane %v442, %v469
    %v471 = vcombine.low %v449, %v463
    %v472 = vcombine.high %v449, %v463
    %v473 = vcombine.low %v456, %v470
    %v474 = vcombine.high %v456, %v470
    %v476 = vunpack.c.l.s4 1966171168
    %v477 = vunpack.c.0.s8 %v476
    %v478 = vlaneseq
    %v479 = vshrl.u32 %v478, 7
    %v480 = vsub.s32 %v477, %v479
    %v481 = vrot.slane %v471, %v480
    %v483 = vunpack.c.l.s4 1966171168
    %v484 = vunpack.c.0.s8 %v483
    %v485 = vlaneseq
    %v486 = vshrl.u32 %v485, 7
    %v487 = vsub.s32 %v484, %v486
    %v488 = vrot.slane %v473, %v487
    %v490 = vunpack.c.l.s4 1966171168
    %v491 = vunpack.c.0.s8 %v490
    %v492 = vlaneseq
    %v493 = vshrl.u32 %v492, 7
    %v494 = vsub.s32 %v491, %v493
    %v495 = vrot.slane %v472, %v494
    %v497 = vunpack.c.l.s4 1966171168
    %v498 = vunpack.c.0.s8 %v497
    %v499 = vlaneseq
    %v500 = vshrl.u32 %v499, 7
    %v501 = vsub.s32 %v498, %v500
    %v502 = vrot.slane %v474, %v501
    %v503 = vcombine.high %v481, %v481
    %v504 = vcombine.high %v488, %v488
    %v505 = vcombine.high %v495, %v495
    %v506 = vcombine.high %v502, %v502
    %v507 = vcombine.low %v294, %v296
    %v508 = vcombine.high %v294, %v296
    %v509 = vcombine.low %v347, %v349
    %v510 = vcombine.high %v347, %v349
    %v512 = vunpack.c.l.s4 1966171168
    %v513 = vunpack.c.0.s8 %v512
    %v514 = vlaneseq
    %v515 = vshrl.u32 %v514, 7
    %v516 = vsub.s32 %v513, %v515
    %v517 = vrot.slane %v507, %v516
    %v519 = vunpack.c.l.s4 1966171168
    %v520 = vunpack.c.0.s8 %v519
    %v521 = vlaneseq
    %v522 = vshrl.u32 %v521, 7
    %v523 = vsub.s32 %v520, %v522
    %v524 = vrot.slane %v508, %v523
    %v526 = vunpack.c.l.s4 1966171168
    %v527 = vunpack.c.0.s8 %v526
    %v528 = vlaneseq
    %v529 = vshrl.u32 %v528, 7
    %v530 = vsub.s32 %v527, %v529
    %v531 = vrot.slane %v509, %v530
    %v533 = vunpack.c.l.s4 1966171168
    %v534 = vunpack.c.0.s8 %v533
    %v535 = vlaneseq
    %v536 = vshrl.u32 %v535, 7
    %v537 = vsub.s32 %v534, %v536
    %v538 = vrot.slane %v510, %v537
    %v539 = vcombine.low %v517, %v531
    %v540 = vcombine.high %v517, %v531
    %v541 = vcombine.low %v524, %v538
    %v542 = vcombine.high %v524, %v538
    %v544 = vunpack.c.l.s4 1966171168
    %v545 = vunpack.c.0.s8 %v544
    %v546 = vlaneseq
    %v547 = vshrl.u32 %v546, 7
    %v548 = vsub.s32 %v545, %v547
    %v549 = vrot.slane %v539, %v548
    %v551 = vunpack.c.l.s4 1966171168
    %v552 = vunpack.c.0.s8 %v551
    %v553 = vlaneseq
    %v554 = vshrl.u32 %v553, 7
    %v555 = vsub.s32 %v552, %v554
    %v556 = vrot.slane %v541, %v555
    %v558 = vunpack.c.l.s4 1966171168
    %v559 = vunpack.c.0.s8 %v558
    %v560 = vlaneseq
    %v561 = vshrl.u32 %v560, 7
    %v562 = vsub.s32 %v559, %v561
    %v563 = vrot.slane %v540, %v562
    %v565 = vunpack.c.l.s4 1966171168
    %v566 = vunpack.c.0.s8 %v565
    %v567 = vlaneseq
    %v568 = vshrl.u32 %v567, 7
    %v569 = vsub.s32 %v566, %v568
    %v570 = vrot.slane %v542, %v569
    %v571 = vcombine.high %v549, %v549
    %v572 = vcombine.high %v556, %v556
    %v573 = vcombine.high %v563, %v563
    %v574 = vcombine.high %v570, %v570
    %v575 = vcombine.low %v298, %v300
    %v576 = vcombine.low %v351, %v353
    %v578 = vunpack.c.l.s4 1966171168
    %v579 = vunpack.c.0.s8 %v578
    %v580 = vlaneseq
    %v581 = vshrl.u32 %v580, 7
    %v582 = vsub.s32 %v579, %v581
    %v583 = vrot.slane %v575, %v582
    %v585 = vunpack.c.l.s4 1966171168
    %v586 = vunpack.c.0.s8 %v585
    %v587 = vlaneseq
    %v588 = vshrl.u32 %v587, 7
    %v589 = vsub.s32 %v586, %v588
    %v590 = vrot.slane %v576, %v589
    %v591 = vcombine.low %v583, %v590
    %v592 = vcombine.high %v583, %v590
    %v594 = vunpack.c.l.s4 1966171168
    %v595 = vunpack.c.0.s8 %v594
    %v596 = vlaneseq
    %v597 = vshrl.u32 %v596, 7
    %v598 = vsub.s32 %v595, %v597
    %v599 = vrot.slane %v591, %v598
    %v601 = vunpack.c.l.s4 1966171168
    %v602 = vunpack.c.0.s8 %v601
    %v603 = vlaneseq
    %v604 = vshrl.u32 %v603, 7
    %v605 = vsub.s32 %v602, %v604
    %v606 = vrot.slane %v592, %v605
    %v607 = vcombine.high %v599, %v599
    %v608 = vcombine.high %v606, %v606
    %v637 = vlaneseq
    %vm638 = vcmp.ge.s32.totalorder %v637, 0
    %vm639 = vcmp.lt.s32.totalorder %v637, 512
    %vm640 = vmand %vm638, %vm639
    %641 = vst.msk [vmem:[#allocation2] ss:$2 sm:$0xf] %vm640, %v413
    %s642 = scalar_lea.vmem [#allocation2], 8
    %643 = vst.msk [vmem:[%s642] ss:$2 sm:$0xf] %vm640, %v427
    %s644 = scalar_lea.vmem [#allocation2], 16
    %645 = vst.msk [vmem:[%s644] ss:$2 sm:$0xf] %vm640, %v435
    %s646 = scalar_lea.vmem [#allocation2], 24
    %647 = vst.msk [vmem:[%s646] ss:$2 sm:$0xf] %vm640, %v437
    %s648 = scalar_lea.vmem [#allocation2], 32
    %649 = vst.msk [vmem:[%s648] ss:$2 sm:$0xf] %vm640, %v420
    %s650 = scalar_lea.vmem [#allocation2], 40
    %651 = vst.msk [vmem:[%s650] ss:$2 sm:$0xf] %vm640, %v434
    %s652 = scalar_lea.vmem [#allocation2], 48
    %653 = vst.msk [vmem:[%s652] ss:$2 sm:$0xf] %vm640, %v436
    %s654 = scalar_lea.vmem [#allocation2], 56
    %655 = vst.msk [vmem:[%s654] ss:$2 sm:$0xf] %vm640, %v438
    %s656 = scalar_lea.vmem [#allocation2], 64
    %657 = vst.msk [vmem:[%s656] ss:$2 sm:$0xf] %vm640, %v481
    %s658 = scalar_lea.vmem [#allocation2], 72
    %659 = vst.msk [vmem:[%s658] ss:$2 sm:$0xf] %vm640, %v495
    %s660 = scalar_lea.vmem [#allocation2], 80
    %661 = vst.msk [vmem:[%s660] ss:$2 sm:$0xf] %vm640, %v503
    %s662 = scalar_lea.vmem [#allocation2], 88
    %663 = vst.msk [vmem:[%s662] ss:$2 sm:$0xf] %vm640, %v505
    %s664 = scalar_lea.vmem [#allocation2], 96
    %665 = vst.msk [vmem:[%s664] ss:$2 sm:$0xf] %vm640, %v488
    %s666 = scalar_lea.vmem [#allocation2], 104
    %667 = vst.msk [vmem:[%s666] ss:$2 sm:$0xf] %vm640, %v502
    %s668 = scalar_lea.vmem [#allocation2], 112
    %669 = vst.msk [vmem:[%s668] ss:$2 sm:$0xf] %vm640, %v504
    %s670 = scalar_lea.vmem [#allocation2], 120
    %671 = vst.msk [vmem:[%s670] ss:$2 sm:$0xf] %vm640, %v506
    %s672 = scalar_lea.vmem [#allocation2], 128
    %673 = vst.msk [vmem:[%s672] ss:$2 sm:$0xf] %vm640, %v549
    %s674 = scalar_lea.vmem [#allocation2], 136
    %675 = vst.msk [vmem:[%s674] ss:$2 sm:$0xf] %vm640, %v563
    %s676 = scalar_lea.vmem [#allocation2], 144
    %677 = vst.msk [vmem:[%s676] ss:$2 sm:$0xf] %vm640, %v571
    %s678 = scalar_lea.vmem [#allocation2], 152
    %679 = vst.msk [vmem:[%s678] ss:$2 sm:$0xf] %vm640, %v573
    %s680 = scalar_lea.vmem [#allocation2], 160
    %681 = vst.msk [vmem:[%s680] ss:$2 sm:$0xf] %vm640, %v556
    %s682 = scalar_lea.vmem [#allocation2], 168
    %683 = vst.msk [vmem:[%s682] ss:$2 sm:$0xf] %vm640, %v570
    %s684 = scalar_lea.vmem [#allocation2], 176
    %685 = vst.msk [vmem:[%s684] ss:$2 sm:$0xf] %vm640, %v572
    %s686 = scalar_lea.vmem [#allocation2], 184
    %687 = vst.msk [vmem:[%s686] ss:$2 sm:$0xf] %vm640, %v574
    %s688 = scalar_lea.vmem [#allocation2], 192
    %689 = vst.msk [vmem:[%s688] ss:$2 sm:$0xf] %vm640, %v599
    %s690 = scalar_lea.vmem [#allocation2], 200
    %691 = vst.msk [vmem:[%s690] ss:$2 sm:$0xf] %vm640, %v606
    %s692 = scalar_lea.vmem [#allocation2], 208
    %693 = vst.msk [vmem:[%s692] ss:$2 sm:$0xf] %vm640, %v607
    %s694 = scalar_lea.vmem [#allocation2], 216
    %695 = vst.msk [vmem:[%s694] ss:$2 sm:$0xf] %vm640, %v608
    %s696 = scalar_lea.vmem %s0, 16
    %v697 = vld [vmem:[%s696] sm:$0xf]
    %v698 = vld [vmem:[%s696 + $0x4] sm:$0xf]
    %v699 = vld [vmem:[%s696 + $0x8] sm:$0xf]
    %v700 = vld [vmem:[%s696 + $0xc] sm:$0x3]
    %v701 = vld [vmem:[%s1] sm:$0xff]
    %v702 = vld [vmem:[%s1 + $0x8] sm:$0xff]
    %v703 = vld [vmem:[%s1 + $0x10] sm:$0xff]
    %v704 = vld [vmem:[%s1 + $0x18] sm:$0xff]
    %v705 = vld [vmem:[%s1 + $0x20] sm:$0xff]
    %v706 = vld [vmem:[%s1 + $0x28] sm:$0xff]
    %v707 = vld [vmem:[%s1 + $0x30] sm:$0xff]
    %v708 = vld [vmem:[%s1 + $0x38] sm:$0xff]
    %v709 = vld [vmem:[%s1 + $0x40] sm:$0xff]
    %v710 = vld [vmem:[%s1 + $0x48] sm:$0xff]
    %v711 = vld [vmem:[%s1 + $0x50] sm:$0xff]
    %v712 = vld [vmem:[%s1 + $0x58] sm:$0xff]
    %v713 = vld [vmem:[%s1 + $0x60] sm:$0xff]
    %v714 = vld [vmem:[%s1 + $0x68] sm:$0xff]
    %v715 = vld [vmem:[%s1 + $0x70] sm:$0xff]
    %v716 = vld [vmem:[%s1 + $0x78] sm:$0xff]
    %v717 = vld [vmem:[%s1 + $0x80] sm:$0xff]
    %v718 = vld [vmem:[%s1 + $0x88] sm:$0xff]
    %v719 = vld [vmem:[%s1 + $0x90] sm:$0xff]
    %v720 = vld [vmem:[%s1 + $0x98] sm:$0xff]
    %v721 = vld [vmem:[%s1 + $0xa0] sm:$0xff]
    %v722 = vld [vmem:[%s1 + $0xa8] sm:$0xff]
    %v723 = vld [vmem:[%s1 + $0xb0] sm:$0xff]
    %v724 = vld [vmem:[%s1 + $0xb8] sm:$0xff]
    %v725 = vld [vmem:[%s1 + $0xc0] sm:$0xff]
    %v726 = vld [vmem:[%s1 + $0xc8] sm:$0xff]
    %v727 = vld [vmem:[%s1 + $0xd0] sm:$0xff]
    %v728 = vld [vmem:[%s1 + $0xd8] sm:$0xff]
    %v729 = vld [vmem:[%s1 + $0xe0] sm:$0xff]
    %v730 = vld [vmem:[%s1 + $0xe8] sm:$0xff]
    %v731 = vld [vmem:[%s1 + $0xf0] sm:$0xff]
    %v732 = vld [vmem:[%s1 + $0xf8] sm:$0xff]
    %v733 = vld [vmem:[%s3] sm:$0xf]
    %v735 = vlaneseq
    %v736 = vshrl.u32 %v735, 7
    %v737 = vsub.s32 0, %v736
    %v738 = vrot.slane %v733, %v737
    %v739 = vlaneseq
    %v740 = vshrl.u32 %v739, 7
    %v741 = vsub.s32 1, %v740
    %v742 = vrot.slane %v733, %v741
    %v743 = vlaneseq
    %v744 = vshrl.u32 %v743, 7
    %v745 = vsub.s32 2, %v744
    %v746 = vrot.slane %v733, %v745
    %v747 = vlaneseq
    %v748 = vshrl.u32 %v747, 7
    %v749 = vsub.s32 3, %v748
    %v750 = vrot.slane %v733, %v749
    %v759 = vunpack.c.l.b16 %v697
    %v760 = vunpack.c.l.b16 %v698
    %v761 = vunpack.c.l.b16 %v699
    %v762 = vunpack.c.l.b16 %v700
    %v763 = vpack.c.b16 %v760, %v759
    %v764 = vpack.c.b16 %v762, %v761
    %v799 = vunpack.c.l.b16 %v701
    %v800 = vunpack.c.h.b16 %v701
    %v801 = vunpack.c.l.b16 %v702
    %v802 = vunpack.c.h.b16 %v702
    %v803 = vunpack.c.l.b16 %v703
    %v804 = vunpack.c.h.b16 %v703
    %v805 = vunpack.c.l.b16 %v704
    %v806 = vunpack.c.h.b16 %v704
    %v807 = vunpack.c.l.b16 %v705
    %v808 = vunpack.c.h.b16 %v705
    %v809 = vunpack.c.l.b16 %v706
    %v810 = vunpack.c.h.b16 %v706
    %v811 = vunpack.c.l.b16 %v707
    %v812 = vunpack.c.h.b16 %v707
    %v813 = vunpack.c.l.b16 %v708
    %v814 = vunpack.c.h.b16 %v708
    %v815 = vunpack.c.l.b16 %v709
    %v816 = vunpack.c.h.b16 %v709
    %v817 = vunpack.c.l.b16 %v710
    %v818 = vunpack.c.h.b16 %v710
    %v819 = vunpack.c.l.b16 %v711
    %v820 = vunpack.c.h.b16 %v711
    %v821 = vunpack.c.l.b16 %v712
    %v822 = vunpack.c.h.b16 %v712
    %v823 = vunpack.c.l.b16 %v713
    %v824 = vunpack.c.h.b16 %v713
    %v825 = vunpack.c.l.b16 %v714
    %v826 = vunpack.c.h.b16 %v714
    %v827 = vunpack.c.l.b16 %v715
    %v828 = vunpack.c.h.b16 %v715
    %v829 = vunpack.c.l.b16 %v716
    %v830 = vunpack.c.h.b16 %v716
    %v831 = vunpack.c.l.b16 %v717
    %v832 = vunpack.c.h.b16 %v717
    %v833 = vunpack.c.l.b16 %v718
    %v834 = vunpack.c.h.b16 %v718
    %v835 = vunpack.c.l.b16 %v719
    %v836 = vunpack.c.h.b16 %v719
    %v837 = vunpack.c.l.b16 %v720
    %v838 = vunpack.c.h.b16 %v720
    %v839 = vunpack.c.l.b16 %v721
    %v840 = vunpack.c.h.b16 %v721
    %v841 = vunpack.c.l.b16 %v722
    %v842 = vunpack.c.h.b16 %v722
    %v843 = vunpack.c.l.b16 %v723
    %v844 = vunpack.c.h.b16 %v723
    %v845 = vunpack.c.l.b16 %v724
    %v846 = vunpack.c.h.b16 %v724
    %v847 = vunpack.c.l.b16 %v725
    %v848 = vunpack.c.h.b16 %v725
    %v849 = vunpack.c.l.b16 %v726
    %v850 = vunpack.c.h.b16 %v726
    %v851 = vunpack.c.l.b16 %v727
    %v852 = vunpack.c.h.b16 %v727
    %v853 = vunpack.c.l.b16 %v728
    %v854 = vunpack.c.h.b16 %v728
    %v855 = vunpack.c.l.b16 %v729
    %v856 = vunpack.c.h.b16 %v729
    %v857 = vunpack.c.l.b16 %v730
    %v858 = vunpack.c.h.b16 %v730
    %v859 = vunpack.c.l.b16 %v731
    %v860 = vunpack.c.h.b16 %v731
    %v861 = vunpack.c.l.b16 %v732
    %v862 = vunpack.c.h.b16 %v732
    %v863 = vpack.c.b16 %v803, %v799
    %v864 = vpack.c.b16 %v804, %v800
    %v865 = vpack.c.b16 %v805, %v801
    %v866 = vpack.c.b16 %v806, %v802
    %v867 = vpack.c.b16 %v811, %v807
    %v868 = vpack.c.b16 %v812, %v808
    %v869 = vpack.c.b16 %v813, %v809
    %v870 = vpack.c.b16 %v814, %v810
    %v871 = vpack.c.b16 %v819, %v815
    %v872 = vpack.c.b16 %v820, %v816
    %v873 = vpack.c.b16 %v821, %v817
    %v874 = vpack.c.b16 %v822, %v818
    %v875 = vpack.c.b16 %v827, %v823
    %v876 = vpack.c.b16 %v828, %v824
    %v877 = vpack.c.b16 %v829, %v825
    %v878 = vpack.c.b16 %v830, %v826
    %v879 = vpack.c.b16 %v835, %v831
    %v880 = vpack.c.b16 %v836, %v832
    %v881 = vpack.c.b16 %v837, %v833
    %v882 = vpack.c.b16 %v838, %v834
    %v883 = vpack.c.b16 %v843, %v839
    %v884 = vpack.c.b16 %v844, %v840
    %v885 = vpack.c.b16 %v845, %v841
    %v886 = vpack.c.b16 %v846, %v842
    %v887 = vpack.c.b16 %v851, %v847
    %v888 = vpack.c.b16 %v852, %v848
    %v889 = vpack.c.b16 %v853, %v849
    %v890 = vpack.c.b16 %v854, %v850
    %v891 = vpack.c.b16 %v859, %v855
    %v892 = vpack.c.b16 %v860, %v856
    %v893 = vpack.c.b16 %v861, %v857
    %v894 = vpack.c.b16 %v862, %v858
    %927 = vmatprep.subr.bf16.mxu0 %v864
    %928 = vmatpush1.bf16.msra.mxu0 %v863
    %929 = vmatprep.subr.bf16.mxu0 %v868
    %930 = vmatpush1.bf16.msra.mxu0 %v867
    %931 = vmatprep.subr.bf16.mxu0 %v872
    %932 = vmatpush1.bf16.msra.mxu0 %v871
    %933 = vmatprep.subr.bf16.mxu0 %v876
    %934 = vmatpush1.bf16.msra.mxu0 %v875
    %935 = vmatprep.subr.bf16.mxu0 %v880
    %936 = vmatpush1.bf16.msra.mxu0 %v879
    %937 = vmatprep.subr.bf16.mxu0 %v884
    %938 = vmatpush1.bf16.msra.mxu0 %v883
    %939 = vmatprep.subr.bf16.mxu0 %v888
    %940 = vmatpush1.bf16.msra.mxu0 %v887
    %941 = vmatprep.subr.bf16.mxu0 %v892
    %942 = vmatpush1.bf16.msra.mxu0 %v891
    %943 = vmatprep.subr.bf16.mxu0 0
    %944 = vmatpush1.bf16.msra.mxu0 0
    %945 = vmatprep.subr.bf16.mxu0 0
    %946 = vmatpush1.bf16.msra.mxu0 0
    %947 = vmatprep.subr.bf16.mxu0 0
    %948 = vmatpush1.bf16.msra.mxu0 0
    %949 = vmatprep.subr.bf16.mxu0 0
    %950 = vmatpush1.bf16.msra.mxu0 0
    %951 = vmatprep.subr.bf16.mxu0 0
    %952 = vmatpush1.bf16.msra.mxu0 0
    %953 = vmatprep.subr.bf16.mxu0 0
    %954 = vmatpush1.bf16.msra.mxu0 0
    %955 = vmatprep.subr.bf16.mxu0 0
    %956 = vmatpush1.bf16.msra.mxu0 0
    %957 = vmatprep.subr.bf16.mxu0 0
    %958 = vmatpush1.bf16.msra.mxu0 0
    %959 = vmatprep.mubr.bf16.mxu0 0
    %960 = vmatmul.mubr.bf16.gmra.mrb[0].mxu0 %v763
    %v961 = vpop.f32.mrb[0].mxu0
    %v962 = vadd.f32 %v738, %v961
    %v963 = vpop.f32.mrb[0].mxu0
    %v964 = vadd.f32 %v742, %v963
    %v965 = vpop.f32.mrb[0].mxu0
    %v966 = vadd.f32 %v738, %v965
    %v967 = vpop.f32.mrb[0].mxu0
    %v968 = vadd.f32 %v742, %v967
    %969 = vmatprep.mubr.bf16.mxu0 0
    %970 = vmatmul.mubr.bf16.gmra.mrb[0].mxu0 %v764
    %v971 = vpop.f32.mrb[0].mxu0
    %v972 = vadd.f32 %v738, %v971
    %v973 = vpop.f32.mrb[0].mxu0
    %v974 = vadd.f32 %v742, %v973
    %v975 = vpop.f32.mrb[0].mxu0
    %v976 = vadd.f32 %v738, %v975
    %v977 = vpop.f32.mrb[0].mxu0
    %v978 = vadd.f32 %v742, %v977
    %979 = vdwg.mxu0
    %980 = vmatprep.subr.bf16.mxu0 %v866
    %981 = vmatpush1.bf16.msra.mxu0 %v865
    %982 = vmatprep.subr.bf16.mxu0 %v870
    %983 = vmatpush1.bf16.msra.mxu0 %v869
    %984 = vmatprep.subr.bf16.mxu0 %v874
    %985 = vmatpush1.bf16.msra.mxu0 %v873
    %986 = vmatprep.subr.bf16.mxu0 %v878
    %987 = vmatpush1.bf16.msra.mxu0 %v877
    %988 = vmatprep.subr.bf16.mxu0 %v882
    %989 = vmatpush1.bf16.msra.mxu0 %v881
    %990 = vmatprep.subr.bf16.mxu0 %v886
    %991 = vmatpush1.bf16.msra.mxu0 %v885
    %992 = vmatprep.subr.bf16.mxu0 %v890
    %993 = vmatpush1.bf16.msra.mxu0 %v889
    %994 = vmatprep.subr.bf16.mxu0 %v894
    %995 = vmatpush1.bf16.msra.mxu0 %v893
    %996 = vmatprep.subr.bf16.mxu0 0
    %997 = vmatpush1.bf16.msra.mxu0 0
    %998 = vmatprep.subr.bf16.mxu0 0
    %999 = vmatpush1.bf16.msra.mxu0 0
    %1000 = vmatprep.subr.bf16.mxu0 0
    %1001 = vmatpush1.bf16.msra.mxu0 0
    %1002 = vmatprep.subr.bf16.mxu0 0
    %1003 = vmatpush1.bf16.msra.mxu0 0
    %1004 = vmatprep.subr.bf16.mxu0 0
    %1005 = vmatpush1.bf16.msra.mxu0 0
    %1006 = vmatprep.subr.bf16.mxu0 0
    %1007 = vmatpush1.bf16.msra.mxu0 0
    %1008 = vmatprep.subr.bf16.mxu0 0
    %1009 = vmatpush1.bf16.msra.mxu0 0
    %1010 = vmatprep.subr.bf16.mxu0 0
    %1011 = vmatpush1.bf16.msra.mxu0 0
    %1012 = vmatprep.mubr.bf16.mxu0 0
    %1013 = vmatmul.mubr.bf16.gmra.mrb[0].mxu0 %v763
    %v1014 = vpop.f32.mrb[0].mxu0
    %v1015 = vadd.f32 %v746, %v1014
    %v1016 = vpop.f32.mrb[0].mxu0
    %v1017 = vadd.f32 %v750, %v1016
    %v1018 = vpop.f32.mrb[0].mxu0
    %v1019 = vadd.f32 %v746, %v1018
    %v1020 = vpop.f32.mrb[0].mxu0
    %v1021 = vadd.f32 %v750, %v1020
    %1022 = vmatprep.mubr.bf16.mxu0 0
    %1023 = vmatmul.mubr.bf16.gmra.mrb[0].mxu0 %v764
    %v1024 = vpop.f32.mrb[0].mxu0
    %v1025 = vadd.f32 %v746, %v1024
    %v1026 = vpop.f32.mrb[0].mxu0
    %v1027 = vadd.f32 %v750, %v1026
    %v1028 = vpop.f32.mrb[0].mxu0
    %v1029 = vadd.f32 %v746, %v1028
    %v1030 = vpop.f32.mrb[0].mxu0
    %v1031 = vadd.f32 %v750, %v1030
    %1032 = vdwg.mxu0
    %v1049 = vcombine.low %v962, %v964
    %v1050 = vcombine.high %v962, %v964
    %v1051 = vcombine.low %v1015, %v1017
    %v1052 = vcombine.high %v1015, %v1017
    %v1054 = vunpack.c.l.s4 1966171168
    %v1055 = vunpack.c.0.s8 %v1054
    %v1056 = vlaneseq
    %v1057 = vshrl.u32 %v1056, 7
    %v1058 = vsub.s32 %v1055, %v1057
    %v1059 = vrot.slane %v1049, %v1058
    %v1061 = vunpack.c.l.s4 1966171168
    %v1062 = vunpack.c.0.s8 %v1061
    %v1063 = vlaneseq
    %v1064 = vshrl.u32 %v1063, 7
    %v1065 = vsub.s32 %v1062, %v1064
    %v1066 = vrot.slane %v1050, %v1065
    %v1068 = vunpack.c.l.s4 1966171168
    %v1069 = vunpack.c.0.s8 %v1068
    %v1070 = vlaneseq
    %v1071 = vshrl.u32 %v1070, 7
    %v1072 = vsub.s32 %v1069, %v1071
    %v1073 = vrot.slane %v1051, %v1072
    %v1075 = vunpack.c.l.s4 1966171168
    %v1076 = vunpack.c.0.s8 %v1075
    %v1077 = vlaneseq
    %v1078 = vshrl.u32 %v1077, 7
    %v1079 = vsub.s32 %v1076, %v1078
    %v1080 = vrot.slane %v1052, %v1079
    %v1081 = vcombine.low %v1059, %v1073
    %v1082 = vcombine.high %v1059, %v1073
    %v1083 = vcombine.low %v1066, %v1080
    %v1084 = vcombine.high %v1066, %v1080
    %v1086 = vunpack.c.l.s4 1966171168
    %v1087 = vunpack.c.0.s8 %v1086
    %v1088 = vlaneseq
    %v1089 = vshrl.u32 %v1088, 7
    %v1090 = vsub.s32 %v1087, %v1089
    %v1091 = vrot.slane %v1081, %v1090
    %v1093 = vunpack.c.l.s4 1966171168
    %v1094 = vunpack.c.0.s8 %v1093
    %v1095 = vlaneseq
    %v1096 = vshrl.u32 %v1095, 7
    %v1097 = vsub.s32 %v1094, %v1096
    %v1098 = vrot.slane %v1083, %v1097
    %v1100 = vunpack.c.l.s4 1966171168
    %v1101 = vunpack.c.0.s8 %v1100
    %v1102 = vlaneseq
    %v1103 = vshrl.u32 %v1102, 7
    %v1104 = vsub.s32 %v1101, %v1103
    %v1105 = vrot.slane %v1082, %v1104
    %v1107 = vunpack.c.l.s4 1966171168
    %v1108 = vunpack.c.0.s8 %v1107
    %v1109 = vlaneseq
    %v1110 = vshrl.u32 %v1109, 7
    %v1111 = vsub.s32 %v1108, %v1110
    %v1112 = vrot.slane %v1084, %v1111
    %v1113 = vcombine.high %v1091, %v1091
    %v1114 = vcombine.high %v1098, %v1098
    %v1115 = vcombine.high %v1105, %v1105
    %v1116 = vcombine.high %v1112, %v1112
    %v1117 = vcombine.low %v966, %v968
    %v1118 = vcombine.high %v966, %v968
    %v1119 = vcombine.low %v1019, %v1021
    %v1120 = vcombine.high %v1019, %v1021
    %v1122 = vunpack.c.l.s4 1966171168
    %v1123 = vunpack.c.0.s8 %v1122
    %v1124 = vlaneseq
    %v1125 = vshrl.u32 %v1124, 7
    %v1126 = vsub.s32 %v1123, %v1125
    %v1127 = vrot.slane %v1117, %v1126
    %v1129 = vunpack.c.l.s4 1966171168
    %v1130 = vunpack.c.0.s8 %v1129
    %v1131 = vlaneseq
    %v1132 = vshrl.u32 %v1131, 7
    %v1133 = vsub.s32 %v1130, %v1132
    %v1134 = vrot.slane %v1118, %v1133
    %v1136 = vunpack.c.l.s4 1966171168
    %v1137 = vunpack.c.0.s8 %v1136
    %v1138 = vlaneseq
    %v1139 = vshrl.u32 %v1138, 7
    %v1140 = vsub.s32 %v1137, %v1139
    %v1141 = vrot.slane %v1119, %v1140
    %v1143 = vunpack.c.l.s4 1966171168
    %v1144 = vunpack.c.0.s8 %v1143
    %v1145 = vlaneseq
    %v1146 = vshrl.u32 %v1145, 7
    %v1147 = vsub.s32 %v1144, %v1146
    %v1148 = vrot.slane %v1120, %v1147
    %v1149 = vcombine.low %v1127, %v1141
    %v1150 = vcombine.high %v1127, %v1141
    %v1151 = vcombine.low %v1134, %v1148
    %v1152 = vcombine.high %v1134, %v1148
    %v1154 = vunpack.c.l.s4 1966171168
    %v1155 = vunpack.c.0.s8 %v1154
    %v1156 = vlaneseq
    %v1157 = vshrl.u32 %v1156, 7
    %v1158 = vsub.s32 %v1155, %v1157
    %v1159 = vrot.slane %v1149, %v1158
    %v1161 = vunpack.c.l.s4 1966171168
    %v1162 = vunpack.c.0.s8 %v1161
    %v1163 = vlaneseq
    %v1164 = vshrl.u32 %v1163, 7
    %v1165 = vsub.s32 %v1162, %v1164
    %v1166 = vrot.slane %v1151, %v1165
    %v1168 = vunpack.c.l.s4 1966171168
    %v1169 = vunpack.c.0.s8 %v1168
    %v1170 = vlaneseq
    %v1171 = vshrl.u32 %v1170, 7
    %v1172 = vsub.s32 %v1169, %v1171
    %v1173 = vrot.slane %v1150, %v1172
    %v1175 = vunpack.c.l.s4 1966171168
    %v1176 = vunpack.c.0.s8 %v1175
    %v1177 = vlaneseq
    %v1178 = vshrl.u32 %v1177, 7
    %v1179 = vsub.s32 %v1176, %v1178
    %v1180 = vrot.slane %v1152, %v1179
    %v1181 = vcombine.high %v1159, %v1159
    %v1182 = vcombine.high %v1166, %v1166
    %v1183 = vcombine.high %v1173, %v1173
    %v1184 = vcombine.high %v1180, %v1180
    %v1185 = vcombine.low %v972, %v974
    %v1186 = vcombine.high %v972, %v974
    %v1187 = vcombine.low %v1025, %v1027
    %v1188 = vcombine.high %v1025, %v1027
    %v1190 = vunpack.c.l.s4 1966171168
    %v1191 = vunpack.c.0.s8 %v1190
    %v1192 = vlaneseq
    %v1193 = vshrl.u32 %v1192, 7
    %v1194 = vsub.s32 %v1191, %v1193
    %v1195 = vrot.slane %v1185, %v1194
    %v1197 = vunpack.c.l.s4 1966171168
    %v1198 = vunpack.c.0.s8 %v1197
    %v1199 = vlaneseq
    %v1200 = vshrl.u32 %v1199, 7
    %v1201 = vsub.s32 %v1198, %v1200
    %v1202 = vrot.slane %v1186, %v1201
    %v1204 = vunpack.c.l.s4 1966171168
    %v1205 = vunpack.c.0.s8 %v1204
    %v1206 = vlaneseq
    %v1207 = vshrl.u32 %v1206, 7
    %v1208 = vsub.s32 %v1205, %v1207
    %v1209 = vrot.slane %v1187, %v1208
    %v1211 = vunpack.c.l.s4 1966171168
    %v1212 = vunpack.c.0.s8 %v1211
    %v1213 = vlaneseq
    %v1214 = vshrl.u32 %v1213, 7
    %v1215 = vsub.s32 %v1212, %v1214
    %v1216 = vrot.slane %v1188, %v1215
    %v1217 = vcombine.low %v1195, %v1209
    %v1218 = vcombine.high %v1195, %v1209
    %v1219 = vcombine.low %v1202, %v1216
    %v1220 = vcombine.high %v1202, %v1216
    %v1222 = vunpack.c.l.s4 1966171168
    %v1223 = vunpack.c.0.s8 %v1222
    %v1224 = vlaneseq
    %v1225 = vshrl.u32 %v1224, 7
    %v1226 = vsub.s32 %v1223, %v1225
    %v1227 = vrot.slane %v1217, %v1226
    %v1229 = vunpack.c.l.s4 1966171168
    %v1230 = vunpack.c.0.s8 %v1229
    %v1231 = vlaneseq
    %v1232 = vshrl.u32 %v1231, 7
    %v1233 = vsub.s32 %v1230, %v1232
    %v1234 = vrot.slane %v1219, %v1233
    %v1236 = vunpack.c.l.s4 1966171168
    %v1237 = vunpack.c.0.s8 %v1236
    %v1238 = vlaneseq
    %v1239 = vshrl.u32 %v1238, 7
    %v1240 = vsub.s32 %v1237, %v1239
    %v1241 = vrot.slane %v1218, %v1240
    %v1243 = vunpack.c.l.s4 1966171168
    %v1244 = vunpack.c.0.s8 %v1243
    %v1245 = vlaneseq
    %v1246 = vshrl.u32 %v1245, 7
    %v1247 = vsub.s32 %v1244, %v1246
    %v1248 = vrot.slane %v1220, %v1247
    %v1249 = vcombine.high %v1227, %v1227
    %v1250 = vcombine.high %v1234, %v1234
    %v1251 = vcombine.high %v1241, %v1241
    %v1252 = vcombine.high %v1248, %v1248
    %v1253 = vcombine.low %v976, %v978
    %v1254 = vcombine.low %v1029, %v1031
    %v1256 = vunpack.c.l.s4 1966171168
    %v1257 = vunpack.c.0.s8 %v1256
    %v1258 = vlaneseq
    %v1259 = vshrl.u32 %v1258, 7
    %v1260 = vsub.s32 %v1257, %v1259
    %v1261 = vrot.slane %v1253, %v1260
    %v1263 = vunpack.c.l.s4 1966171168
    %v1264 = vunpack.c.0.s8 %v1263
    %v1265 = vlaneseq
    %v1266 = vshrl.u32 %v1265, 7
    %v1267 = vsub.s32 %v1264, %v1266
    %v1268 = vrot.slane %v1254, %v1267
    %v1269 = vcombine.low %v1261, %v1268
    %v1270 = vcombine.high %v1261, %v1268
    %v1272 = vunpack.c.l.s4 1966171168
    %v1273 = vunpack.c.0.s8 %v1272
    %v1274 = vlaneseq
    %v1275 = vshrl.u32 %v1274, 7
    %v1276 = vsub.s32 %v1273, %v1275
    %v1277 = vrot.slane %v1269, %v1276
    %v1279 = vunpack.c.l.s4 1966171168
    %v1280 = vunpack.c.0.s8 %v1279
    %v1281 = vlaneseq
    %v1282 = vshrl.u32 %v1281, 7
    %v1283 = vsub.s32 %v1280, %v1282
    %v1284 = vrot.slane %v1270, %v1283
    %v1285 = vcombine.high %v1277, %v1277
    %v1286 = vcombine.high %v1284, %v1284
    %s1315 = scalar_lea.vmem [#allocation2], 1
    %1316 = vst.msk [vmem:[%s1315] ss:$2 sm:$0xf] %vm640, %v1091
    %s1317 = scalar_lea.vmem [#allocation2], 9
    %1318 = vst.msk [vmem:[%s1317] ss:$2 sm:$0xf] %vm640, %v1105
    %s1319 = scalar_lea.vmem [#allocation2], 17
    %1320 = vst.msk [vmem:[%s1319] ss:$2 sm:$0xf] %vm640, %v1113
    %s1321 = scalar_lea.vmem [#allocation2], 25
    %1322 = vst.msk [vmem:[%s1321] ss:$2 sm:$0xf] %vm640, %v1115
    %s1323 = scalar_lea.vmem [#allocation2], 33
    %1324 = vst.msk [vmem:[%s1323] ss:$2 sm:$0xf] %vm640, %v1098
    %s1325 = scalar_lea.vmem [#allocation2], 41
    %1326 = vst.msk [vmem:[%s1325] ss:$2 sm:$0xf] %vm640, %v1112
    %s1327 = scalar_lea.vmem [#allocation2], 49
    %1328 = vst.msk [vmem:[%s1327] ss:$2 sm:$0xf] %vm640, %v1114
    %s1329 = scalar_lea.vmem [#allocation2], 57
    %1330 = vst.msk [vmem:[%s1329] ss:$2 sm:$0xf] %vm640, %v1116
    %s1331 = scalar_lea.vmem [#allocation2], 65
    %1332 = vst.msk [vmem:[%s1331] ss:$2 sm:$0xf] %vm640, %v1159
    %s1333 = scalar_lea.vmem [#allocation2], 73
    %1334 = vst.msk [vmem:[%s1333] ss:$2 sm:$0xf] %vm640, %v1173
    %s1335 = scalar_lea.vmem [#allocation2], 81
    %1336 = vst.msk [vmem:[%s1335] ss:$2 sm:$0xf] %vm640, %v1181
    %s1337 = scalar_lea.vmem [#allocation2], 89
    %1338 = vst.msk [vmem:[%s1337] ss:$2 sm:$0xf] %vm640, %v1183
    %s1339 = scalar_lea.vmem [#allocation2], 97
    %1340 = vst.msk [vmem:[%s1339] ss:$2 sm:$0xf] %vm640, %v1166
    %s1341 = scalar_lea.vmem [#allocation2], 105
    %1342 = vst.msk [vmem:[%s1341] ss:$2 sm:$0xf] %vm640, %v1180
    %s1343 = scalar_lea.vmem [#allocation2], 113
    %1344 = vst.msk [vmem:[%s1343] ss:$2 sm:$0xf] %vm640, %v1182
    %s1345 = scalar_lea.vmem [#allocation2], 121
    %1346 = vst.msk [vmem:[%s1345] ss:$2 sm:$0xf] %vm640, %v1184
    %s1347 = scalar_lea.vmem [#allocation2], 129
    %1348 = vst.msk [vmem:[%s1347] ss:$2 sm:$0xf] %vm640, %v1227
    %s1349 = scalar_lea.vmem [#allocation2], 137
    %1350 = vst.msk [vmem:[%s1349] ss:$2 sm:$0xf] %vm640, %v1241
    %s1351 = scalar_lea.vmem [#allocation2], 145
    %1352 = vst.msk [vmem:[%s1351] ss:$2 sm:$0xf] %vm640, %v1249
    %s1353 = scalar_lea.vmem [#allocation2], 153
    %1354 = vst.msk [vmem:[%s1353] ss:$2 sm:$0xf] %vm640, %v1251
    %s1355 = scalar_lea.vmem [#allocation2], 161
    %1356 = vst.msk [vmem:[%s1355] ss:$2 sm:$0xf] %vm640, %v1234
    %s1357 = scalar_lea.vmem [#allocation2], 169
    %1358 = vst.msk [vmem:[%s1357] ss:$2 sm:$0xf] %vm640, %v1248
    %s1359 = scalar_lea.vmem [#allocation2], 177
    %1360 = vst.msk [vmem:[%s1359] ss:$2 sm:$0xf] %vm640, %v1250
    %s1361 = scalar_lea.vmem [#allocation2], 185
    %1362 = vst.msk [vmem:[%s1361] ss:$2 sm:$0xf] %vm640, %v1252
    %s1363 = scalar_lea.vmem [#allocation2], 193
    %1364 = vst.msk [vmem:[%s1363] ss:$2 sm:$0xf] %vm640, %v1277
    %s1365 = scalar_lea.vmem [#allocation2], 201
    %1366 = vst.msk [vmem:[%s1365] ss:$2 sm:$0xf] %vm640, %v1284
    %s1367 = scalar_lea.vmem [#allocation2], 209
    %1368 = vst.msk [vmem:[%s1367] ss:$2 sm:$0xf] %vm640, %v1285
    %s1369 = scalar_lea.vmem [#allocation2], 217
    %1370 = vst.msk [vmem:[%s1369] ss:$2 sm:$0xf] %vm640, %v1286
    %1371 = vst [vmem:[#allocation4] sm:$0x3] 0.0
    %1372 = vst [vmem:[#allocation5] sm:$0x3] 0.0
    loop: start=0, step=1, limit=28
    $region18: #{crnet_forward.5} parent=1 // loop_pre_header
      _
    $region19: #{crnet_forward.5} parent=1 // loop_header
      %s1374 = sphi 0, %s1378
      %p1375 = scmp.ge.s32.totalorder %s1374, 28
    $region20: #{crnet_forward.5} parent=1 // loop_header_branch
      %1377 = sbr.rel (%p1375) target = $region24
    $region21: #{crnet_forward.5} parent=1 // loop_body
      %s1379 = smul.u32 %s1374, 4
      %s1380 = smul.addr %s1379, 2
      %s1381 = scalar_lea.vmem [#allocation2], %s1380
      %v1382 = vld [vmem:[%s1381] sm:$0xff]
      %v1383 = vld [vmem:[#allocation4] sm:$0x3]
      %v1384 = vpack.c.bf16 %v1383, %v1383
      %v1385 = vld [vmem:[%s2] sm:$0xff]
      %v1386 = vld [vmem:[%s2 + $0x8] sm:$0xff]
      %v1387 = vld [vmem:[%s2 + $0x10] sm:$0xff]
      %v1388 = vld [vmem:[%s2 + $0x18] sm:$0xff]
      %v1389 = vld [vmem:[%s2 + $0x20] sm:$0xff]
      %v1390 = vld [vmem:[%s2 + $0x28] sm:$0xff]
      %v1391 = vld [vmem:[%s2 + $0x30] sm:$0xff]
      %v1392 = vld [vmem:[%s2 + $0x38] sm:$0xff]
      %v1393 = vld [vmem:[%s2 + $0x40] sm:$0xff]
      %v1394 = vld [vmem:[%s2 + $0x48] sm:$0xff]
      %v1395 = vld [vmem:[%s2 + $0x50] sm:$0xff]
      %v1396 = vld [vmem:[%s2 + $0x58] sm:$0xff]
      %v1397 = vld [vmem:[%s2 + $0x60] sm:$0xff]
      %v1398 = vld [vmem:[%s2 + $0x68] sm:$0xff]
      %v1399 = vld [vmem:[%s2 + $0x70] sm:$0xff]
      %v1400 = vld [vmem:[%s2 + $0x78] sm:$0xff]
      %v1401 = vld [vmem:[%s2 + $0x80] sm:$0xff]
      %v1402 = vld [vmem:[%s2 + $0x88] sm:$0xff]
      %v1403 = vld [vmem:[%s2 + $0x90] sm:$0xff]
      %v1404 = vld [vmem:[%s2 + $0x98] sm:$0xff]
      %v1405 = vld [vmem:[%s2 + $0xa0] sm:$0xff]
      %v1406 = vld [vmem:[%s2 + $0xa8] sm:$0xff]
      %v1407 = vld [vmem:[%s2 + $0xb0] sm:$0xff]
      %v1408 = vld [vmem:[%s2 + $0xb8] sm:$0xff]
      %v1409 = vld [vmem:[%s2 + $0xc0] sm:$0xff]
      %v1410 = vld [vmem:[%s2 + $0xc8] sm:$0xff]
      %v1411 = vld [vmem:[%s2 + $0xd0] sm:$0xff]
      %v1412 = vld [vmem:[%s2 + $0xd8] sm:$0xff]
      %v1413 = vld [vmem:[%s2 + $0xe0] sm:$0xff]
      %v1414 = vld [vmem:[%s2 + $0xe8] sm:$0xff]
      %v1415 = vld [vmem:[%s2 + $0xf0] sm:$0xff]
      %v1416 = vld [vmem:[%s2 + $0xf8] sm:$0xff]
      %v1449 = vunpack.c.l.b16 %v1385
      %v1450 = vunpack.c.h.b16 %v1385
      %v1451 = vunpack.c.l.b16 %v1386
      %v1452 = vunpack.c.h.b16 %v1386
      %v1453 = vunpack.c.l.b16 %v1387
      %v1454 = vunpack.c.h.b16 %v1387
      %v1455 = vunpack.c.l.b16 %v1388
      %v1456 = vunpack.c.h.b16 %v1388
      %v1457 = vunpack.c.l.b16 %v1389
      %v1458 = vunpack.c.h.b16 %v1389
      %v1459 = vunpack.c.l.b16 %v1390
      %v1460 = vunpack.c.h.b16 %v1390
      %v1461 = vunpack.c.l.b16 %v1391
      %v1462 = vunpack.c.h.b16 %v1391
      %v1463 = vunpack.c.l.b16 %v1392
      %v1464 = vunpack.c.h.b16 %v1392
      %v1465 = vunpack.c.l.b16 %v1393
      %v1466 = vunpack.c.h.b16 %v1393
      %v1467 = vunpack.c.l.b16 %v1394
      %v1468 = vunpack.c.h.b16 %v1394
      %v1469 = vunpack.c.l.b16 %v1395
      %v1470 = vunpack.c.h.b16 %v1395
      %v1471 = vunpack.c.l.b16 %v1396
      %v1472 = vunpack.c.h.b16 %v1396
      %v1473 = vunpack.c.l.b16 %v1397
      %v1474 = vunpack.c.h.b16 %v1397
      %v1475 = vunpack.c.l.b16 %v1398
      %v1476 = vunpack.c.h.b16 %v1398
      %v1477 = vunpack.c.l.b16 %v1399
      %v1478 = vunpack.c.h.b16 %v1399
      %v1479 = vunpack.c.l.b16 %v1400
      %v1480 = vunpack.c.h.b16 %v1400
      %v1481 = vunpack.c.l.b16 %v1401
      %v1482 = vunpack.c.h.b16 %v1401
      %v1483 = vunpack.c.l.b16 %v1402
      %v1484 = vunpack.c.h.b16 %v1402
      %v1485 = vunpack.c.l.b16 %v1403
      %v1486 = vunpack.c.h.b16 %v1403
      %v1487 = vunpack.c.l.b16 %v1404
      %v1488 = vunpack.c.h.b16 %v1404
      %v1489 = vunpack.c.l.b16 %v1405
      %v1490 = vunpack.c.h.b16 %v1405
      %v1491 = vunpack.c.l.b16 %v1406
      %v1492 = vunpack.c.h.b16 %v1406
      %v1493 = vunpack.c.l.b16 %v1407
      %v1494 = vunpack.c.h.b16 %v1407
      %v1495 = vunpack.c.l.b16 %v1408
      %v1496 = vunpack.c.h.b16 %v1408
      %v1497 = vunpack.c.l.b16 %v1409
      %v1498 = vunpack.c.h.b16 %v1409
      %v1499 = vunpack.c.l.b16 %v1410
      %v1500 = vunpack.c.h.b16 %v1410
      %v1501 = vunpack.c.l.b16 %v1411
      %v1502 = vunpack.c.h.b16 %v1411
      %v1503 = vunpack.c.l.b16 %v1412
      %v1504 = vunpack.c.h.b16 %v1412
      %v1505 = vunpack.c.l.b16 %v1413
      %v1506 = vunpack.c.h.b16 %v1413
      %v1507 = vunpack.c.l.b16 %v1414
      %v1508 = vunpack.c.h.b16 %v1414
      %v1509 = vunpack.c.l.b16 %v1415
      %v1510 = vunpack.c.h.b16 %v1415
      %v1511 = vunpack.c.l.b16 %v1416
      %v1512 = vunpack.c.h.b16 %v1416
      %v1513 = vpack.c.b16 %v1453, %v1449
      %v1514 = vpack.c.b16 %v1454, %v1450
      %v1515 = vpack.c.b16 %v1455, %v1451
      %v1516 = vpack.c.b16 %v1456, %v1452
      %v1517 = vpack.c.b16 %v1461, %v1457
      %v1518 = vpack.c.b16 %v1462, %v1458
      %v1519 = vpack.c.b16 %v1463, %v1459
      %v1520 = vpack.c.b16 %v1464, %v1460
      %v1521 = vpack.c.b16 %v1469, %v1465
      %v1522 = vpack.c.b16 %v1470, %v1466
      %v1523 = vpack.c.b16 %v1471, %v1467
      %v1524 = vpack.c.b16 %v1472, %v1468
      %v1525 = vpack.c.b16 %v1477, %v1473
      %v1526 = vpack.c.b16 %v1478, %v1474
      %v1527 = vpack.c.b16 %v1479, %v1475
      %v1528 = vpack.c.b16 %v1480, %v1476
      %v1529 = vpack.c.b16 %v1485, %v1481
      %v1530 = vpack.c.b16 %v1486, %v1482
      %v1531 = vpack.c.b16 %v1487, %v1483
      %v1532 = vpack.c.b16 %v1488, %v1484
      %v1533 = vpack.c.b16 %v1493, %v1489
      %v1534 = vpack.c.b16 %v1494, %v1490
      %v1535 = vpack.c.b16 %v1495, %v1491
      %v1536 = vpack.c.b16 %v1496, %v1492
      %v1537 = vpack.c.b16 %v1501, %v1497
      %v1538 = vpack.c.b16 %v1502, %v1498
      %v1539 = vpack.c.b16 %v1503, %v1499
      %v1540 = vpack.c.b16 %v1504, %v1500
      %v1541 = vpack.c.b16 %v1509, %v1505
      %v1542 = vpack.c.b16 %v1510, %v1506
      %v1543 = vpack.c.b16 %v1511, %v1507
      %v1544 = vpack.c.b16 %v1512, %v1508
      %1577 = vmatprep.subr.bf16.mxu0 %v1514
      %1578 = vmatpush1.bf16.msra.mxu0 %v1513
      %1579 = vmatprep.subr.bf16.mxu0 %v1518
      %1580 = vmatpush1.bf16.msra.mxu0 %v1517
      %1581 = vmatprep.subr.bf16.mxu0 %v1522
      %1582 = vmatpush1.bf16.msra.mxu0 %v1521
      %1583 = vmatprep.subr.bf16.mxu0 %v1526
      %1584 = vmatpush1.bf16.msra.mxu0 %v1525
      %1585 = vmatprep.subr.bf16.mxu0 %v1530
      %1586 = vmatpush1.bf16.msra.mxu0 %v1529
      %1587 = vmatprep.subr.bf16.mxu0 %v1534
      %1588 = vmatpush1.bf16.msra.mxu0 %v1533
      %1589 = vmatprep.subr.bf16.mxu0 %v1538
      %1590 = vmatpush1.bf16.msra.mxu0 %v1537
      %1591 = vmatprep.subr.bf16.mxu0 %v1542
      %1592 = vmatpush1.bf16.msra.mxu0 %v1541
      %1593 = vmatprep.subr.bf16.mxu0 0
      %1594 = vmatpush1.bf16.msra.mxu0 0
      %1595 = vmatprep.subr.bf16.mxu0 0
      %1596 = vmatpush1.bf16.msra.mxu0 0
      %1597 = vmatprep.subr.bf16.mxu0 0
      %1598 = vmatpush1.bf16.msra.mxu0 0
      %1599 = vmatprep.subr.bf16.mxu0 0
      %1600 = vmatpush1.bf16.msra.mxu0 0
      %1601 = vmatprep.subr.bf16.mxu0 0
      %1602 = vmatpush1.bf16.msra.mxu0 0
      %1603 = vmatprep.subr.bf16.mxu0 0
      %1604 = vmatpush1.bf16.msra.mxu0 0
      %1605 = vmatprep.subr.bf16.mxu0 0
      %1606 = vmatpush1.bf16.msra.mxu0 0
      %1607 = vmatprep.subr.bf16.mxu0 0
      %1608 = vmatpush1.bf16.msra.mxu0 0
      %1609 = vmatprep.mubr.bf16.mxu0 0
      %1610 = vmatmul.mubr.bf16.gmra.mrb[0].mxu0 %v1384
      %v1611 = vpop.f32.mrb[0].mxu0
      %v1612 = vadd.f32 0.0, %v1611
      %v1613 = vpop.f32.mrb[0].mxu0
      %v1614 = vadd.f32 0.0, %v1613
      %v1615 = vpop.f32.mrb[0].mxu0
      %v1616 = vpop.f32.mrb[0].mxu0
      %1617 = vdwg.mxu0
      %1618 = vmatprep.subr.bf16.mxu0 %v1516
      %1619 = vmatpush1.bf16.msra.mxu0 %v1515
      %1620 = vmatprep.subr.bf16.mxu0 %v1520
      %1621 = vmatpush1.bf16.msra.mxu0 %v1519
      %1622 = vmatprep.subr.bf16.mxu0 %v1524
      %1623 = vmatpush1.bf16.msra.mxu0 %v1523
      %1624 = vmatprep.subr.bf16.mxu0 %v1528
      %1625 = vmatpush1.bf16.msra.mxu0 %v1527
      %1626 = vmatprep.subr.bf16.mxu0 %v1532
      %1627 = vmatpush1.bf16.msra.mxu0 %v1531
      %1628 = vmatprep.subr.bf16.mxu0 %v1536
      %1629 = vmatpush1.bf16.msra.mxu0 %v1535
      %1630 = vmatprep.subr.bf16.mxu0 %v1540
      %1631 = vmatpush1.bf16.msra.mxu0 %v1539
      %1632 = vmatprep.subr.bf16.mxu0 %v1544
      %1633 = vmatpush1.bf16.msra.mxu0 %v1543
      %1634 = vmatprep.subr.bf16.mxu0 0
      %1635 = vmatpush1.bf16.msra.mxu0 0
      %1636 = vmatprep.subr.bf16.mxu0 0
      %1637 = vmatpush1.bf16.msra.mxu0 0
      %1638 = vmatprep.subr.bf16.mxu0 0
      %1639 = vmatpush1.bf16.msra.mxu0 0
      %1640 = vmatprep.subr.bf16.mxu0 0
      %1641 = vmatpush1.bf16.msra.mxu0 0
      %1642 = vmatprep.subr.bf16.mxu0 0
      %1643 = vmatpush1.bf16.msra.mxu0 0
      %1644 = vmatprep.subr.bf16.mxu0 0
      %1645 = vmatpush1.bf16.msra.mxu0 0
      %1646 = vmatprep.subr.bf16.mxu0 0
      %1647 = vmatpush1.bf16.msra.mxu0 0
      %1648 = vmatprep.subr.bf16.mxu0 0
      %1649 = vmatpush1.bf16.msra.mxu0 0
      %1650 = vmatprep.mubr.bf16.mxu0 0
      %1651 = vmatmul.mubr.bf16.gmra.mrb[0].mxu0 %v1384
      %v1652 = vpop.f32.mrb[0].mxu0
      %v1653 = vadd.f32 0.0, %v1652
      %v1654 = vpop.f32.mrb[0].mxu0
      %v1655 = vadd.f32 0.0, %v1654
      %v1656 = vpop.f32.mrb[0].mxu0
      %v1657 = vpop.f32.mrb[0].mxu0
      %1658 = vdwg.mxu0
      %v1663 = vcombine.low %v1612, %v1614
      %v1664 = vcombine.low %v1653, %v1655
      %v1666 = vunpack.c.l.s4 1983009808
      %v1667 = vunpack.c.0.s8 %v1666
      %v1668 = vlaneseq
      %v1669 = vshrl.u32 %v1668, 7
      %v1670 = vsub.s32 %v1667, %v1669
      %v1671 = vrot.slane %v1663, %v1670
      %v1673 = vunpack.c.l.s4 1983009808
      %v1674 = vunpack.c.0.s8 %v1673
      %v1675 = vlaneseq
      %v1676 = vshrl.u32 %v1675, 7
      %v1677 = vsub.s32 %v1674, %v1676
      %v1678 = vrot.slane %v1664, %v1677
      %v1679 = vcombine.low %v1671, %v1678
      %v1681 = vadd.f32 %v1382, %v1679
      %v1682 = vxor.u32 %v1681, 2147483648
      %v1683 = vmul.f32 %v1682, 1.442695
      %v1684 = vpow.pop %v1683
      %v1685 = vadd.f32 %v1684, 1.0
      %v1686 = vrcp.pop %v1685
      %v1687 = vmul.f32 1.0, %v1686
      %v1689 = vrot.slane %v1681, 2
      %v1691 = vxor.u32 %v1689, 2147483648
      %v1692 = vmul.f32 %v1691, 1.442695
      %v1693 = vpow.pop %v1692
      %v1694 = vadd.f32 %v1693, 1.0
      %v1695 = vrcp.pop %v1694
      %v1696 = vmul.f32 1.0, %v1695
      %v1697 = vrot.slane %v1681, 4
      %v1699 = vtanh.pop %v1697
      %v1700 = vrot.slane %v1681, 6
      %v1702 = vxor.u32 %v1700, 2147483648
      %v1703 = vmul.f32 %v1702, 1.442695
      %v1704 = vpow.pop %v1703
      %v1705 = vadd.f32 %v1704, 1.0
      %v1706 = vrcp.pop %v1705
      %v1707 = vmul.f32 1.0, %v1706
      %v1708 = vld [vmem:[#allocation5] sm:$0x3]
      %v1709 = vmul.f32 %v1696, %v1708
      %v1710 = vmul.f32 %v1687, %v1699
      %v1711 = vadd.f32 %v1709, %v1710
      %v1712 = vtanh.pop %v1711
      %v1713 = vmul.f32 %v1707, %v1712
      %1714 = vst [vmem:[#allocation5] sm:$0x3] %v1711
      %1715 = vst [vmem:[#allocation4] sm:$0x3] %v1713
    $region22: #{crnet_forward.5} parent=1 // loop_footer
      %s1378 = sadd.s32 1, %s1374
    $region23: #{crnet_forward.5} parent=1 // loop_footer_branch
      %1373 = sbr.rel target = $region19
    $region24: #{crnet_forward.5} parent=1 // loop_exit
      _
    %v1716 = vld [vmem:[#allocation4] sm:$0x3]
    %1717 = vst [vmem:[#allocation6] sm:$0x3] %v1716
    // Predicated region
    $region25: #{crnet_forward.5} parent=1 // pred_check
      _
    $region26: #{crnet_forward.5} parent=1 // pred_check_branch
      %1719 = sbr.rel (0) target = $region28
    $region27: #{crnet_forward.5} parent=1 // pred_region
      %s1721 = ssub.s32 32, 32
      %1722 = vsyncadd [#allocation7], %s1721
      %s1724 = sshll.u32 [#allocation6], 4
      %s1725 = int_to_ptr.vmem [resolvable:$true] %s1724
      %1727 = dma.vmem_to_hbm [thread:$0]  %s1725, 32, %s4, [#allocation7]
    $region28: #{crnet_forward.5} parent=1 // pred_fallthru
      _
    // Predicated region
    $region29: #{crnet_forward.5} parent=1 // pred_check
      _
    $region30: #{crnet_forward.5} parent=1 // pred_check_branch
      %1729 = sbr.rel (0) target = $region32
    $region31: #{crnet_forward.5} parent=1 // pred_region
      %1730 = dma.done [#allocation7], 32
    $region32: #{crnet_forward.5} parent=1 // pred_fallthru
      _
    %1731 = vsyncpa [#allocation7], 1

</llo_original>
